<compile_context>
chip_gen: v7x
topology: tpu7x:2x2x1
jax: 0.10.0
libtpu: 0.0.40
codegen_flags: <defaults>
</compile_context>

<pallas_src>
import functools
import math

import jax
import jax.numpy as jnp
from jax.experimental import pallas as pl
from jax.experimental.pallas import tpu as pltpu


_INV_SQRT2 = 1.0 / math.sqrt(2.0)


def _layer_norm(t, gamma, beta, eps=1e-5):
    mu = jnp.mean(t, axis=-1, keepdims=True)
    var = jnp.mean((t - mu) ** 2, axis=-1, keepdims=True)
    return (t - mu) * jax.lax.rsqrt(var + eps) * gamma + beta


def swin_block_kernel(
    x_ref,
    g1_ref, b1_ref,
    wqkv_ref, bqkv_ref,
    wproj_ref, bproj_ref,
    g2_ref, b2_ref,
    w1_ref, bm1_ref,
    w2_ref, bm2_ref,
    o_ref,
    *,
    num_heads: int,
    dim: int,
    windows_per_block: int,
    tokens_per_window: int,
):
    C = dim
    H = num_heads
    d = C // H
    Bt = windows_per_block
    N = tokens_per_window
    scale = d ** (-0.5)

    x = x_ref[...].astype(jnp.float32)                  # (Bt*N, C) token rows

    # ---- norm1 (f32) + QKV projection (bf16 MXU, f32 accumulate) ----
    xn = _layer_norm(x, g1_ref[...], b1_ref[...])
    qkv = jnp.dot(xn.astype(jnp.bfloat16), wqkv_ref[...],
                  preferred_element_type=jnp.float32) + bqkv_ref[...]   # (Bt*N, 3C)

    # ---- window attention, batched over the Bt windows of this tile ----
    qkv3 = qkv.reshape(Bt, N, 3 * C)
    q = qkv3[:, :, 0 * C:1 * C].astype(jnp.bfloat16)
    k = qkv3[:, :, 1 * C:2 * C].astype(jnp.bfloat16)
    v = qkv3[:, :, 2 * C:3 * C].astype(jnp.bfloat16)

    head_outs = []
    for h in range(H):
        lo, hi = h * d, (h + 1) * d
        qh, kh, vh = q[:, :, lo:hi], k[:, :, lo:hi], v[:, :, lo:hi]     # (Bt, N, d)
        # logits: contract last dims of q and k directly (no explicit transpose)
        s = jnp.einsum("bnd,bmd->bnm", qh, kh,
                       preferred_element_type=jnp.float32) * scale      # (Bt, N, N)
        s = s - jnp.max(s, axis=-1, keepdims=True)
        p = jnp.exp(s)
        p = p * pl.reciprocal(jnp.sum(p, axis=-1, keepdims=True), approx=True)
        head_outs.append(
            jnp.einsum("bnm,bmd->bnd", p.astype(jnp.bfloat16), vh,
                       preferred_element_type=jnp.float32))

    attn = jnp.concatenate(head_outs, axis=-1)          # (Bt, N, C), head-major == torch
    attn = attn.reshape(Bt * N, C)
    attn = jnp.dot(attn.astype(jnp.bfloat16), wproj_ref[...],
                   preferred_element_type=jnp.float32) + bproj_ref[...]

    x = x + attn                                        # residual 1 (f32)

    # ---- norm2 + MLP (exact-erf GELU, matching nn.GELU default) ----
    xn2 = _layer_norm(x, g2_ref[...], b2_ref[...])
    h1 = jnp.dot(xn2.astype(jnp.bfloat16), w1_ref[...],
                 preferred_element_type=jnp.float32) + bm1_ref[...]
    h1 = 0.5 * h1 * (1.0 + jax.lax.erf(h1 * _INV_SQRT2))
    mlp = jnp.dot(h1.astype(jnp.bfloat16), w2_ref[...],
                  preferred_element_type=jnp.float32) + bm2_ref[...]

    o_ref[...] = (x + mlp).astype(o_ref.dtype)          # residual 2


def _choose_windows_per_block(num_windows, tokens_per_window, target_rows=256):
    """Pick how many windows to batch per grid step.

    Constraints: bt divides B; the row-tile (bt*N) is sublane-aligned (multiple
    of 8) unless it covers the whole array; prefer >=2 grid steps (v7x has two
    TensorCores) and a row tile of up to ~256 (fills the MXU M dimension).
    """
    B, N = num_windows, tokens_per_window
    cands = []
    for bt in range(1, B + 1):
        if B % bt:
            continue
        rows = bt * N
        if rows % 8 != 0 and bt != B:
            continue
        cands.append(bt)
    within = [bt for bt in cands if bt * N <= target_rows]
    pool = within if within else cands[:1]
    multi = [bt for bt in pool if (B // bt) >= 2]
    return max(multi) if multi else max(pool)


def swin_block(x, params, num_heads):
    B, N, C = x.shape
    bt = _choose_windows_per_block(B, N)
    tile_m = bt * N
    grid = (B * N) // tile_m

    x2 = x.reshape(B * N, C)

    bf16, f32 = jnp.bfloat16, jnp.float32
    w = {
        "g1": params["g1"].astype(f32), "b1": params["b1"].astype(f32),
        "wqkv": params["wqkv"].astype(bf16), "bqkv": params["bqkv"].astype(f32),
        "wproj": params["wproj"].astype(bf16), "bproj": params["bproj"].astype(f32),
        "g2": params["g2"].astype(f32), "b2": params["b2"].astype(f32),
        "w1": params["w1"].astype(bf16), "bm1": params["bm1"].astype(f32),
        "w2": params["w2"].astype(bf16), "bm2": params["bm2"].astype(f32),
    }

    kernel = functools.partial(
        swin_block_kernel, num_heads=num_heads, dim=C,
        windows_per_block=bt, tokens_per_window=N)

    def build(single_buffer_weights):
        def wspec(shape):
            idx = lambda i, _s=shape: tuple(0 for _ in _s)
            if single_buffer_weights:
                # weights never change block index: single-buffer them to save VMEM
                return pl.BlockSpec(shape, idx, pipeline_mode=pl.Buffered(1))
            return pl.BlockSpec(shape, idx)

        in_specs = [
            pl.BlockSpec((tile_m, C), lambda i: (i, 0)),        # x rows
            wspec((1, C)), wspec((1, C)),                       # norm1 gamma/beta
            wspec((C, 3 * C)), wspec((1, 3 * C)),               # qkv W, b
            wspec((C, C)), wspec((1, C)),                       # proj W, b
            wspec((1, C)), wspec((1, C)),                       # norm2 gamma/beta
            wspec((C, 4 * C)), wspec((1, 4 * C)),               # mlp fc1 W, b
            wspec((4 * C, C)), wspec((1, C)),                   # mlp fc2 W, b
        ]
        return pl.pallas_call(
            kernel,
            out_shape=jax.ShapeDtypeStruct((B * N, C), x.dtype),
            grid_spec=pltpu.PrefetchScalarGridSpec(
                num_scalar_prefetch=0,
                grid=(grid,),
                in_specs=in_specs,
                out_specs=pl.BlockSpec((tile_m, C), lambda i: (i, 0)),
            ),
            compiler_params=pltpu.CompilerParams(
                dimension_semantics=("parallel",),
                vmem_limit_bytes=64 * 1024 * 1024,
            ),
        )

    args = (
        x2,
        w["g1"], w["b1"],
        w["wqkv"], w["bqkv"],
        w["wproj"], w["bproj"],
        w["g2"], w["b2"],
        w["w1"], w["bm1"],
        w["w2"], w["bm2"],
    )

    try:
        out2 = jax.block_until_ready(build(True)(*args))
    except Exception:
        # pl.Buffered(1) single-buffering unavailable on this jax/libtpu; fall back
        out2 = build(False)(*args)

    return out2.reshape(B, N, C)


def swin_block_reference(x, params, num_heads):
    """Pure-JAX f32 reference mirroring the PyTorch forward."""
    B, N, C = x.shape
    d = C // num_heads

    def ln(t, g, b):
        mu = jnp.mean(t, -1, keepdims=True)
        var = jnp.mean((t - mu) ** 2, -1, keepdims=True)
        return (t - mu) / jnp.sqrt(var + 1e-5) * g + b

    xn = ln(x, params["g1"], params["b1"])
    qkv = xn @ params["wqkv"] + params["bqkv"]
    qkv = qkv.reshape(B, N, 3, num_heads, d).transpose(2, 0, 3, 1, 4)
    q, k, v = qkv[0], qkv[1], qkv[2]
    attn = jnp.einsum("bhnd,bhmd->bhnm", q, k) * (d ** -0.5)
    attn = jax.nn.softmax(attn, axis=-1)
    out = jnp.einsum("bhnm,bhmd->bhnd", attn, v)
    out = out.transpose(0, 2, 1, 3).reshape(B, N, C)
    x = x + out @ params["wproj"] + params["bproj"]

    xn2 = ln(x, params["g2"], params["b2"])
    h1 = xn2 @ params["w1"] + params["bm1"]
    h1 = 0.5 * h1 * (1.0 + jax.lax.erf(h1 * _INV_SQRT2))
    return x + h1 @ params["w2"] + params["bm2"]


def make_params(key, dim):
    ks = jax.random.split(key, 8)
    s = 0.02
    return {
        "g1": jnp.ones((1, dim), jnp.float32),
        "b1": jnp.zeros((1, dim), jnp.float32),
        # weights stored as (in, out): equivalent to torch Linear weight.T
        "wqkv": s * jax.random.normal(ks[0], (dim, 3 * dim), jnp.float32),
        "bqkv": s * jax.random.normal(ks[1], (1, 3 * dim), jnp.float32),
        "wproj": s * jax.random.normal(ks[2], (dim, dim), jnp.float32),
        "bproj": s * jax.random.normal(ks[3], (1, dim), jnp.float32),
        "g2": jnp.ones((1, dim), jnp.float32),
        "b2": jnp.zeros((1, dim), jnp.float32),
        "w1": s * jax.random.normal(ks[4], (dim, 4 * dim), jnp.float32),
        "bm1": s * jax.random.normal(ks[5], (1, 4 * dim), jnp.float32),
        "w2": s * jax.random.normal(ks[6], (4 * dim, dim), jnp.float32),
        "bm2": s * jax.random.normal(ks[7], (1, dim), jnp.float32),
    }


if __name__ == "__main__":
    # B windows, N tokens per window, C channels, H heads
    B, N, C, H = 4, 8, 32, 4
    key = jax.random.PRNGKey(0)
    kx, kp = jax.random.split(key)
    x = jax.random.normal(kx, (B, N, C), jnp.float32)
    params = make_params(kp, C)

    out = swin_block(x, params, num_heads=H)
    out = jax.block_until_ready(out)

    ref = swin_block_reference(x, params, num_heads=H)
    assert out.shape == (B, N, C)
    # bf16 matmul operands + approx reciprocal => loosened tolerance vs f32 reference
    assert jnp.allclose(out, ref, rtol=2e-2, atol=2e-2), "mismatch vs reference"

    print("KERNEL_OK")
</pallas_src>

<mosaic_0001>
module attributes {stable_mosaic.version = 11 : i64} {
  func.func @swin_block_kernel(%arg0: i32, %arg1: memref<16x32xf32, #tpu.memory_space<vmem>>, %arg2: memref<1x32xf32, #tpu.memory_space<vmem>>, %arg3: memref<1x32xf32, #tpu.memory_space<vmem>>, %arg4: memref<32x96xbf16, #tpu.memory_space<vmem>>, %arg5: memref<1x96xf32, #tpu.memory_space<vmem>>, %arg6: memref<32x32xbf16, #tpu.memory_space<vmem>>, %arg7: memref<1x32xf32, #tpu.memory_space<vmem>>, %arg8: memref<1x32xf32, #tpu.memory_space<vmem>>, %arg9: memref<1x32xf32, #tpu.memory_space<vmem>>, %arg10: memref<32x128xbf16, #tpu.memory_space<vmem>>, %arg11: memref<1x128xf32, #tpu.memory_space<vmem>>, %arg12: memref<128x32xbf16, #tpu.memory_space<vmem>>, %arg13: memref<1x32xf32, #tpu.memory_space<vmem>>, %arg14: memref<16x32xf32, #tpu.memory_space<vmem>>) attributes {dimension_semantics = [#tpu.dimension_semantics<parallel>], iteration_bounds = array<i64: 2>, scalar_prefetch = 0 : i64, scratch_operands = 0 : i64, tpu.core_type = #tpu.core_type<tc>, window_params = [{transform_indices = @transform_0, window_bounds = array<i64: 16, 32>}, {pipeline_mode = #tpu.pipeline_mode<synchronous>, transform_indices = @transform_1, window_bounds = array<i64: 1, 32>}, {pipeline_mode = #tpu.pipeline_mode<synchronous>, transform_indices = @transform_2, window_bounds = array<i64: 1, 32>}, {pipeline_mode = #tpu.pipeline_mode<synchronous>, transform_indices = @transform_3, window_bounds = array<i64: 32, 96>}, {pipeline_mode = #tpu.pipeline_mode<synchronous>, transform_indices = @transform_4, window_bounds = array<i64: 1, 96>}, {pipeline_mode = #tpu.pipeline_mode<synchronous>, transform_indices = @transform_5, window_bounds = array<i64: 32, 32>}, {pipeline_mode = #tpu.pipeline_mode<synchronous>, transform_indices = @transform_6, window_bounds = array<i64: 1, 32>}, {pipeline_mode = #tpu.pipeline_mode<synchronous>, transform_indices = @transform_7, window_bounds = array<i64: 1, 32>}, {pipeline_mode = #tpu.pipeline_mode<synchronous>, transform_indices = @transform_8, window_bounds = array<i64: 1, 32>}, {pipeline_mode = #tpu.pipeline_mode<synchronous>, transform_indices = @transform_9, window_bounds = array<i64: 32, 128>}, {pipeline_mode = #tpu.pipeline_mode<synchronous>, transform_indices = @transform_10, window_bounds = array<i64: 1, 128>}, {pipeline_mode = #tpu.pipeline_mode<synchronous>, transform_indices = @transform_11, window_bounds = array<i64: 128, 32>}, {pipeline_mode = #tpu.pipeline_mode<synchronous>, transform_indices = @transform_12, window_bounds = array<i64: 1, 32>}, {transform_indices = @transform_13, window_bounds = array<i64: 16, 32>}]} {
    %c0 = arith.constant 0 : index
    %c0_0 = arith.constant 0 : index
    %0 = vector.load %arg1[%c0, %c0_0] : memref<16x32xf32, #tpu.memory_space<vmem>>, vector<16x32xf32>
    %c0_1 = arith.constant 0 : index
    %c0_2 = arith.constant 0 : index
    %1 = vector.load %arg2[%c0_1, %c0_2] : memref<1x32xf32, #tpu.memory_space<vmem>>, vector<1x32xf32>
    %c0_3 = arith.constant 0 : index
    %c0_4 = arith.constant 0 : index
    %2 = vector.load %arg3[%c0_3, %c0_4] : memref<1x32xf32, #tpu.memory_space<vmem>>, vector<1x32xf32>
    %cst = arith.constant dense<0.000000e+00> : vector<16xf32>
    %3 = vector.multi_reduction <add>, %0, %cst [1] : vector<16x32xf32> to vector<16xf32>
    %4 = vector.shape_cast %3 : vector<16xf32> to vector<16x1xf32>
    %cst_5 = arith.constant 3.200000e+01 : f32
    %5 = vector.broadcast %cst_5 : f32 to vector<16x1xf32>
    %6 = arith.divf %4, %5 : vector<16x1xf32>
    %7 = vector.broadcast %6 : vector<16x1xf32> to vector<16x32xf32>
    %8 = arith.subf %0, %7 : vector<16x32xf32>
    %9 = arith.mulf %8, %8 : vector<16x32xf32>
    %cst_6 = arith.constant dense<0.000000e+00> : vector<16xf32>
    %10 = vector.multi_reduction <add>, %9, %cst_6 [1] : vector<16x32xf32> to vector<16xf32>
    %11 = vector.shape_cast %10 : vector<16xf32> to vector<16x1xf32>
    %cst_7 = arith.constant 3.200000e+01 : f32
    %12 = vector.broadcast %cst_7 : f32 to vector<16x1xf32>
    %13 = arith.divf %11, %12 : vector<16x1xf32>
    %14 = vector.broadcast %6 : vector<16x1xf32> to vector<16x32xf32>
    %15 = arith.subf %0, %14 : vector<16x32xf32>
    %cst_8 = arith.constant 9.99999974E-6 : f32
    %16 = vector.broadcast %cst_8 : f32 to vector<16x1xf32>
    %17 = arith.addf %13, %16 : vector<16x1xf32>
    %18 = math.rsqrt %17 : vector<16x1xf32>
    %19 = vector.broadcast %18 : vector<16x1xf32> to vector<16x32xf32>
    %20 = arith.mulf %15, %19 : vector<16x32xf32>
    %21 = vector.broadcast %1 : vector<1x32xf32> to vector<16x32xf32>
    %22 = arith.mulf %20, %21 : vector<16x32xf32>
    %23 = vector.broadcast %2 : vector<1x32xf32> to vector<16x32xf32>
    %24 = arith.addf %22, %23 : vector<16x32xf32>
    %25 = arith.truncf %24 : vector<16x32xf32> to vector<16x32xbf16>
    %c0_9 = arith.constant 0 : index
    %c0_10 = arith.constant 0 : index
    %26 = vector.load %arg4[%c0_9, %c0_10] : memref<32x96xbf16, #tpu.memory_space<vmem>>, vector<32x96xbf16>
    %cst_11 = arith.constant dense<0.000000e+00> : vector<16x96xf32>
    %27 = tpu.matmul %25, %26, %cst_11 {dimension_numbers = #tpu.dot_dimension_numbers<[1], [0], [0], [1], [0, 0, 1, 1], [], []>} : vector<16x32xbf16>, vector<32x96xbf16>, vector<16x96xf32> -> vector<16x96xf32>
    %c0_12 = arith.constant 0 : index
    %c0_13 = arith.constant 0 : index
    %28 = vector.load %arg5[%c0_12, %c0_13] : memref<1x96xf32, #tpu.memory_space<vmem>>, vector<1x96xf32>
    %29 = vector.broadcast %28 : vector<1x96xf32> to vector<16x96xf32>
    %30 = arith.addf %27, %29 : vector<16x96xf32>
    %31 = vector.shape_cast %30 : vector<16x96xf32> to vector<2x8x96xf32>
    %32 = vector.extract_strided_slice %31 {offsets = [0, 0, 0], sizes = [2, 8, 32], strides = [1, 1, 1]} : vector<2x8x96xf32> to vector<2x8x32xf32>
    %33 = arith.truncf %32 : vector<2x8x32xf32> to vector<2x8x32xbf16>
    %34 = vector.extract_strided_slice %31 {offsets = [0, 0, 32], sizes = [2, 8, 32], strides = [1, 1, 1]} : vector<2x8x96xf32> to vector<2x8x32xf32>
    %35 = arith.truncf %34 : vector<2x8x32xf32> to vector<2x8x32xbf16>
    %36 = vector.extract_strided_slice %31 {offsets = [0, 0, 64], sizes = [2, 8, 32], strides = [1, 1, 1]} : vector<2x8x96xf32> to vector<2x8x32xf32>
    %37 = arith.truncf %36 : vector<2x8x32xf32> to vector<2x8x32xbf16>
    %38 = vector.extract_strided_slice %33 {offsets = [0, 0, 0], sizes = [2, 8, 8], strides = [1, 1, 1]} : vector<2x8x32xbf16> to vector<2x8x8xbf16>
    %39 = vector.extract_strided_slice %35 {offsets = [0, 0, 0], sizes = [2, 8, 8], strides = [1, 1, 1]} : vector<2x8x32xbf16> to vector<2x8x8xbf16>
    %40 = vector.extract_strided_slice %37 {offsets = [0, 0, 0], sizes = [2, 8, 8], strides = [1, 1, 1]} : vector<2x8x32xbf16> to vector<2x8x8xbf16>
    "tpu.trace_start"() <{level = 10 : i32, message = "bnd,bmd->bnm"}> : () -> ()
    %cst_14 = arith.constant dense<0.000000e+00> : vector<2x8x8xf32>
    %41 = tpu.matmul %38, %39, %cst_14 {dimension_numbers = #tpu.dot_dimension_numbers<[2], [2], [1], [1], [0, 0, 0, 1, 1, 1], [0], [0]>} : vector<2x8x8xbf16>, vector<2x8x8xbf16>, vector<2x8x8xf32> -> vector<2x8x8xf32>
    "tpu.trace_stop"() : () -> ()
    %cst_15 = arith.constant 0.353553385 : f32
    %42 = vector.broadcast %cst_15 : f32 to vector<2x8x8xf32>
    %43 = arith.mulf %41, %42 : vector<2x8x8xf32>
    %cst_16 = arith.constant dense<0xFF800000> : vector<2x8xf32>
    %44 = vector.multi_reduction <maximumf>, %43, %cst_16 [2] : vector<2x8x8xf32> to vector<2x8xf32>
    %45 = vector.shape_cast %44 : vector<2x8xf32> to vector<2x8x1xf32>
    %46 = vector.broadcast %45 : vector<2x8x1xf32> to vector<2x8x8xf32>
    %47 = arith.subf %43, %46 : vector<2x8x8xf32>
    %48 = math.exp %47 : vector<2x8x8xf32>
    %cst_17 = arith.constant dense<0.000000e+00> : vector<2x8xf32>
    %49 = vector.multi_reduction <add>, %48, %cst_17 [2] : vector<2x8x8xf32> to vector<2x8xf32>
    %50 = vector.shape_cast %49 : vector<2x8xf32> to vector<2x8x1xf32>
    %51 = tpu.reciprocal %50 {approx = true} : vector<2x8x1xf32> -> vector<2x8x1xf32>
    %52 = vector.broadcast %51 : vector<2x8x1xf32> to vector<2x8x8xf32>
    %53 = arith.mulf %48, %52 : vector<2x8x8xf32>
    %54 = arith.truncf %53 : vector<2x8x8xf32> to vector<2x8x8xbf16>
    "tpu.trace_start"() <{level = 10 : i32, message = "bnm,bmd->bnd"}> : () -> ()
    %cst_18 = arith.constant dense<0.000000e+00> : vector<2x8x8xf32>
    %55 = tpu.matmul %54, %40, %cst_18 {dimension_numbers = #tpu.dot_dimension_numbers<[2], [1], [1], [2], [0, 0, 0, 1, 1, 2], [0], [0]>} : vector<2x8x8xbf16>, vector<2x8x8xbf16>, vector<2x8x8xf32> -> vector<2x8x8xf32>
    "tpu.trace_stop"() : () -> ()
    %56 = vector.extract_strided_slice %33 {offsets = [0, 0, 8], sizes = [2, 8, 8], strides = [1, 1, 1]} : vector<2x8x32xbf16> to vector<2x8x8xbf16>
    %57 = vector.extract_strided_slice %35 {offsets = [0, 0, 8], sizes = [2, 8, 8], strides = [1, 1, 1]} : vector<2x8x32xbf16> to vector<2x8x8xbf16>
    %58 = vector.extract_strided_slice %37 {offsets = [0, 0, 8], sizes = [2, 8, 8], strides = [1, 1, 1]} : vector<2x8x32xbf16> to vector<2x8x8xbf16>
    "tpu.trace_start"() <{level = 10 : i32, message = "bnd,bmd->bnm"}> : () -> ()
    %cst_19 = arith.constant dense<0.000000e+00> : vector<2x8x8xf32>
    %59 = tpu.matmul %56, %57, %cst_19 {dimension_numbers = #tpu.dot_dimension_numbers<[2], [2], [1], [1], [0, 0, 0, 1, 1, 1], [0], [0]>} : vector<2x8x8xbf16>, vector<2x8x8xbf16>, vector<2x8x8xf32> -> vector<2x8x8xf32>
    "tpu.trace_stop"() : () -> ()
    %cst_20 = arith.constant 0.353553385 : f32
    %60 = vector.broadcast %cst_20 : f32 to vector<2x8x8xf32>
    %61 = arith.mulf %59, %60 : vector<2x8x8xf32>
    %cst_21 = arith.constant dense<0xFF800000> : vector<2x8xf32>
    %62 = vector.multi_reduction <maximumf>, %61, %cst_21 [2] : vector<2x8x8xf32> to vector<2x8xf32>
    %63 = vector.shape_cast %62 : vector<2x8xf32> to vector<2x8x1xf32>
    %64 = vector.broadcast %63 : vector<2x8x1xf32> to vector<2x8x8xf32>
    %65 = arith.subf %61, %64 : vector<2x8x8xf32>
    %66 = math.exp %65 : vector<2x8x8xf32>
    %cst_22 = arith.constant dense<0.000000e+00> : vector<2x8xf32>
    %67 = vector.multi_reduction <add>, %66, %cst_22 [2] : vector<2x8x8xf32> to vector<2x8xf32>
    %68 = vector.shape_cast %67 : vector<2x8xf32> to vector<2x8x1xf32>
    %69 = tpu.reciprocal %68 {approx = true} : vector<2x8x1xf32> -> vector<2x8x1xf32>
    %70 = vector.broadcast %69 : vector<2x8x1xf32> to vector<2x8x8xf32>
    %71 = arith.mulf %66, %70 : vector<2x8x8xf32>
    %72 = arith.truncf %71 : vector<2x8x8xf32> to vector<2x8x8xbf16>
    "tpu.trace_start"() <{level = 10 : i32, message = "bnm,bmd->bnd"}> : () -> ()
    %cst_23 = arith.constant dense<0.000000e+00> : vector<2x8x8xf32>
    %73 = tpu.matmul %72, %58, %cst_23 {dimension_numbers = #tpu.dot_dimension_numbers<[2], [1], [1], [2], [0, 0, 0, 1, 1, 2], [0], [0]>} : vector<2x8x8xbf16>, vector<2x8x8xbf16>, vector<2x8x8xf32> -> vector<2x8x8xf32>
    "tpu.trace_stop"() : () -> ()
    %74 = vector.extract_strided_slice %33 {offsets = [0, 0, 16], sizes = [2, 8, 8], strides = [1, 1, 1]} : vector<2x8x32xbf16> to vector<2x8x8xbf16>
    %75 = vector.extract_strided_slice %35 {offsets = [0, 0, 16], sizes = [2, 8, 8], strides = [1, 1, 1]} : vector<2x8x32xbf16> to vector<2x8x8xbf16>
    %76 = vector.extract_strided_slice %37 {offsets = [0, 0, 16], sizes = [2, 8, 8], strides = [1, 1, 1]} : vector<2x8x32xbf16> to vector<2x8x8xbf16>
    "tpu.trace_start"() <{level = 10 : i32, message = "bnd,bmd->bnm"}> : () -> ()
    %cst_24 = arith.constant dense<0.000000e+00> : vector<2x8x8xf32>
    %77 = tpu.matmul %74, %75, %cst_24 {dimension_numbers = #tpu.dot_dimension_numbers<[2], [2], [1], [1], [0, 0, 0, 1, 1, 1], [0], [0]>} : vector<2x8x8xbf16>, vector<2x8x8xbf16>, vector<2x8x8xf32> -> vector<2x8x8xf32>
    "tpu.trace_stop"() : () -> ()
    %cst_25 = arith.constant 0.353553385 : f32
    %78 = vector.broadcast %cst_25 : f32 to vector<2x8x8xf32>
    %79 = arith.mulf %77, %78 : vector<2x8x8xf32>
    %cst_26 = arith.constant dense<0xFF800000> : vector<2x8xf32>
    %80 = vector.multi_reduction <maximumf>, %79, %cst_26 [2] : vector<2x8x8xf32> to vector<2x8xf32>
    %81 = vector.shape_cast %80 : vector<2x8xf32> to vector<2x8x1xf32>
    %82 = vector.broadcast %81 : vector<2x8x1xf32> to vector<2x8x8xf32>
    %83 = arith.subf %79, %82 : vector<2x8x8xf32>
    %84 = math.exp %83 : vector<2x8x8xf32>
    %cst_27 = arith.constant dense<0.000000e+00> : vector<2x8xf32>
    %85 = vector.multi_reduction <add>, %84, %cst_27 [2] : vector<2x8x8xf32> to vector<2x8xf32>
    %86 = vector.shape_cast %85 : vector<2x8xf32> to vector<2x8x1xf32>
    %87 = tpu.reciprocal %86 {approx = true} : vector<2x8x1xf32> -> vector<2x8x1xf32>
    %88 = vector.broadcast %87 : vector<2x8x1xf32> to vector<2x8x8xf32>
    %89 = arith.mulf %84, %88 : vector<2x8x8xf32>
    %90 = arith.truncf %89 : vector<2x8x8xf32> to vector<2x8x8xbf16>
    "tpu.trace_start"() <{level = 10 : i32, message = "bnm,bmd->bnd"}> : () -> ()
    %cst_28 = arith.constant dense<0.000000e+00> : vector<2x8x8xf32>
    %91 = tpu.matmul %90, %76, %cst_28 {dimension_numbers = #tpu.dot_dimension_numbers<[2], [1], [1], [2], [0, 0, 0, 1, 1, 2], [0], [0]>} : vector<2x8x8xbf16>, vector<2x8x8xbf16>, vector<2x8x8xf32> -> vector<2x8x8xf32>
    "tpu.trace_stop"() : () -> ()
    %92 = vector.extract_strided_slice %33 {offsets = [0, 0, 24], sizes = [2, 8, 8], strides = [1, 1, 1]} : vector<2x8x32xbf16> to vector<2x8x8xbf16>
    %93 = vector.extract_strided_slice %35 {offsets = [0, 0, 24], sizes = [2, 8, 8], strides = [1, 1, 1]} : vector<2x8x32xbf16> to vector<2x8x8xbf16>
    %94 = vector.extract_strided_slice %37 {offsets = [0, 0, 24], sizes = [2, 8, 8], strides = [1, 1, 1]} : vector<2x8x32xbf16> to vector<2x8x8xbf16>
    "tpu.trace_start"() <{level = 10 : i32, message = "bnd,bmd->bnm"}> : () -> ()
    %cst_29 = arith.constant dense<0.000000e+00> : vector<2x8x8xf32>
    %95 = tpu.matmul %92, %93, %cst_29 {dimension_numbers = #tpu.dot_dimension_numbers<[2], [2], [1], [1], [0, 0, 0, 1, 1, 1], [0], [0]>} : vector<2x8x8xbf16>, vector<2x8x8xbf16>, vector<2x8x8xf32> -> vector<2x8x8xf32>
    "tpu.trace_stop"() : () -> ()
    %cst_30 = arith.constant 0.353553385 : f32
    %96 = vector.broadcast %cst_30 : f32 to vector<2x8x8xf32>
    %97 = arith.mulf %95, %96 : vector<2x8x8xf32>
    %cst_31 = arith.constant dense<0xFF800000> : vector<2x8xf32>
    %98 = vector.multi_reduction <maximumf>, %97, %cst_31 [2] : vector<2x8x8xf32> to vector<2x8xf32>
    %99 = vector.shape_cast %98 : vector<2x8xf32> to vector<2x8x1xf32>
    %100 = vector.broadcast %99 : vector<2x8x1xf32> to vector<2x8x8xf32>
    %101 = arith.subf %97, %100 : vector<2x8x8xf32>
    %102 = math.exp %101 : vector<2x8x8xf32>
    %cst_32 = arith.constant dense<0.000000e+00> : vector<2x8xf32>
    %103 = vector.multi_reduction <add>, %102, %cst_32 [2] : vector<2x8x8xf32> to vector<2x8xf32>
    %104 = vector.shape_cast %103 : vector<2x8xf32> to vector<2x8x1xf32>
    %105 = tpu.reciprocal %104 {approx = true} : vector<2x8x1xf32> -> vector<2x8x1xf32>
    %106 = vector.broadcast %105 : vector<2x8x1xf32> to vector<2x8x8xf32>
    %107 = arith.mulf %102, %106 : vector<2x8x8xf32>
    %108 = arith.truncf %107 : vector<2x8x8xf32> to vector<2x8x8xbf16>
    "tpu.trace_start"() <{level = 10 : i32, message = "bnm,bmd->bnd"}> : () -> ()
    %cst_33 = arith.constant dense<0.000000e+00> : vector<2x8x8xf32>
    %109 = tpu.matmul %108, %94, %cst_33 {dimension_numbers = #tpu.dot_dimension_numbers<[2], [1], [1], [2], [0, 0, 0, 1, 1, 2], [0], [0]>} : vector<2x8x8xbf16>, vector<2x8x8xbf16>, vector<2x8x8xf32> -> vector<2x8x8xf32>
    "tpu.trace_stop"() : () -> ()
    %110 = tpu.concatenate %55, %73, %91, %109 in 2 : vector<2x8x8xf32>, vector<2x8x8xf32>, vector<2x8x8xf32>, vector<2x8x8xf32> -> vector<2x8x32xf32>
    %111 = vector.shape_cast %110 : vector<2x8x32xf32> to vector<16x32xf32>
    %112 = arith.truncf %111 : vector<16x32xf32> to vector<16x32xbf16>
    %c0_34 = arith.constant 0 : index
    %c0_35 = arith.constant 0 : index
    %113 = vector.load %arg6[%c0_34, %c0_35] : memref<32x32xbf16, #tpu.memory_space<vmem>>, vector<32x32xbf16>
    %cst_36 = arith.constant dense<0.000000e+00> : vector<16x32xf32>
    %114 = tpu.matmul %112, %113, %cst_36 {dimension_numbers = #tpu.dot_dimension_numbers<[1], [0], [0], [1], [0, 0, 1, 1], [], []>} : vector<16x32xbf16>, vector<32x32xbf16>, vector<16x32xf32> -> vector<16x32xf32>
    %c0_37 = arith.constant 0 : index
    %c0_38 = arith.constant 0 : index
    %115 = vector.load %arg7[%c0_37, %c0_38] : memref<1x32xf32, #tpu.memory_space<vmem>>, vector<1x32xf32>
    %116 = vector.broadcast %115 : vector<1x32xf32> to vector<16x32xf32>
    %117 = arith.addf %114, %116 : vector<16x32xf32>
    %118 = arith.addf %0, %117 : vector<16x32xf32>
    %c0_39 = arith.constant 0 : index
    %c0_40 = arith.constant 0 : index
    %119 = vector.load %arg8[%c0_39, %c0_40] : memref<1x32xf32, #tpu.memory_space<vmem>>, vector<1x32xf32>
    %c0_41 = arith.constant 0 : index
    %c0_42 = arith.constant 0 : index
    %120 = vector.load %arg9[%c0_41, %c0_42] : memref<1x32xf32, #tpu.memory_space<vmem>>, vector<1x32xf32>
    %cst_43 = arith.constant dense<0.000000e+00> : vector<16xf32>
    %121 = vector.multi_reduction <add>, %118, %cst_43 [1] : vector<16x32xf32> to vector<16xf32>
    %122 = vector.shape_cast %121 : vector<16xf32> to vector<16x1xf32>
    %cst_44 = arith.constant 3.200000e+01 : f32
    %123 = vector.broadcast %cst_44 : f32 to vector<16x1xf32>
    %124 = arith.divf %122, %123 : vector<16x1xf32>
    %125 = vector.broadcast %124 : vector<16x1xf32> to vector<16x32xf32>
    %126 = arith.subf %118, %125 : vector<16x32xf32>
    %127 = arith.mulf %126, %126 : vector<16x32xf32>
    %cst_45 = arith.constant dense<0.000000e+00> : vector<16xf32>
    %128 = vector.multi_reduction <add>, %127, %cst_45 [1] : vector<16x32xf32> to vector<16xf32>
    %129 = vector.shape_cast %128 : vector<16xf32> to vector<16x1xf32>
    %cst_46 = arith.constant 3.200000e+01 : f32
    %130 = vector.broadcast %cst_46 : f32 to vector<16x1xf32>
    %131 = arith.divf %129, %130 : vector<16x1xf32>
    %132 = vector.broadcast %124 : vector<16x1xf32> to vector<16x32xf32>
    %133 = arith.subf %118, %132 : vector<16x32xf32>
    %cst_47 = arith.constant 9.99999974E-6 : f32
    %134 = vector.broadcast %cst_47 : f32 to vector<16x1xf32>
    %135 = arith.addf %131, %134 : vector<16x1xf32>
    %136 = math.rsqrt %135 : vector<16x1xf32>
    %137 = vector.broadcast %136 : vector<16x1xf32> to vector<16x32xf32>
    %138 = arith.mulf %133, %137 : vector<16x32xf32>
    %139 = vector.broadcast %119 : vector<1x32xf32> to vector<16x32xf32>
    %140 = arith.mulf %138, %139 : vector<16x32xf32>
    %141 = vector.broadcast %120 : vector<1x32xf32> to vector<16x32xf32>
    %142 = arith.addf %140, %141 : vector<16x32xf32>
    %143 = arith.truncf %142 : vector<16x32xf32> to vector<16x32xbf16>
    %c0_48 = arith.constant 0 : index
    %c0_49 = arith.constant 0 : index
    %144 = vector.load %arg10[%c0_48, %c0_49] : memref<32x128xbf16, #tpu.memory_space<vmem>>, vector<32x128xbf16>
    %cst_50 = arith.constant dense<0.000000e+00> : vector<16x128xf32>
    %145 = tpu.matmul %143, %144, %cst_50 {dimension_numbers = #tpu.dot_dimension_numbers<[1], [0], [0], [1], [0, 0, 1, 1], [], []>} : vector<16x32xbf16>, vector<32x128xbf16>, vector<16x128xf32> -> vector<16x128xf32>
    %c0_51 = arith.constant 0 : index
    %c0_52 = arith.constant 0 : index
    %146 = vector.load %arg11[%c0_51, %c0_52] : memref<1x128xf32, #tpu.memory_space<vmem>>, vector<1x128xf32>
    %147 = vector.broadcast %146 : vector<1x128xf32> to vector<16x128xf32>
    %148 = arith.addf %145, %147 : vector<16x128xf32>
    %cst_53 = arith.constant 5.000000e-01 : f32
    %149 = vector.broadcast %cst_53 : f32 to vector<16x128xf32>
    %150 = arith.mulf %149, %148 : vector<16x128xf32>
    %cst_54 = arith.constant 0.707106769 : f32
    %151 = vector.broadcast %cst_54 : f32 to vector<16x128xf32>
    %152 = arith.mulf %148, %151 : vector<16x128xf32>
    %153 = math.erf %152 : vector<16x128xf32>
    %cst_55 = arith.constant 1.000000e+00 : f32
    %154 = vector.broadcast %cst_55 : f32 to vector<16x128xf32>
    %155 = arith.addf %154, %153 : vector<16x128xf32>
    %156 = arith.mulf %150, %155 : vector<16x128xf32>
    %157 = arith.truncf %156 : vector<16x128xf32> to vector<16x128xbf16>
    %c0_56 = arith.constant 0 : index
    %c0_57 = arith.constant 0 : index
    %158 = vector.load %arg12[%c0_56, %c0_57] : memref<128x32xbf16, #tpu.memory_space<vmem>>, vector<128x32xbf16>
    %cst_58 = arith.constant dense<0.000000e+00> : vector<16x32xf32>
    %159 = tpu.matmul %157, %158, %cst_58 {dimension_numbers = #tpu.dot_dimension_numbers<[1], [0], [0], [1], [0, 0, 1, 1], [], []>} : vector<16x128xbf16>, vector<128x32xbf16>, vector<16x32xf32> -> vector<16x32xf32>
    %c0_59 = arith.constant 0 : index
    %c0_60 = arith.constant 0 : index
    %160 = vector.load %arg13[%c0_59, %c0_60] : memref<1x32xf32, #tpu.memory_space<vmem>>, vector<1x32xf32>
    %161 = vector.broadcast %160 : vector<1x32xf32> to vector<16x32xf32>
    %162 = arith.addf %159, %161 : vector<16x32xf32>
    %163 = arith.addf %118, %162 : vector<16x32xf32>
    %c0_61 = arith.constant 0 : index
    %c0_62 = arith.constant 0 : index
    %164 = vector.load %arg14[%c0_61, %c0_62] : memref<16x32xf32, #tpu.memory_space<vmem>>, vector<16x32xf32>
    tpu.vector_store %arg14[%c0_61, %c0_62], %163 {strides = array<i32>} : memref<16x32xf32, #tpu.memory_space<vmem>>, vector<16x32xf32>,
    return
  }
  func.func @transform_0(%arg0: i32) -> (i32, i32) {
    %c0_i32 = arith.constant 0 : i32
    %c0_i32_0 = arith.constant 0 : i32
    return %arg0, %c0_i32 : i32, i32
  }
  func.func @transform_1(%arg0: i32) -> (i32, i32) {
    %c0_i32 = arith.constant 0 : i32
    %c0_i32_0 = arith.constant 0 : i32
    %c0_i32_1 = arith.constant 0 : i32
    return %c0_i32, %c0_i32_0 : i32, i32
  }
  func.func @transform_2(%arg0: i32) -> (i32, i32) {
    %c0_i32 = arith.constant 0 : i32
    %c0_i32_0 = arith.constant 0 : i32
    %c0_i32_1 = arith.constant 0 : i32
    return %c0_i32, %c0_i32_0 : i32, i32
  }
  func.func @transform_3(%arg0: i32) -> (i32, i32) {
    %c0_i32 = arith.constant 0 : i32
    %c0_i32_0 = arith.constant 0 : i32
    %c0_i32_1 = arith.constant 0 : i32
    return %c0_i32, %c0_i32_0 : i32, i32
  }
  func.func @transform_4(%arg0: i32) -> (i32, i32) {
    %c0_i32 = arith.constant 0 : i32
    %c0_i32_0 = arith.constant 0 : i32
    %c0_i32_1 = arith.constant 0 : i32
    return %c0_i32, %c0_i32_0 : i32, i32
  }
  func.func @transform_5(%arg0: i32) -> (i32, i32) {
    %c0_i32 = arith.constant 0 : i32
    %c0_i32_0 = arith.constant 0 : i32
    %c0_i32_1 = arith.constant 0 : i32
    return %c0_i32, %c0_i32_0 : i32, i32
  }
  func.func @transform_6(%arg0: i32) -> (i32, i32) {
    %c0_i32 = arith.constant 0 : i32
    %c0_i32_0 = arith.constant 0 : i32
    %c0_i32_1 = arith.constant 0 : i32
    return %c0_i32, %c0_i32_0 : i32, i32
  }
  func.func @transform_7(%arg0: i32) -> (i32, i32) {
    %c0_i32 = arith.constant 0 : i32
    %c0_i32_0 = arith.constant 0 : i32
    %c0_i32_1 = arith.constant 0 : i32
    return %c0_i32, %c0_i32_0 : i32, i32
  }
  func.func @transform_8(%arg0: i32) -> (i32, i32) {
    %c0_i32 = arith.constant 0 : i32
    %c0_i32_0 = arith.constant 0 : i32
    %c0_i32_1 = arith.constant 0 : i32
    return %c0_i32, %c0_i32_0 : i32, i32
  }
  func.func @transform_9(%arg0: i32) -> (i32, i32) {
    %c0_i32 = arith.constant 0 : i32
    %c0_i32_0 = arith.constant 0 : i32
    %c0_i32_1 = arith.constant 0 : i32
    return %c0_i32, %c0_i32_0 : i32, i32
  }
  func.func @transform_10(%arg0: i32) -> (i32, i32) {
    %c0_i32 = arith.constant 0 : i32
    %c0_i32_0 = arith.constant 0 : i32
    %c0_i32_1 = arith.constant 0 : i32
    return %c0_i32, %c0_i32_0 : i32, i32
  }
  func.func @transform_11(%arg0: i32) -> (i32, i32) {
    %c0_i32 = arith.constant 0 : i32
    %c0_i32_0 = arith.constant 0 : i32
    %c0_i32_1 = arith.constant 0 : i32
    return %c0_i32, %c0_i32_0 : i32, i32
  }
  func.func @transform_12(%arg0: i32) -> (i32, i32) {
    %c0_i32 = arith.constant 0 : i32
    %c0_i32_0 = arith.constant 0 : i32
    %c0_i32_1 = arith.constant 0 : i32
    return %c0_i32, %c0_i32_0 : i32, i32
  }
  func.func @transform_13(%arg0: i32) -> (i32, i32) {
    %c0_i32 = arith.constant 0 : i32
    %c0_i32_0 = arith.constant 0 : i32
    return %arg0, %c0_i32 : i32, i32
  }
}

module attributes {stable_mosaic.version = 11 : i64} {
  func.func @swin_block_kernel(%arg0: i32, %arg1: memref<16x32xf32, #tpu.memory_space<vmem>>, %arg2: memref<1x32xf32, #tpu.memory_space<vmem>>, %arg3: memref<1x32xf32, #tpu.memory_space<vmem>>, %arg4: memref<32x96xbf16, #tpu.memory_space<vmem>>, %arg5: memref<1x96xf32, #tpu.memory_space<vmem>>, %arg6: memref<32x32xbf16, #tpu.memory_space<vmem>>, %arg7: memref<1x32xf32, #tpu.memory_space<vmem>>, %arg8: memref<1x32xf32, #tpu.memory_space<vmem>>, %arg9: memref<1x32xf32, #tpu.memory_space<vmem>>, %arg10: memref<32x128xbf16, #tpu.memory_space<vmem>>, %arg11: memref<1x128xf32, #tpu.memory_space<vmem>>, %arg12: memref<128x32xbf16, #tpu.memory_space<vmem>>, %arg13: memref<1x32xf32, #tpu.memory_space<vmem>>, %arg14: memref<16x32xf32, #tpu.memory_space<vmem>>) attributes {dimension_semantics = [#tpu.dimension_semantics<parallel>], iteration_bounds = array<i64: 2>, scalar_prefetch = 0 : i64, scratch_operands = 0 : i64, tpu.core_type = #tpu.core_type<tc>, window_params = [{transform_indices = @transform_0, window_bounds = array<i64: 16, 32>}, {pipeline_mode = #tpu.pipeline_mode<synchronous>, transform_indices = @transform_1, window_bounds = array<i64: 1, 32>}, {pipeline_mode = #tpu.pipeline_mode<synchronous>, transform_indices = @transform_2, window_bounds = array<i64: 1, 32>}, {pipeline_mode = #tpu.pipeline_mode<synchronous>, transform_indices = @transform_3, window_bounds = array<i64: 32, 96>}, {pipeline_mode = #tpu.pipeline_mode<synchronous>, transform_indices = @transform_4, window_bounds = array<i64: 1, 96>}, {pipeline_mode = #tpu.pipeline_mode<synchronous>, transform_indices = @transform_5, window_bounds = array<i64: 32, 32>}, {pipeline_mode = #tpu.pipeline_mode<synchronous>, transform_indices = @transform_6, window_bounds = array<i64: 1, 32>}, {pipeline_mode = #tpu.pipeline_mode<synchronous>, transform_indices = @transform_7, window_bounds = array<i64: 1, 32>}, {pipeline_mode = #tpu.pipeline_mode<synchronous>, transform_indices = @transform_8, window_bounds = array<i64: 1, 32>}, {pipeline_mode = #tpu.pipeline_mode<synchronous>, transform_indices = @transform_9, window_bounds = array<i64: 32, 128>}, {pipeline_mode = #tpu.pipeline_mode<synchronous>, transform_indices = @transform_10, window_bounds = array<i64: 1, 128>}, {pipeline_mode = #tpu.pipeline_mode<synchronous>, transform_indices = @transform_11, window_bounds = array<i64: 128, 32>}, {pipeline_mode = #tpu.pipeline_mode<synchronous>, transform_indices = @transform_12, window_bounds = array<i64: 1, 32>}, {transform_indices = @transform_13, window_bounds = array<i64: 16, 32>}]} {
    %c0 = arith.constant 0 : index
    %c0_0 = arith.constant 0 : index
    %0 = vector.load %arg1[%c0, %c0_0] : memref<16x32xf32, #tpu.memory_space<vmem>>, vector<16x32xf32>
    %c0_1 = arith.constant 0 : index
    %c0_2 = arith.constant 0 : index
    %1 = vector.load %arg2[%c0_1, %c0_2] : memref<1x32xf32, #tpu.memory_space<vmem>>, vector<1x32xf32>
    %c0_3 = arith.constant 0 : index
    %c0_4 = arith.constant 0 : index
    %2 = vector.load %arg3[%c0_3, %c0_4] : memref<1x32xf32, #tpu.memory_space<vmem>>, vector<1x32xf32>
    %cst = arith.constant dense<0.000000e+00> : vector<16xf32>
    %3 = vector.multi_reduction <add>, %0, %cst [1] : vector<16x32xf32> to vector<16xf32>
    %4 = vector.shape_cast %3 : vector<16xf32> to vector<16x1xf32>
    %cst_5 = arith.constant 3.200000e+01 : f32
    %5 = vector.broadcast %cst_5 : f32 to vector<16x1xf32>
    %6 = arith.divf %4, %5 : vector<16x1xf32>
    %7 = vector.broadcast %6 : vector<16x1xf32> to vector<16x32xf32>
    %8 = arith.subf %0, %7 : vector<16x32xf32>
    %9 = arith.mulf %8, %8 : vector<16x32xf32>
    %cst_6 = arith.constant dense<0.000000e+00> : vector<16xf32>
    %10 = vector.multi_reduction <add>, %9, %cst_6 [1] : vector<16x32xf32> to vector<16xf32>
    %11 = vector.shape_cast %10 : vector<16xf32> to vector<16x1xf32>
    %cst_7 = arith.constant 3.200000e+01 : f32
    %12 = vector.broadcast %cst_7 : f32 to vector<16x1xf32>
    %13 = arith.divf %11, %12 : vector<16x1xf32>
    %14 = vector.broadcast %6 : vector<16x1xf32> to vector<16x32xf32>
    %15 = arith.subf %0, %14 : vector<16x32xf32>
    %cst_8 = arith.constant 9.99999974E-6 : f32
    %16 = vector.broadcast %cst_8 : f32 to vector<16x1xf32>
    %17 = arith.addf %13, %16 : vector<16x1xf32>
    %18 = math.rsqrt %17 : vector<16x1xf32>
    %19 = vector.broadcast %18 : vector<16x1xf32> to vector<16x32xf32>
    %20 = arith.mulf %15, %19 : vector<16x32xf32>
    %21 = vector.broadcast %1 : vector<1x32xf32> to vector<16x32xf32>
    %22 = arith.mulf %20, %21 : vector<16x32xf32>
    %23 = vector.broadcast %2 : vector<1x32xf32> to vector<16x32xf32>
    %24 = arith.addf %22, %23 : vector<16x32xf32>
    %25 = arith.truncf %24 : vector<16x32xf32> to vector<16x32xbf16>
    %c0_9 = arith.constant 0 : index
    %c0_10 = arith.constant 0 : index
    %26 = vector.load %arg4[%c0_9, %c0_10] : memref<32x96xbf16, #tpu.memory_space<vmem>>, vector<32x96xbf16>
    %cst_11 = arith.constant dense<0.000000e+00> : vector<16x96xf32>
    %27 = tpu.matmul %25, %26, %cst_11 {dimension_numbers = #tpu.dot_dimension_numbers<[1], [0], [0], [1], [0, 0, 1, 1], [], []>} : vector<16x32xbf16>, vector<32x96xbf16>, vector<16x96xf32> -> vector<16x96xf32>
    %c0_12 = arith.constant 0 : index
    %c0_13 = arith.constant 0 : index
    %28 = vector.load %arg5[%c0_12, %c0_13] : memref<1x96xf32, #tpu.memory_space<vmem>>, vector<1x96xf32>
    %29 = vector.broadcast %28 : vector<1x96xf32> to vector<16x96xf32>
    %30 = arith.addf %27, %29 : vector<16x96xf32>
    %31 = vector.shape_cast %30 : vector<16x96xf32> to vector<2x8x96xf32>
    %32 = vector.extract_strided_slice %31 {offsets = [0, 0, 0], sizes = [2, 8, 32], strides = [1, 1, 1]} : vector<2x8x96xf32> to vector<2x8x32xf32>
    %33 = arith.truncf %32 : vector<2x8x32xf32> to vector<2x8x32xbf16>
    %34 = vector.extract_strided_slice %31 {offsets = [0, 0, 32], sizes = [2, 8, 32], strides = [1, 1, 1]} : vector<2x8x96xf32> to vector<2x8x32xf32>
    %35 = arith.truncf %34 : vector<2x8x32xf32> to vector<2x8x32xbf16>
    %36 = vector.extract_strided_slice %31 {offsets = [0, 0, 64], sizes = [2, 8, 32], strides = [1, 1, 1]} : vector<2x8x96xf32> to vector<2x8x32xf32>
    %37 = arith.truncf %36 : vector<2x8x32xf32> to vector<2x8x32xbf16>
    %38 = vector.extract_strided_slice %33 {offsets = [0, 0, 0], sizes = [2, 8, 8], strides = [1, 1, 1]} : vector<2x8x32xbf16> to vector<2x8x8xbf16>
    %39 = vector.extract_strided_slice %35 {offsets = [0, 0, 0], sizes = [2, 8, 8], strides = [1, 1, 1]} : vector<2x8x32xbf16> to vector<2x8x8xbf16>
    %40 = vector.extract_strided_slice %37 {offsets = [0, 0, 0], sizes = [2, 8, 8], strides = [1, 1, 1]} : vector<2x8x32xbf16> to vector<2x8x8xbf16>
    "tpu.trace_start"() <{level = 10 : i32, message = "bnd,bmd->bnm"}> : () -> ()
    %cst_14 = arith.constant dense<0.000000e+00> : vector<2x8x8xf32>
    %41 = tpu.matmul %38, %39, %cst_14 {dimension_numbers = #tpu.dot_dimension_numbers<[2], [2], [1], [1], [0, 0, 0, 1, 1, 1], [0], [0]>} : vector<2x8x8xbf16>, vector<2x8x8xbf16>, vector<2x8x8xf32> -> vector<2x8x8xf32>
    "tpu.trace_stop"() : () -> ()
    %cst_15 = arith.constant 0.353553385 : f32
    %42 = vector.broadcast %cst_15 : f32 to vector<2x8x8xf32>
    %43 = arith.mulf %41, %42 : vector<2x8x8xf32>
    %cst_16 = arith.constant dense<0xFF800000> : vector<2x8xf32>
    %44 = vector.multi_reduction <maximumf>, %43, %cst_16 [2] : vector<2x8x8xf32> to vector<2x8xf32>
    %45 = vector.shape_cast %44 : vector<2x8xf32> to vector<2x8x1xf32>
    %46 = vector.broadcast %45 : vector<2x8x1xf32> to vector<2x8x8xf32>
    %47 = arith.subf %43, %46 : vector<2x8x8xf32>
    %48 = math.exp %47 : vector<2x8x8xf32>
    %cst_17 = arith.constant dense<0.000000e+00> : vector<2x8xf32>
    %49 = vector.multi_reduction <add>, %48, %cst_17 [2] : vector<2x8x8xf32> to vector<2x8xf32>
    %50 = vector.shape_cast %49 : vector<2x8xf32> to vector<2x8x1xf32>
    %51 = tpu.reciprocal %50 {approx = true} : vector<2x8x1xf32> -> vector<2x8x1xf32>
    %52 = vector.broadcast %51 : vector<2x8x1xf32> to vector<2x8x8xf32>
    %53 = arith.mulf %48, %52 : vector<2x8x8xf32>
    %54 = arith.truncf %53 : vector<2x8x8xf32> to vector<2x8x8xbf16>
    "tpu.trace_start"() <{level = 10 : i32, message = "bnm,bmd->bnd"}> : () -> ()
    %cst_18 = arith.constant dense<0.000000e+00> : vector<2x8x8xf32>
    %55 = tpu.matmul %54, %40, %cst_18 {dimension_numbers = #tpu.dot_dimension_numbers<[2], [1], [1], [2], [0, 0, 0, 1, 1, 2], [0], [0]>} : vector<2x8x8xbf16>, vector<2x8x8xbf16>, vector<2x8x8xf32> -> vector<2x8x8xf32>
    "tpu.trace_stop"() : () -> ()
    %56 = vector.extract_strided_slice %33 {offsets = [0, 0, 8], sizes = [2, 8, 8], strides = [1, 1, 1]} : vector<2x8x32xbf16> to vector<2x8x8xbf16>
    %57 = vector.extract_strided_slice %35 {offsets = [0, 0, 8], sizes = [2, 8, 8], strides = [1, 1, 1]} : vector<2x8x32xbf16> to vector<2x8x8xbf16>
    %58 = vector.extract_strided_slice %37 {offsets = [0, 0, 8], sizes = [2, 8, 8], strides = [1, 1, 1]} : vector<2x8x32xbf16> to vector<2x8x8xbf16>
    "tpu.trace_start"() <{level = 10 : i32, message = "bnd,bmd->bnm"}> : () -> ()
    %cst_19 = arith.constant dense<0.000000e+00> : vector<2x8x8xf32>
    %59 = tpu.matmul %56, %57, %cst_19 {dimension_numbers = #tpu.dot_dimension_numbers<[2], [2], [1], [1], [0, 0, 0, 1, 1, 1], [0], [0]>} : vector<2x8x8xbf16>, vector<2x8x8xbf16>, vector<2x8x8xf32> -> vector<2x8x8xf32>
    "tpu.trace_stop"() : () -> ()
    %cst_20 = arith.constant 0.353553385 : f32
    %60 = vector.broadcast %cst_20 : f32 to vector<2x8x8xf32>
    %61 = arith.mulf %59, %60 : vector<2x8x8xf32>
    %cst_21 = arith.constant dense<0xFF800000> : vector<2x8xf32>
    %62 = vector.multi_reduction <maximumf>, %61, %cst_21 [2] : vector<2x8x8xf32> to vector<2x8xf32>
    %63 = vector.shape_cast %62 : vector<2x8xf32> to vector<2x8x1xf32>
    %64 = vector.broadcast %63 : vector<2x8x1xf32> to vector<2x8x8xf32>
    %65 = arith.subf %61, %64 : vector<2x8x8xf32>
    %66 = math.exp %65 : vector<2x8x8xf32>
    %cst_22 = arith.constant dense<0.000000e+00> : vector<2x8xf32>
    %67 = vector.multi_reduction <add>, %66, %cst_22 [2] : vector<2x8x8xf32> to vector<2x8xf32>
    %68 = vector.shape_cast %67 : vector<2x8xf32> to vector<2x8x1xf32>
    %69 = tpu.reciprocal %68 {approx = true} : vector<2x8x1xf32> -> vector<2x8x1xf32>
    %70 = vector.broadcast %69 : vector<2x8x1xf32> to vector<2x8x8xf32>
    %71 = arith.mulf %66, %70 : vector<2x8x8xf32>
    %72 = arith.truncf %71 : vector<2x8x8xf32> to vector<2x8x8xbf16>
    "tpu.trace_start"() <{level = 10 : i32, message = "bnm,bmd->bnd"}> : () -> ()
    %cst_23 = arith.constant dense<0.000000e+00> : vector<2x8x8xf32>
    %73 = tpu.matmul %72, %58, %cst_23 {dimension_numbers = #tpu.dot_dimension_numbers<[2], [1], [1], [2], [0, 0, 0, 1, 1, 2], [0], [0]>} : vector<2x8x8xbf16>, vector<2x8x8xbf16>, vector<2x8x8xf32> -> vector<2x8x8xf32>
    "tpu.trace_stop"() : () -> ()
    %74 = vector.extract_strided_slice %33 {offsets = [0, 0, 16], sizes = [2, 8, 8], strides = [1, 1, 1]} : vector<2x8x32xbf16> to vector<2x8x8xbf16>
    %75 = vector.extract_strided_slice %35 {offsets = [0, 0, 16], sizes = [2, 8, 8], strides = [1, 1, 1]} : vector<2x8x32xbf16> to vector<2x8x8xbf16>
    %76 = vector.extract_strided_slice %37 {offsets = [0, 0, 16], sizes = [2, 8, 8], strides = [1, 1, 1]} : vector<2x8x32xbf16> to vector<2x8x8xbf16>
    "tpu.trace_start"() <{level = 10 : i32, message = "bnd,bmd->bnm"}> : () -> ()
    %cst_24 = arith.constant dense<0.000000e+00> : vector<2x8x8xf32>
    %77 = tpu.matmul %74, %75, %cst_24 {dimension_numbers = #tpu.dot_dimension_numbers<[2], [2], [1], [1], [0, 0, 0, 1, 1, 1], [0], [0]>} : vector<2x8x8xbf16>, vector<2x8x8xbf16>, vector<2x8x8xf32> -> vector<2x8x8xf32>
    "tpu.trace_stop"() : () -> ()
    %cst_25 = arith.constant 0.353553385 : f32
    %78 = vector.broadcast %cst_25 : f32 to vector<2x8x8xf32>
    %79 = arith.mulf %77, %78 : vector<2x8x8xf32>
    %cst_26 = arith.constant dense<0xFF800000> : vector<2x8xf32>
    %80 = vector.multi_reduction <maximumf>, %79, %cst_26 [2] : vector<2x8x8xf32> to vector<2x8xf32>
    %81 = vector.shape_cast %80 : vector<2x8xf32> to vector<2x8x1xf32>
    %82 = vector.broadcast %81 : vector<2x8x1xf32> to vector<2x8x8xf32>
    %83 = arith.subf %79, %82 : vector<2x8x8xf32>
    %84 = math.exp %83 : vector<2x8x8xf32>
    %cst_27 = arith.constant dense<0.000000e+00> : vector<2x8xf32>
    %85 = vector.multi_reduction <add>, %84, %cst_27 [2] : vector<2x8x8xf32> to vector<2x8xf32>
    %86 = vector.shape_cast %85 : vector<2x8xf32> to vector<2x8x1xf32>
    %87 = tpu.reciprocal %86 {approx = true} : vector<2x8x1xf32> -> vector<2x8x1xf32>
    %88 = vector.broadcast %87 : vector<2x8x1xf32> to vector<2x8x8xf32>
    %89 = arith.mulf %84, %88 : vector<2x8x8xf32>
    %90 = arith.truncf %89 : vector<2x8x8xf32> to vector<2x8x8xbf16>
    "tpu.trace_start"() <{level = 10 : i32, message = "bnm,bmd->bnd"}> : () -> ()
    %cst_28 = arith.constant dense<0.000000e+00> : vector<2x8x8xf32>
    %91 = tpu.matmul %90, %76, %cst_28 {dimension_numbers = #tpu.dot_dimension_numbers<[2], [1], [1], [2], [0, 0, 0, 1, 1, 2], [0], [0]>} : vector<2x8x8xbf16>, vector<2x8x8xbf16>, vector<2x8x8xf32> -> vector<2x8x8xf32>
    "tpu.trace_stop"() : () -> ()
    %92 = vector.extract_strided_slice %33 {offsets = [0, 0, 24], sizes = [2, 8, 8], strides = [1, 1, 1]} : vector<2x8x32xbf16> to vector<2x8x8xbf16>
    %93 = vector.extract_strided_slice %35 {offsets = [0, 0, 24], sizes = [2, 8, 8], strides = [1, 1, 1]} : vector<2x8x32xbf16> to vector<2x8x8xbf16>
    %94 = vector.extract_strided_slice %37 {offsets = [0, 0, 24], sizes = [2, 8, 8], strides = [1, 1, 1]} : vector<2x8x32xbf16> to vector<2x8x8xbf16>
    "tpu.trace_start"() <{level = 10 : i32, message = "bnd,bmd->bnm"}> : () -> ()
    %cst_29 = arith.constant dense<0.000000e+00> : vector<2x8x8xf32>
    %95 = tpu.matmul %92, %93, %cst_29 {dimension_numbers = #tpu.dot_dimension_numbers<[2], [2], [1], [1], [0, 0, 0, 1, 1, 1], [0], [0]>} : vector<2x8x8xbf16>, vector<2x8x8xbf16>, vector<2x8x8xf32> -> vector<2x8x8xf32>
    "tpu.trace_stop"() : () -> ()
    %cst_30 = arith.constant 0.353553385 : f32
    %96 = vector.broadcast %cst_30 : f32 to vector<2x8x8xf32>
    %97 = arith.mulf %95, %96 : vector<2x8x8xf32>
    %cst_31 = arith.constant dense<0xFF800000> : vector<2x8xf32>
    %98 = vector.multi_reduction <maximumf>, %97, %cst_31 [2] : vector<2x8x8xf32> to vector<2x8xf32>
    %99 = vector.shape_cast %98 : vector<2x8xf32> to vector<2x8x1xf32>
    %100 = vector.broadcast %99 : vector<2x8x1xf32> to vector<2x8x8xf32>
    %101 = arith.subf %97, %100 : vector<2x8x8xf32>
    %102 = math.exp %101 : vector<2x8x8xf32>
    %cst_32 = arith.constant dense<0.000000e+00> : vector<2x8xf32>
    %103 = vector.multi_reduction <add>, %102, %cst_32 [2] : vector<2x8x8xf32> to vector<2x8xf32>
    %104 = vector.shape_cast %103 : vector<2x8xf32> to vector<2x8x1xf32>
    %105 = tpu.reciprocal %104 {approx = true} : vector<2x8x1xf32> -> vector<2x8x1xf32>
    %106 = vector.broadcast %105 : vector<2x8x1xf32> to vector<2x8x8xf32>
    %107 = arith.mulf %102, %106 : vector<2x8x8xf32>
    %108 = arith.truncf %107 : vector<2x8x8xf32> to vector<2x8x8xbf16>
    "tpu.trace_start"() <{level = 10 : i32, message = "bnm,bmd->bnd"}> : () -> ()
    %cst_33 = arith.constant dense<0.000000e+00> : vector<2x8x8xf32>
    %109 = tpu.matmul %108, %94, %cst_33 {dimension_numbers = #tpu.dot_dimension_numbers<[2], [1], [1], [2], [0, 0, 0, 1, 1, 2], [0], [0]>} : vector<2x8x8xbf16>, vector<2x8x8xbf16>, vector<2x8x8xf32> -> vector<2x8x8xf32>
    "tpu.trace_stop"() : () -> ()
    %110 = tpu.concatenate %55, %73, %91, %109 in 2 : vector<2x8x8xf32>, vector<2x8x8xf32>, vector<2x8x8xf32>, vector<2x8x8xf32> -> vector<2x8x32xf32>
    %111 = vector.shape_cast %110 : vector<2x8x32xf32> to vector<16x32xf32>
    %112 = arith.truncf %111 : vector<16x32xf32> to vector<16x32xbf16>
    %c0_34 = arith.constant 0 : index
    %c0_35 = arith.constant 0 : index
    %113 = vector.load %arg6[%c0_34, %c0_35] : memref<32x32xbf16, #tpu.memory_space<vmem>>, vector<32x32xbf16>
    %cst_36 = arith.constant dense<0.000000e+00> : vector<16x32xf32>
    %114 = tpu.matmul %112, %113, %cst_36 {dimension_numbers = #tpu.dot_dimension_numbers<[1], [0], [0], [1], [0, 0, 1, 1], [], []>} : vector<16x32xbf16>, vector<32x32xbf16>, vector<16x32xf32> -> vector<16x32xf32>
    %c0_37 = arith.constant 0 : index
    %c0_38 = arith.constant 0 : index
    %115 = vector.load %arg7[%c0_37, %c0_38] : memref<1x32xf32, #tpu.memory_space<vmem>>, vector<1x32xf32>
    %116 = vector.broadcast %115 : vector<1x32xf32> to vector<16x32xf32>
    %117 = arith.addf %114, %116 : vector<16x32xf32>
    %118 = arith.addf %0, %117 : vector<16x32xf32>
    %c0_39 = arith.constant 0 : index
    %c0_40 = arith.constant 0 : index
    %119 = vector.load %arg8[%c0_39, %c0_40] : memref<1x32xf32, #tpu.memory_space<vmem>>, vector<1x32xf32>
    %c0_41 = arith.constant 0 : index
    %c0_42 = arith.constant 0 : index
    %120 = vector.load %arg9[%c0_41, %c0_42] : memref<1x32xf32, #tpu.memory_space<vmem>>, vector<1x32xf32>
    %cst_43 = arith.constant dense<0.000000e+00> : vector<16xf32>
    %121 = vector.multi_reduction <add>, %118, %cst_43 [1] : vector<16x32xf32> to vector<16xf32>
    %122 = vector.shape_cast %121 : vector<16xf32> to vector<16x1xf32>
    %cst_44 = arith.constant 3.200000e+01 : f32
    %123 = vector.broadcast %cst_44 : f32 to vector<16x1xf32>
    %124 = arith.divf %122, %123 : vector<16x1xf32>
    %125 = vector.broadcast %124 : vector<16x1xf32> to vector<16x32xf32>
    %126 = arith.subf %118, %125 : vector<16x32xf32>
    %127 = arith.mulf %126, %126 : vector<16x32xf32>
    %cst_45 = arith.constant dense<0.000000e+00> : vector<16xf32>
    %128 = vector.multi_reduction <add>, %127, %cst_45 [1] : vector<16x32xf32> to vector<16xf32>
    %129 = vector.shape_cast %128 : vector<16xf32> to vector<16x1xf32>
    %cst_46 = arith.constant 3.200000e+01 : f32
    %130 = vector.broadcast %cst_46 : f32 to vector<16x1xf32>
    %131 = arith.divf %129, %130 : vector<16x1xf32>
    %132 = vector.broadcast %124 : vector<16x1xf32> to vector<16x32xf32>
    %133 = arith.subf %118, %132 : vector<16x32xf32>
    %cst_47 = arith.constant 9.99999974E-6 : f32
    %134 = vector.broadcast %cst_47 : f32 to vector<16x1xf32>
    %135 = arith.addf %131, %134 : vector<16x1xf32>
    %136 = math.rsqrt %135 : vector<16x1xf32>
    %137 = vector.broadcast %136 : vector<16x1xf32> to vector<16x32xf32>
    %138 = arith.mulf %133, %137 : vector<16x32xf32>
    %139 = vector.broadcast %119 : vector<1x32xf32> to vector<16x32xf32>
    %140 = arith.mulf %138, %139 : vector<16x32xf32>
    %141 = vector.broadcast %120 : vector<1x32xf32> to vector<16x32xf32>
    %142 = arith.addf %140, %141 : vector<16x32xf32>
    %143 = arith.truncf %142 : vector<16x32xf32> to vector<16x32xbf16>
    %c0_48 = arith.constant 0 : index
    %c0_49 = arith.constant 0 : index
    %144 = vector.load %arg10[%c0_48, %c0_49] : memref<32x128xbf16, #tpu.memory_space<vmem>>, vector<32x128xbf16>
    %cst_50 = arith.constant dense<0.000000e+00> : vector<16x128xf32>
    %145 = tpu.matmul %143, %144, %cst_50 {dimension_numbers = #tpu.dot_dimension_numbers<[1], [0], [0], [1], [0, 0, 1, 1], [], []>} : vector<16x32xbf16>, vector<32x128xbf16>, vector<16x128xf32> -> vector<16x128xf32>
    %c0_51 = arith.constant 0 : index
    %c0_52 = arith.constant 0 : index
    %146 = vector.load %arg11[%c0_51, %c0_52] : memref<1x128xf32, #tpu.memory_space<vmem>>, vector<1x128xf32>
    %147 = vector.broadcast %146 : vector<1x128xf32> to vector<16x128xf32>
    %148 = arith.addf %145, %147 : vector<16x128xf32>
    %cst_53 = arith.constant 5.000000e-01 : f32
    %149 = vector.broadcast %cst_53 : f32 to vector<16x128xf32>
    %150 = arith.mulf %149, %148 : vector<16x128xf32>
    %cst_54 = arith.constant 0.707106769 : f32
    %151 = vector.broadcast %cst_54 : f32 to vector<16x128xf32>
    %152 = arith.mulf %148, %151 : vector<16x128xf32>
    %153 = math.erf %152 : vector<16x128xf32>
    %cst_55 = arith.constant 1.000000e+00 : f32
    %154 = vector.broadcast %cst_55 : f32 to vector<16x128xf32>
    %155 = arith.addf %154, %153 : vector<16x128xf32>
    %156 = arith.mulf %150, %155 : vector<16x128xf32>
    %157 = arith.truncf %156 : vector<16x128xf32> to vector<16x128xbf16>
    %c0_56 = arith.constant 0 : index
    %c0_57 = arith.constant 0 : index
    %158 = vector.load %arg12[%c0_56, %c0_57] : memref<128x32xbf16, #tpu.memory_space<vmem>>, vector<128x32xbf16>
    %cst_58 = arith.constant dense<0.000000e+00> : vector<16x32xf32>
    %159 = tpu.matmul %157, %158, %cst_58 {dimension_numbers = #tpu.dot_dimension_numbers<[1], [0], [0], [1], [0, 0, 1, 1], [], []>} : vector<16x128xbf16>, vector<128x32xbf16>, vector<16x32xf32> -> vector<16x32xf32>
    %c0_59 = arith.constant 0 : index
    %c0_60 = arith.constant 0 : index
    %160 = vector.load %arg13[%c0_59, %c0_60] : memref<1x32xf32, #tpu.memory_space<vmem>>, vector<1x32xf32>
    %161 = vector.broadcast %160 : vector<1x32xf32> to vector<16x32xf32>
    %162 = arith.addf %159, %161 : vector<16x32xf32>
    %163 = arith.addf %118, %162 : vector<16x32xf32>
    %c0_61 = arith.constant 0 : index
    %c0_62 = arith.constant 0 : index
    %164 = vector.load %arg14[%c0_61, %c0_62] : memref<16x32xf32, #tpu.memory_space<vmem>>, vector<16x32xf32>
    tpu.vector_store %arg14[%c0_61, %c0_62], %163 {strides = array<i32>} : memref<16x32xf32, #tpu.memory_space<vmem>>, vector<16x32xf32>,
    return
  }
  func.func @transform_0(%arg0: i32) -> (i32, i32) {
    %c0_i32 = arith.constant 0 : i32
    %c0_i32_0 = arith.constant 0 : i32
    return %arg0, %c0_i32 : i32, i32
  }
  func.func @transform_1(%arg0: i32) -> (i32, i32) {
    %c0_i32 = arith.constant 0 : i32
    %c0_i32_0 = arith.constant 0 : i32
    %c0_i32_1 = arith.constant 0 : i32
    return %c0_i32, %c0_i32_0 : i32, i32
  }
  func.func @transform_2(%arg0: i32) -> (i32, i32) {
    %c0_i32 = arith.constant 0 : i32
    %c0_i32_0 = arith.constant 0 : i32
    %c0_i32_1 = arith.constant 0 : i32
    return %c0_i32, %c0_i32_0 : i32, i32
  }
  func.func @transform_3(%arg0: i32) -> (i32, i32) {
    %c0_i32 = arith.constant 0 : i32
    %c0_i32_0 = arith.constant 0 : i32
    %c0_i32_1 = arith.constant 0 : i32
    return %c0_i32, %c0_i32_0 : i32, i32
  }
  func.func @transform_4(%arg0: i32) -> (i32, i32) {
    %c0_i32 = arith.constant 0 : i32
    %c0_i32_0 = arith.constant 0 : i32
    %c0_i32_1 = arith.constant 0 : i32
    return %c0_i32, %c0_i32_0 : i32, i32
  }
  func.func @transform_5(%arg0: i32) -> (i32, i32) {
    %c0_i32 = arith.constant 0 : i32
    %c0_i32_0 = arith.constant 0 : i32
    %c0_i32_1 = arith.constant 0 : i32
    return %c0_i32, %c0_i32_0 : i32, i32
  }
  func.func @transform_6(%arg0: i32) -> (i32, i32) {
    %c0_i32 = arith.constant 0 : i32
    %c0_i32_0 = arith.constant 0 : i32
    %c0_i32_1 = arith.constant 0 : i32
    return %c0_i32, %c0_i32_0 : i32, i32
  }
  func.func @transform_7(%arg0: i32) -> (i32, i32) {
    %c0_i32 = arith.constant 0 : i32
    %c0_i32_0 = arith.constant 0 : i32
    %c0_i32_1 = arith.constant 0 : i32
    return %c0_i32, %c0_i32_0 : i32, i32
  }
  func.func @transform_8(%arg0: i32) -> (i32, i32) {
    %c0_i32 = arith.constant 0 : i32
    %c0_i32_0 = arith.constant 0 : i32
    %c0_i32_1 = arith.constant 0 : i32
    return %c0_i32, %c0_i32_0 : i32, i32
  }
  func.func @transform_9(%arg0: i32) -> (i32, i32) {
    %c0_i32 = arith.constant 0 : i32
    %c0_i32_0 = arith.constant 0 : i32
    %c0_i32_1 = arith.constant 0 : i32
    return %c0_i32, %c0_i32_0 : i32, i32
  }
  func.func @transform_10(%arg0: i32) -> (i32, i32) {
    %c0_i32 = arith.constant 0 : i32
    %c0_i32_0 = arith.constant 0 : i32
    %c0_i32_1 = arith.constant 0 : i32
    return %c0_i32, %c0_i32_0 : i32, i32
  }
  func.func @transform_11(%arg0: i32) -> (i32, i32) {
    %c0_i32 = arith.constant 0 : i32
    %c0_i32_0 = arith.constant 0 : i32
    %c0_i32_1 = arith.constant 0 : i32
    return %c0_i32, %c0_i32_0 : i32, i32
  }
  func.func @transform_12(%arg0: i32) -> (i32, i32) {
    %c0_i32 = arith.constant 0 : i32
    %c0_i32_0 = arith.constant 0 : i32
    %c0_i32_1 = arith.constant 0 : i32
    return %c0_i32, %c0_i32_0 : i32, i32
  }
  func.func @transform_13(%arg0: i32) -> (i32, i32) {
    %c0_i32 = arith.constant 0 : i32
    %c0_i32_0 = arith.constant 0 : i32
    return %arg0, %c0_i32 : i32, i32
  }
}

</mosaic_0001>

<llo_original>
// kernel: tpu_custom_call.1
$region0: #{tpu_custom_call.1}
  #allocation0 [shape = 'u32[]', space=smem, size = 0x4, offset = 0x4, fixed_abs, tag = 'smem constant byte address 0x4 - core index']
  #allocation1 [shape = 'u32[144,128]{1,0:T(1,128)}', space=vmem, size = 0x12000, scoped, tag = 'internal scratch']
  %s0 = inlined_call_operand.hbm [shape: f32[32,32], index: 0, kind: input, shape index: {}]
  %s1 = inlined_call_operand.hbm [shape: f32[1,32], index: 1, kind: input, shape index: {}]
  %s2 = inlined_call_operand.hbm [shape: f32[1,32], index: 2, kind: input, shape index: {}]
  %s3 = inlined_call_operand.hbm [shape: bf16[32,96], index: 3, kind: input, shape index: {}]
  %s4 = inlined_call_operand.hbm [shape: f32[1,96], index: 4, kind: input, shape index: {}]
  %s5 = inlined_call_operand.hbm [shape: bf16[32,32], index: 5, kind: input, shape index: {}]
  %s6 = inlined_call_operand.hbm [shape: f32[1,32], index: 6, kind: input, shape index: {}]
  %s7 = inlined_call_operand.hbm [shape: f32[1,32], index: 7, kind: input, shape index: {}]
  %s8 = inlined_call_operand.hbm [shape: f32[1,32], index: 8, kind: input, shape index: {}]
  %s9 = inlined_call_operand.hbm [shape: bf16[32,128], index: 9, kind: input, shape index: {}]
  %s10 = inlined_call_operand.hbm [shape: f32[1,128], index: 10, kind: input, shape index: {}]
  %s11 = inlined_call_operand.hbm [shape: bf16[128,32], index: 11, kind: input, shape index: {}]
  %s12 = inlined_call_operand.hbm [shape: f32[1,32], index: 12, kind: input, shape index: {}]
  %s13 = inlined_call_operand.hbm [shape: f32[32,32], index: 13, kind: output, shape index: {}]
  %s14 = sld [smem:[#allocation0]]
  $region137: #{tpu_custom_call.1} parent=0
    _
  %s16 = ssub.s32 1, %s14
  %s17 = scalar_select 0, %s16, %s14
  $region1: #{tpu_custom_call.1} parent=0
    #allocation2 [shape = 'u8[16384]{0}', space=vmem, size = 0x4000, scoped, tag = 'input window, operand 0']
    #allocation3 [shape = 's32[2]{0}', space=sflag, size = 0x8, scoped, tag = 'scoped memory for tpu_custom_call.1']
    #allocation4 [shape = 's32[2]{0}', space=sflag, size = 0x8, scoped, tag = 'scoped memory for tpu_custom_call.1']
    #allocation5 [shape = 'u8[512]{0}', space=vmem, size = 0x400, scoped, tag = 'input window, operand 1, single buffered']
    #allocation6 [shape = 's32[1]{0}', space=sflag, size = 0x4, scoped, tag = 'scoped memory for tpu_custom_call.1']
    #allocation7 [shape = 'u8[512]{0}', space=vmem, size = 0x400, scoped, tag = 'input window, operand 2, single buffered']
    #allocation8 [shape = 'u8[8192]{0}', space=vmem, size = 0x2000, scoped, tag = 'input window, operand 3, single buffered']
    #allocation9 [shape = 's32[1]{0}', space=sflag, size = 0x4, scoped, tag = 'scoped memory for tpu_custom_call.1']
    #allocation10 [shape = 'u8[512]{0}', space=vmem, size = 0x400, scoped, tag = 'input window, operand 4, single buffered']
    #allocation11 [shape = 'u8[8192]{0}', space=vmem, size = 0x2000, scoped, tag = 'input window, operand 5, single buffered']
    #allocation12 [shape = 's32[1]{0}', space=sflag, size = 0x4, scoped, tag = 'scoped memory for tpu_custom_call.1']
    #allocation13 [shape = 'u8[512]{0}', space=vmem, size = 0x400, scoped, tag = 'input window, operand 6, single buffered']
    #allocation14 [shape = 'u8[512]{0}', space=vmem, size = 0x400, scoped, tag = 'input window, operand 7, single buffered']
    #allocation15 [shape = 's32[1]{0}', space=sflag, size = 0x4, scoped, tag = 'scoped memory for tpu_custom_call.1']
    #allocation16 [shape = 'u8[512]{0}', space=vmem, size = 0x400, scoped, tag = 'input window, operand 8, single buffered']
    #allocation17 [shape = 'u8[8192]{0}', space=vmem, size = 0x2000, scoped, tag = 'input window, operand 9, single buffered']
    #allocation18 [shape = 's32[1]{0}', space=sflag, size = 0x4, scoped, tag = 'scoped memory for tpu_custom_call.1']
    #allocation19 [shape = 'u8[512]{0}', space=vmem, size = 0x400, scoped, tag = 'input window, operand 10, single buffered']
    #allocation20 [shape = 'u8[32768]{0}', space=vmem, size = 0x8000, scoped, tag = 'input window, operand 11, single buffered']
    #allocation21 [shape = 's32[1]{0}', space=sflag, size = 0x4, scoped, tag = 'scoped memory for tpu_custom_call.1']
    #allocation22 [shape = 'u8[512]{0}', space=vmem, size = 0x400, scoped, tag = 'input window, operand 12, single buffered']
    #allocation23 [shape = 'u8[16384]{0}', space=vmem, size = 0x4000, scoped, tag = 'output window, operand 0']
    %18 = vsyncpa [#allocation3], 0
    %s19 = scalar_lea.sflag [#allocation3], 1
    %20 = vsyncpa %s19, 0
    %21 = vsyncpa [#allocation6], 0
    %22 = vsyncpa [#allocation9], 0
    %23 = vsyncpa [#allocation12], 0
    %24 = vsyncpa [#allocation15], 0
    %25 = vsyncpa [#allocation18], 0
    %26 = vsyncpa [#allocation21], 0
    %27 = vsyncpa [#allocation4], 0
    %s28 = scalar_lea.sflag [#allocation4], 1
    %29 = vsyncpa %s28, 0
    loop: start=0, step=1, limit=4
    $region2: #{tpu_custom_call.1} parent=1 // loop_pre_header
      _
    $region3: #{tpu_custom_call.1} parent=1 // loop_header
      %s31 = sphi 0, %s35
      %p32 = scmp.ge.s32.totalorder %s31, 4
      %s41 = sphi 0, %s43
      %s44 = sphi 0, %s41
      %s45 = sphi 0, %s44
      %s61 = sphi 0, %s45
      %s65 = sphi 0, %s65
      %s67 = sphi 0, %s65
      %s68 = sphi 0, %s67
      %s82 = sphi 0, %s68
      %s86 = sphi 0, %s86
      %s88 = sphi 0, %s86
      %s89 = sphi 0, %s88
      %s103 = sphi 0, %s89
      %s107 = sphi 0, %s107
      %s109 = sphi 0, %s107
      %s110 = sphi 0, %s109
      %s124 = sphi 0, %s110
      %s128 = sphi 0, %s128
      %s130 = sphi 0, %s128
      %s131 = sphi 0, %s130
      %s145 = sphi 0, %s131
      %s149 = sphi 0, %s149
      %s151 = sphi 0, %s149
      %s152 = sphi 0, %s151
      %s166 = sphi 0, %s152
      %s170 = sphi 0, %s170
      %s172 = sphi 0, %s170
      %s173 = sphi 0, %s172
      %s187 = sphi 0, %s173
      %s191 = sphi 0, %s191
      %s193 = sphi 0, %s191
      %s194 = sphi 0, %s193
      %s208 = sphi 0, %s194
      %s212 = sphi 0, %s212
      %s214 = sphi 0, %s212
      %s215 = sphi 0, %s214
      %s229 = sphi 0, %s215
      %s233 = sphi 0, %s233
      %s235 = sphi 0, %s233
      %s236 = sphi 0, %s235
      %s250 = sphi 0, %s236
      %s254 = sphi 0, %s254
      %s256 = sphi 0, %s254
      %s257 = sphi 0, %s256
      %s271 = sphi 0, %s257
      %s275 = sphi 0, %s275
      %s277 = sphi 0, %s275
      %s278 = sphi 0, %s277
      %s292 = sphi 0, %s278
      %s296 = sphi 0, %s296
      %s298 = sphi 0, %s296
      %s299 = sphi 0, %s298
      %s313 = sphi 0, %s299
      %s319 = sphi 0, %s321
      %s322 = sphi 0, %s319
      %s323 = sphi 0, %s322
      %s339 = sphi 0, %s323
    $region4: #{tpu_custom_call.1} parent=1 // loop_header_branch
      %34 = sbr.rel (%p32) target = $region8
    $region5: #{tpu_custom_call.1} parent=1 // loop_body
      %s36 = ssub.s32 %s31, 1
      %s37 = ssub.s32 %s31, 2
      %s38 = sadd.s32 %s31, 1
      %s39 = ssub.s32 %s31, %s38
      %p40 = scmp.eq.s32.totalorder %s39, 0
      %s42 = sadd.s32 %s41, 1
      %s43 = scalar_select %p40, %s41, %s42
      %p46 = pneg %p40
      %p47 = scmp.eq.s32.totalorder %s31, 1
      %p48 = por %p46, %p47
      %p49 = scmp.ne.s32.totalorder %s41, %s44
      %p50 = scmp.eq.s32.totalorder %s31, 0
      %p51 = por %p49, %p50
      %p52 = scmp.ne.s32.totalorder %s41, %s44
      %p53 = scmp.eq.s32.totalorder %s36, 1
      %p54 = por %p52, %p53
      %p55 = scmp.ne.s32.totalorder %s44, %s45
      %p56 = scmp.eq.s32.totalorder %s36, 0
      %p57 = por %p55, %p56
      %p58 = scmp.ne.s32.totalorder %s44, %s45
      %p59 = scmp.eq.s32.totalorder %s37, 1
      %p60 = por %p58, %p59
      %p62 = scmp.ne.s32.totalorder %s45, %s61
      %p63 = scmp.eq.s32.totalorder %s37, 0
      %p64 = por %p62, %p63
      %s66 = sadd.s32 %s65, 1
      %p69 = scmp.eq.s32.totalorder %s31, 1
      %p70 = scmp.ne.s32.totalorder %s65, %s67
      %p71 = scmp.eq.s32.totalorder %s31, 0
      %p72 = por %p70, %p71
      %p73 = scmp.ne.s32.totalorder %s65, %s67
      %p74 = scmp.eq.s32.totalorder %s36, 1
      %p75 = por %p73, %p74
      %p76 = scmp.ne.s32.totalorder %s67, %s68
      %p77 = scmp.eq.s32.totalorder %s36, 0
      %p78 = por %p76, %p77
      %p79 = scmp.ne.s32.totalorder %s67, %s68
      %p80 = scmp.eq.s32.totalorder %s37, 1
      %p81 = por %p79, %p80
      %p83 = scmp.ne.s32.totalorder %s68, %s82
      %p84 = scmp.eq.s32.totalorder %s37, 0
      %p85 = por %p83, %p84
      %s87 = sadd.s32 %s86, 1
      %p90 = scmp.eq.s32.totalorder %s31, 1
      %p91 = scmp.ne.s32.totalorder %s86, %s88
      %p92 = scmp.eq.s32.totalorder %s31, 0
      %p93 = por %p91, %p92
      %p94 = scmp.ne.s32.totalorder %s86, %s88
      %p95 = scmp.eq.s32.totalorder %s36, 1
      %p96 = por %p94, %p95
      %p97 = scmp.ne.s32.totalorder %s88, %s89
      %p98 = scmp.eq.s32.totalorder %s36, 0
      %p99 = por %p97, %p98
      %p100 = scmp.ne.s32.totalorder %s88, %s89
      %p101 = scmp.eq.s32.totalorder %s37, 1
      %p102 = por %p100, %p101
      %p104 = scmp.ne.s32.totalorder %s89, %s103
      %p105 = scmp.eq.s32.totalorder %s37, 0
      %p106 = por %p104, %p105
      %s108 = sadd.s32 %s107, 1
      %p111 = scmp.eq.s32.totalorder %s31, 1
      %p112 = scmp.ne.s32.totalorder %s107, %s109
      %p113 = scmp.eq.s32.totalorder %s31, 0
      %p114 = por %p112, %p113
      %p115 = scmp.ne.s32.totalorder %s107, %s109
      %p116 = scmp.eq.s32.totalorder %s36, 1
      %p117 = por %p115, %p116
      %p118 = scmp.ne.s32.totalorder %s109, %s110
      %p119 = scmp.eq.s32.totalorder %s36, 0
      %p120 = por %p118, %p119
      %p121 = scmp.ne.s32.totalorder %s109, %s110
      %p122 = scmp.eq.s32.totalorder %s37, 1
      %p123 = por %p121, %p122
      %p125 = scmp.ne.s32.totalorder %s110, %s124
      %p126 = scmp.eq.s32.totalorder %s37, 0
      %p127 = por %p125, %p126
      %s129 = sadd.s32 %s128, 1
      %p132 = scmp.eq.s32.totalorder %s31, 1
      %p133 = scmp.ne.s32.totalorder %s128, %s130
      %p134 = scmp.eq.s32.totalorder %s31, 0
      %p135 = por %p133, %p134
      %p136 = scmp.ne.s32.totalorder %s128, %s130
      %p137 = scmp.eq.s32.totalorder %s36, 1
      %p138 = por %p136, %p137
      %p139 = scmp.ne.s32.totalorder %s130, %s131
      %p140 = scmp.eq.s32.totalorder %s36, 0
      %p141 = por %p139, %p140
      %p142 = scmp.ne.s32.totalorder %s130, %s131
      %p143 = scmp.eq.s32.totalorder %s37, 1
      %p144 = por %p142, %p143
      %p146 = scmp.ne.s32.totalorder %s131, %s145
      %p147 = scmp.eq.s32.totalorder %s37, 0
      %p148 = por %p146, %p147
      %s150 = sadd.s32 %s149, 1
      %p153 = scmp.eq.s32.totalorder %s31, 1
      %p154 = scmp.ne.s32.totalorder %s149, %s151
      %p155 = scmp.eq.s32.totalorder %s31, 0
      %p156 = por %p154, %p155
      %p157 = scmp.ne.s32.totalorder %s149, %s151
      %p158 = scmp.eq.s32.totalorder %s36, 1
      %p159 = por %p157, %p158
      %p160 = scmp.ne.s32.totalorder %s151, %s152
      %p161 = scmp.eq.s32.totalorder %s36, 0
      %p162 = por %p160, %p161
      %p163 = scmp.ne.s32.totalorder %s151, %s152
      %p164 = scmp.eq.s32.totalorder %s37, 1
      %p165 = por %p163, %p164
      %p167 = scmp.ne.s32.totalorder %s152, %s166
      %p168 = scmp.eq.s32.totalorder %s37, 0
      %p169 = por %p167, %p168
      %s171 = sadd.s32 %s170, 1
      %p174 = scmp.eq.s32.totalorder %s31, 1
      %p175 = scmp.ne.s32.totalorder %s170, %s172
      %p176 = scmp.eq.s32.totalorder %s31, 0
      %p177 = por %p175, %p176
      %p178 = scmp.ne.s32.totalorder %s170, %s172
      %p179 = scmp.eq.s32.totalorder %s36, 1
      %p180 = por %p178, %p179
      %p181 = scmp.ne.s32.totalorder %s172, %s173
      %p182 = scmp.eq.s32.totalorder %s36, 0
      %p183 = por %p181, %p182
      %p184 = scmp.ne.s32.totalorder %s172, %s173
      %p185 = scmp.eq.s32.totalorder %s37, 1
      %p186 = por %p184, %p185
      %p188 = scmp.ne.s32.totalorder %s173, %s187
      %p189 = scmp.eq.s32.totalorder %s37, 0
      %p190 = por %p188, %p189
      %s192 = sadd.s32 %s191, 1
      %p195 = scmp.eq.s32.totalorder %s31, 1
      %p196 = scmp.ne.s32.totalorder %s191, %s193
      %p197 = scmp.eq.s32.totalorder %s31, 0
      %p198 = por %p196, %p197
      %p199 = scmp.ne.s32.totalorder %s191, %s193
      %p200 = scmp.eq.s32.totalorder %s36, 1
      %p201 = por %p199, %p200
      %p202 = scmp.ne.s32.totalorder %s193, %s194
      %p203 = scmp.eq.s32.totalorder %s36, 0
      %p204 = por %p202, %p203
      %p205 = scmp.ne.s32.totalorder %s193, %s194
      %p206 = scmp.eq.s32.totalorder %s37, 1
      %p207 = por %p205, %p206
      %p209 = scmp.ne.s32.totalorder %s194, %s208
      %p210 = scmp.eq.s32.totalorder %s37, 0
      %p211 = por %p209, %p210
      %s213 = sadd.s32 %s212, 1
      %p216 = scmp.eq.s32.totalorder %s31, 1
      %p217 = scmp.ne.s32.totalorder %s212, %s214
      %p218 = scmp.eq.s32.totalorder %s31, 0
      %p219 = por %p217, %p218
      %p220 = scmp.ne.s32.totalorder %s212, %s214
      %p221 = scmp.eq.s32.totalorder %s36, 1
      %p222 = por %p220, %p221
      %p223 = scmp.ne.s32.totalorder %s214, %s215
      %p224 = scmp.eq.s32.totalorder %s36, 0
      %p225 = por %p223, %p224
      %p226 = scmp.ne.s32.totalorder %s214, %s215
      %p227 = scmp.eq.s32.totalorder %s37, 1
      %p228 = por %p226, %p227
      %p230 = scmp.ne.s32.totalorder %s215, %s229
      %p231 = scmp.eq.s32.totalorder %s37, 0
      %p232 = por %p230, %p231
      %s234 = sadd.s32 %s233, 1
      %p237 = scmp.eq.s32.totalorder %s31, 1
      %p238 = scmp.ne.s32.totalorder %s233, %s235
      %p239 = scmp.eq.s32.totalorder %s31, 0
      %p240 = por %p238, %p239
      %p241 = scmp.ne.s32.totalorder %s233, %s235
      %p242 = scmp.eq.s32.totalorder %s36, 1
      %p243 = por %p241, %p242
      %p244 = scmp.ne.s32.totalorder %s235, %s236
      %p245 = scmp.eq.s32.totalorder %s36, 0
      %p246 = por %p244, %p245
      %p247 = scmp.ne.s32.totalorder %s235, %s236
      %p248 = scmp.eq.s32.totalorder %s37, 1
      %p249 = por %p247, %p248
      %p251 = scmp.ne.s32.totalorder %s236, %s250
      %p252 = scmp.eq.s32.totalorder %s37, 0
      %p253 = por %p251, %p252
      %s255 = sadd.s32 %s254, 1
      %p258 = scmp.eq.s32.totalorder %s31, 1
      %p259 = scmp.ne.s32.totalorder %s254, %s256
      %p260 = scmp.eq.s32.totalorder %s31, 0
      %p261 = por %p259, %p260
      %p262 = scmp.ne.s32.totalorder %s254, %s256
      %p263 = scmp.eq.s32.totalorder %s36, 1
      %p264 = por %p262, %p263
      %p265 = scmp.ne.s32.totalorder %s256, %s257
      %p266 = scmp.eq.s32.totalorder %s36, 0
      %p267 = por %p265, %p266
      %p268 = scmp.ne.s32.totalorder %s256, %s257
      %p269 = scmp.eq.s32.totalorder %s37, 1
      %p270 = por %p268, %p269
      %p272 = scmp.ne.s32.totalorder %s257, %s271
      %p273 = scmp.eq.s32.totalorder %s37, 0
      %p274 = por %p272, %p273
      %s276 = sadd.s32 %s275, 1
      %p279 = scmp.eq.s32.totalorder %s31, 1
      %p280 = scmp.ne.s32.totalorder %s275, %s277
      %p281 = scmp.eq.s32.totalorder %s31, 0
      %p282 = por %p280, %p281
      %p283 = scmp.ne.s32.totalorder %s275, %s277
      %p284 = scmp.eq.s32.totalorder %s36, 1
      %p285 = por %p283, %p284
      %p286 = scmp.ne.s32.totalorder %s277, %s278
      %p287 = scmp.eq.s32.totalorder %s36, 0
      %p288 = por %p286, %p287
      %p289 = scmp.ne.s32.totalorder %s277, %s278
      %p290 = scmp.eq.s32.totalorder %s37, 1
      %p291 = por %p289, %p290
      %p293 = scmp.ne.s32.totalorder %s278, %s292
      %p294 = scmp.eq.s32.totalorder %s37, 0
      %p295 = por %p293, %p294
      %s297 = sadd.s32 %s296, 1
      %p300 = scmp.eq.s32.totalorder %s31, 1
      %p301 = scmp.ne.s32.totalorder %s296, %s298
      %p302 = scmp.eq.s32.totalorder %s31, 0
      %p303 = por %p301, %p302
      %p304 = scmp.ne.s32.totalorder %s296, %s298
      %p305 = scmp.eq.s32.totalorder %s36, 1
      %p306 = por %p304, %p305
      %p307 = scmp.ne.s32.totalorder %s298, %s299
      %p308 = scmp.eq.s32.totalorder %s36, 0
      %p309 = por %p307, %p308
      %p310 = scmp.ne.s32.totalorder %s298, %s299
      %p311 = scmp.eq.s32.totalorder %s37, 1
      %p312 = por %p310, %p311
      %p314 = scmp.ne.s32.totalorder %s299, %s313
      %p315 = scmp.eq.s32.totalorder %s37, 0
      %p316 = por %p314, %p315
      %s317 = ssub.s32 %s31, %s38
      %p318 = scmp.eq.s32.totalorder %s317, 0
      %s320 = sadd.s32 %s319, 1
      %s321 = scalar_select %p318, %s319, %s320
      %p324 = pneg %p318
      %p325 = scmp.eq.s32.totalorder %s31, 1
      %p326 = por %p324, %p325
      %p327 = scmp.ne.s32.totalorder %s319, %s322
      %p328 = scmp.eq.s32.totalorder %s31, 0
      %p329 = por %p327, %p328
      %p330 = scmp.ne.s32.totalorder %s319, %s322
      %p331 = scmp.eq.s32.totalorder %s36, 1
      %p332 = por %p330, %p331
      %p333 = scmp.ne.s32.totalorder %s322, %s323
      %p334 = scmp.eq.s32.totalorder %s36, 0
      %p335 = por %p333, %p334
      %p336 = scmp.ne.s32.totalorder %s322, %s323
      %p337 = scmp.eq.s32.totalorder %s37, 1
      %p338 = por %p336, %p337
      %p340 = scmp.ne.s32.totalorder %s323, %s339
      %p341 = scmp.eq.s32.totalorder %s37, 0
      %p342 = por %p340, %p341
      %p343 = scmp.le.s32.totalorder 1, %s31
      %p344 = scmp.lt.s32.totalorder %s31, 3
      %p345 = pnand %p343, %p344
      %p346 = pneg %p345
      // Predicated region
      $region9: #{tpu_custom_call.1} parent=5 // pred_check
        _
      $region10: #{tpu_custom_call.1} parent=5 // pred_check_branch
        %348 = sbr.rel (%p345) target = $region12
      $region11: #{tpu_custom_call.1} parent=5 // pred_region
        %s349 = ssub.s32 %s31, 1
        // Predicated region
        $region13: #{tpu_custom_call.1} parent=11 // pred_check
          %p350 = pneg %p78
        $region14: #{tpu_custom_call.1} parent=11 // pred_check_branch
          %352 = sbr.rel (%p350) target = $region16
        $region15: #{tpu_custom_call.1} parent=11 // pred_region
          %s354 = ssub.s32 16, 16
          %355 = vsyncadd [#allocation6], %s354
          %s357 = sshll.u32 [#allocation5], 4
          %s358 = int_to_ptr.vmem [resolvable:$true] %s357
          %360 = dma.hbm_to_vmem [thread:$0]  %s1, 16, %s358, [#allocation6]
        $region16: #{tpu_custom_call.1} parent=11 // pred_fallthru
          _
        // Predicated region
        $region17: #{tpu_custom_call.1} parent=11 // pred_check
          %p361 = pneg %p99
        $region18: #{tpu_custom_call.1} parent=11 // pred_check_branch
          %363 = sbr.rel (%p361) target = $region20
        $region19: #{tpu_custom_call.1} parent=11 // pred_region
          %s365 = ssub.s32 16, 16
          %366 = vsyncadd [#allocation6], %s365
          %s368 = sshll.u32 [#allocation7], 4
          %s369 = int_to_ptr.vmem [resolvable:$true] %s368
          %371 = dma.hbm_to_vmem [thread:$0]  %s2, 16, %s369, [#allocation6]
        $region20: #{tpu_custom_call.1} parent=11 // pred_fallthru
          _
        // Predicated region
        $region21: #{tpu_custom_call.1} parent=11 // pred_check
          %p372 = pneg %p120
        $region22: #{tpu_custom_call.1} parent=11 // pred_check_branch
          %374 = sbr.rel (%p372) target = $region24
        $region23: #{tpu_custom_call.1} parent=11 // pred_region
          %s376 = ssub.s32 256, 256
          %377 = vsyncadd [#allocation9], %s376
          %s378 = sshll.u32 [#allocation8], 4
          %s379 = int_to_ptr.vmem [resolvable:$true] %s378
          %384 = dma.hbm_to_vmem [thread:$0]  %s3, 256, %s379, [#allocation9], 64, 64, 4
        $region24: #{tpu_custom_call.1} parent=11 // pred_fallthru
          _
        // Predicated region
        $region25: #{tpu_custom_call.1} parent=11 // pred_check
          %p385 = pneg %p141
        $region26: #{tpu_custom_call.1} parent=11 // pred_check_branch
          %387 = sbr.rel (%p385) target = $region28
        $region27: #{tpu_custom_call.1} parent=11 // pred_region
          %s389 = ssub.s32 16, 16
          %390 = vsyncadd [#allocation9], %s389
          %s392 = sshll.u32 [#allocation10], 4
          %s393 = int_to_ptr.vmem [resolvable:$true] %s392
          %395 = dma.hbm_to_vmem [thread:$0]  %s4, 16, %s393, [#allocation9]
        $region28: #{tpu_custom_call.1} parent=11 // pred_fallthru
          _
        // Predicated region
        $region29: #{tpu_custom_call.1} parent=11 // pred_check
          %p396 = pneg %p162
        $region30: #{tpu_custom_call.1} parent=11 // pred_check_branch
          %398 = sbr.rel (%p396) target = $region32
        $region31: #{tpu_custom_call.1} parent=11 // pred_region
          %s400 = ssub.s32 256, 256
          %401 = vsyncadd [#allocation12], %s400
          %s402 = sshll.u32 [#allocation11], 4
          %s403 = int_to_ptr.vmem [resolvable:$true] %s402
          %408 = dma.hbm_to_vmem [thread:$0]  %s5, 256, %s403, [#allocation12], 64, 64, 4
        $region32: #{tpu_custom_call.1} parent=11 // pred_fallthru
          _
        // Predicated region
        $region33: #{tpu_custom_call.1} parent=11 // pred_check
          %p409 = pneg %p183
        $region34: #{tpu_custom_call.1} parent=11 // pred_check_branch
          %411 = sbr.rel (%p409) target = $region36
        $region35: #{tpu_custom_call.1} parent=11 // pred_region
          %s413 = ssub.s32 16, 16
          %414 = vsyncadd [#allocation12], %s413
          %s416 = sshll.u32 [#allocation13], 4
          %s417 = int_to_ptr.vmem [resolvable:$true] %s416
          %419 = dma.hbm_to_vmem [thread:$0]  %s6, 16, %s417, [#allocation12]
        $region36: #{tpu_custom_call.1} parent=11 // pred_fallthru
          _
        // Predicated region
        $region37: #{tpu_custom_call.1} parent=11 // pred_check
          %p420 = pneg %p204
        $region38: #{tpu_custom_call.1} parent=11 // pred_check_branch
          %422 = sbr.rel (%p420) target = $region40
        $region39: #{tpu_custom_call.1} parent=11 // pred_region
          %s424 = ssub.s32 16, 16
          %425 = vsyncadd [#allocation15], %s424
          %s427 = sshll.u32 [#allocation14], 4
          %s428 = int_to_ptr.vmem [resolvable:$true] %s427
          %430 = dma.hbm_to_vmem [thread:$0]  %s7, 16, %s428, [#allocation15]
        $region40: #{tpu_custom_call.1} parent=11 // pred_fallthru
          _
        // Predicated region
        $region41: #{tpu_custom_call.1} parent=11 // pred_check
          %p431 = pneg %p225
        $region42: #{tpu_custom_call.1} parent=11 // pred_check_branch
          %433 = sbr.rel (%p431) target = $region44
        $region43: #{tpu_custom_call.1} parent=11 // pred_region
          %s435 = ssub.s32 16, 16
          %436 = vsyncadd [#allocation15], %s435
          %s438 = sshll.u32 [#allocation16], 4
          %s439 = int_to_ptr.vmem [resolvable:$true] %s438
          %441 = dma.hbm_to_vmem [thread:$0]  %s8, 16, %s439, [#allocation15]
        $region44: #{tpu_custom_call.1} parent=11 // pred_fallthru
          _
        // Predicated region
        $region45: #{tpu_custom_call.1} parent=11 // pred_check
          %p442 = pneg %p246
        $region46: #{tpu_custom_call.1} parent=11 // pred_check_branch
          %444 = sbr.rel (%p442) target = $region48
        $region47: #{tpu_custom_call.1} parent=11 // pred_region
          %s446 = ssub.s32 256, 256
          %447 = vsyncadd [#allocation18], %s446
          %s448 = sshll.u32 [#allocation17], 4
          %s449 = int_to_ptr.vmem [resolvable:$true] %s448
          %454 = dma.hbm_to_vmem [thread:$0]  %s9, 256, %s449, [#allocation18], 64, 64, 4
        $region48: #{tpu_custom_call.1} parent=11 // pred_fallthru
          _
        // Predicated region
        $region49: #{tpu_custom_call.1} parent=11 // pred_check
          %p455 = pneg %p267
        $region50: #{tpu_custom_call.1} parent=11 // pred_check_branch
          %457 = sbr.rel (%p455) target = $region52
        $region51: #{tpu_custom_call.1} parent=11 // pred_region
          %s459 = ssub.s32 16, 16
          %460 = vsyncadd [#allocation18], %s459
          %s462 = sshll.u32 [#allocation19], 4
          %s463 = int_to_ptr.vmem [resolvable:$true] %s462
          %465 = dma.hbm_to_vmem [thread:$0]  %s10, 16, %s463, [#allocation18]
        $region52: #{tpu_custom_call.1} parent=11 // pred_fallthru
          _
        // Predicated region
        $region53: #{tpu_custom_call.1} parent=11 // pred_check
          %p466 = pneg %p288
        $region54: #{tpu_custom_call.1} parent=11 // pred_check_branch
          %468 = sbr.rel (%p466) target = $region56
        $region55: #{tpu_custom_call.1} parent=11 // pred_region
          %s470 = ssub.s32 1024, 1024
          %471 = vsyncadd [#allocation21], %s470
          %s472 = sshll.u32 [#allocation20], 4
          %s473 = int_to_ptr.vmem [resolvable:$true] %s472
          %478 = dma.hbm_to_vmem [thread:$0]  %s11, 1024, %s473, [#allocation21], 64, 64, 4
        $region56: #{tpu_custom_call.1} parent=11 // pred_fallthru
          _
        // Predicated region
        $region57: #{tpu_custom_call.1} parent=11 // pred_check
          %p479 = pneg %p309
        $region58: #{tpu_custom_call.1} parent=11 // pred_check_branch
          %481 = sbr.rel (%p479) target = $region60
        $region59: #{tpu_custom_call.1} parent=11 // pred_region
          %s483 = ssub.s32 16, 16
          %484 = vsyncadd [#allocation21], %s483
          %s486 = sshll.u32 [#allocation22], 4
          %s487 = int_to_ptr.vmem [resolvable:$true] %s486
          %489 = dma.hbm_to_vmem [thread:$0]  %s12, 16, %s487, [#allocation21]
        $region60: #{tpu_custom_call.1} parent=11 // pred_fallthru
          _
      $region12: #{tpu_custom_call.1} parent=5 // pred_fallthru
        _
      %p490 = scmp.lt.s32.totalorder %s31, 2
      // Predicated region
      $region61: #{tpu_custom_call.1} parent=5 // pred_check
        %p491 = pneg %p490
      $region62: #{tpu_custom_call.1} parent=5 // pred_check_branch
        %493 = sbr.rel (%p491) target = $region64
      $region63: #{tpu_custom_call.1} parent=5 // pred_region
        // Predicated region
        $region65: #{tpu_custom_call.1} parent=63 // pred_check
          %p494 = pneg %p51
        $region66: #{tpu_custom_call.1} parent=63 // pred_check_branch
          %496 = sbr.rel (%p494) target = $region68
        $region67: #{tpu_custom_call.1} parent=63 // pred_region
          %s497 = sand.u32 %s41, 1
          %s498 = scalar_lea.sflag [#allocation3], %s497
          %s499 = sand.u32 %s41, 1
          %s500 = smul.addr %s499, 16
          %s501 = scalar_lea.vmem [#allocation2], %s500
          %s502 = smul.u32 2, %s31
          %s504 = ssub.s32 256, 256
          %505 = vsyncadd %s498, %s504
          %s506 = smul.addr %s502, 128
          %s507 = scalar_lea.hbm %s0, %s506
          %s508 = sshll.u32 %s501, 4
          %s509 = int_to_ptr.vmem [resolvable:$true] %s508
          %514 = dma.hbm_to_vmem [thread:$0]  %s507, 256, %s509, %s498, 128, 128, 8
        $region68: #{tpu_custom_call.1} parent=63 // pred_fallthru
          _
      $region64: #{tpu_custom_call.1} parent=5 // pred_fallthru
        _
      %p515 = scmp.le.s32.totalorder 1, %s31
      %p516 = scmp.lt.s32.totalorder %s31, 3
      %p517 = pnand %p515, %p516
      %p518 = pneg %p517
      // Predicated region
      $region69: #{tpu_custom_call.1} parent=5 // pred_check
        _
      $region70: #{tpu_custom_call.1} parent=5 // pred_check_branch
        %520 = sbr.rel (%p517) target = $region72
      $region71: #{tpu_custom_call.1} parent=5 // pred_region
        %s521 = ssub.s32 %s31, 1
        %s522 = sand.u32 %s44, 1
        %s523 = scalar_lea.sflag [#allocation3], %s522
        %s524 = sand.u32 %s44, 1
        %s525 = smul.addr %s524, 16
        %s526 = scalar_lea.vmem [#allocation2], %s525
        // Predicated region
        $region73: #{tpu_custom_call.1} parent=71 // pred_check
          %p527 = pneg %p57
        $region74: #{tpu_custom_call.1} parent=71 // pred_check_branch
          %529 = sbr.rel (%p527) target = $region76
        $region75: #{tpu_custom_call.1} parent=71 // pred_region
          %530 = dma.done %s523, 256
        $region76: #{tpu_custom_call.1} parent=71 // pred_fallthru
          _
        // Predicated region
        $region77: #{tpu_custom_call.1} parent=71 // pred_check
          %p531 = pneg %p78
        $region78: #{tpu_custom_call.1} parent=71 // pred_check_branch
          %533 = sbr.rel (%p531) target = $region80
        $region79: #{tpu_custom_call.1} parent=71 // pred_region
          %534 = dma.done [#allocation6], 16
        $region80: #{tpu_custom_call.1} parent=71 // pred_fallthru
          _
        // Predicated region
        $region81: #{tpu_custom_call.1} parent=71 // pred_check
          %p535 = pneg %p99
        $region82: #{tpu_custom_call.1} parent=71 // pred_check_branch
          %537 = sbr.rel (%p535) target = $region84
        $region83: #{tpu_custom_call.1} parent=71 // pred_region
          %538 = dma.done [#allocation6], 16
        $region84: #{tpu_custom_call.1} parent=71 // pred_fallthru
          _
        // Predicated region
        $region85: #{tpu_custom_call.1} parent=71 // pred_check
          %p539 = pneg %p120
        $region86: #{tpu_custom_call.1} parent=71 // pred_check_branch
          %541 = sbr.rel (%p539) target = $region88
        $region87: #{tpu_custom_call.1} parent=71 // pred_region
          %542 = dma.done [#allocation9], 256
        $region88: #{tpu_custom_call.1} parent=71 // pred_fallthru
          _
        // Predicated region
        $region89: #{tpu_custom_call.1} parent=71 // pred_check
          %p543 = pneg %p141
        $region90: #{tpu_custom_call.1} parent=71 // pred_check_branch
          %545 = sbr.rel (%p543) target = $region92
        $region91: #{tpu_custom_call.1} parent=71 // pred_region
          %546 = dma.done [#allocation9], 16
        $region92: #{tpu_custom_call.1} parent=71 // pred_fallthru
          _
        // Predicated region
        $region93: #{tpu_custom_call.1} parent=71 // pred_check
          %p547 = pneg %p162
        $region94: #{tpu_custom_call.1} parent=71 // pred_check_branch
          %549 = sbr.rel (%p547) target = $region96
        $region95: #{tpu_custom_call.1} parent=71 // pred_region
          %550 = dma.done [#allocation12], 256
        $region96: #{tpu_custom_call.1} parent=71 // pred_fallthru
          _
        // Predicated region
        $region97: #{tpu_custom_call.1} parent=71 // pred_check
          %p551 = pneg %p183
        $region98: #{tpu_custom_call.1} parent=71 // pred_check_branch
          %553 = sbr.rel (%p551) target = $region100
        $region99: #{tpu_custom_call.1} parent=71 // pred_region
          %554 = dma.done [#allocation12], 16
        $region100: #{tpu_custom_call.1} parent=71 // pred_fallthru
          _
        // Predicated region
        $region101: #{tpu_custom_call.1} parent=71 // pred_check
          %p555 = pneg %p204
        $region102: #{tpu_custom_call.1} parent=71 // pred_check_branch
          %557 = sbr.rel (%p555) target = $region104
        $region103: #{tpu_custom_call.1} parent=71 // pred_region
          %558 = dma.done [#allocation15], 16
        $region104: #{tpu_custom_call.1} parent=71 // pred_fallthru
          _
        // Predicated region
        $region105: #{tpu_custom_call.1} parent=71 // pred_check
          %p559 = pneg %p225
        $region106: #{tpu_custom_call.1} parent=71 // pred_check_branch
          %561 = sbr.rel (%p559) target = $region108
        $region107: #{tpu_custom_call.1} parent=71 // pred_region
          %562 = dma.done [#allocation15], 16
        $region108: #{tpu_custom_call.1} parent=71 // pred_fallthru
          _
        // Predicated region
        $region109: #{tpu_custom_call.1} parent=71 // pred_check
          %p563 = pneg %p246
        $region110: #{tpu_custom_call.1} parent=71 // pred_check_branch
          %565 = sbr.rel (%p563) target = $region112
        $region111: #{tpu_custom_call.1} parent=71 // pred_region
          %566 = dma.done [#allocation18], 256
        $region112: #{tpu_custom_call.1} parent=71 // pred_fallthru
          _
        // Predicated region
        $region113: #{tpu_custom_call.1} parent=71 // pred_check
          %p567 = pneg %p267
        $region114: #{tpu_custom_call.1} parent=71 // pred_check_branch
          %569 = sbr.rel (%p567) target = $region116
        $region115: #{tpu_custom_call.1} parent=71 // pred_region
          %570 = dma.done [#allocation18], 16
        $region116: #{tpu_custom_call.1} parent=71 // pred_fallthru
          _
        // Predicated region
        $region117: #{tpu_custom_call.1} parent=71 // pred_check
          %p571 = pneg %p288
        $region118: #{tpu_custom_call.1} parent=71 // pred_check_branch
          %573 = sbr.rel (%p571) target = $region120
        $region119: #{tpu_custom_call.1} parent=71 // pred_region
          %574 = dma.done [#allocation21], 1024
        $region120: #{tpu_custom_call.1} parent=71 // pred_fallthru
          _
        // Predicated region
        $region121: #{tpu_custom_call.1} parent=71 // pred_check
          %p575 = pneg %p309
        $region122: #{tpu_custom_call.1} parent=71 // pred_check_branch
          %577 = sbr.rel (%p575) target = $region124
        $region123: #{tpu_custom_call.1} parent=71 // pred_region
          %578 = dma.done [#allocation21], 16
        $region124: #{tpu_custom_call.1} parent=71 // pred_fallthru
          _
        %s579 = sand.u32 %s44, 1
        %s580 = scalar_lea.sflag [#allocation3], %s579
        %s581 = sand.u32 %s44, 1
        %s582 = smul.addr %s581, 16
        %s583 = scalar_lea.vmem [#allocation2], %s582
        %p584 = pneg %p57
        %p585 = pneg %p54
        %p586 = pneg %p78
        %p587 = pneg %p75
        %p588 = pneg %p99
        %p589 = pneg %p96
        %p590 = pneg %p120
        %p591 = pneg %p117
        %p592 = pneg %p141
        %p593 = pneg %p138
        %p594 = pneg %p162
        %p595 = pneg %p159
        %p596 = pneg %p183
        %p597 = pneg %p180
        %p598 = pneg %p204
        %p599 = pneg %p201
        %p600 = pneg %p225
        %p601 = pneg %p222
        %p602 = pneg %p246
        %p603 = pneg %p243
        %p604 = pneg %p267
        %p605 = pneg %p264
        %p606 = pneg %p288
        %p607 = pneg %p285
        %p608 = pneg %p309
        %p609 = pneg %p306
        %p610 = pneg %p335
        %p611 = pneg %p332
        %s612 = sand.u32 %s322, 1
        %s613 = scalar_lea.sflag [#allocation4], %s612
        %s614 = sand.u32 %s322, 1
        %s615 = smul.addr %s614, 16
        %s616 = scalar_lea.vmem [#allocation23], %s615
        %s617 = smul.u32 2, %s36
        %s618 = smul.u32 2, %s36
        %v620 = vld [vmem:[%s526] sm:$0xff]
        %v621 = vld [vmem:[%s526 + $0x8] sm:$0xff]
        %v622 = vld [vmem:[#allocation5] sm:$0x1]
        %v623 = vld [vmem:[#allocation7] sm:$0x1]
        %vm624 = vcmask 261120
        %v625 = vsel %vm624, %v620, 0.0
        %626 = vadd.xlane.f32.xlu0 %v625
        %v627 = vpop.xlane.xlu0 %626
        %v628 = vsel %vm624, %v621, 0.0
        %629 = vadd.xlane.f32.xlu0 %v628
        %v630 = vpop.xlane.xlu0 %629
        %v631 = vrcp.pop 32.0
        %v632 = vmul.f32 %v627, %v631
        %v633 = vmul.f32 %v630, %v631
        %v634 = vsub.f32 %v620, %v632
        %v635 = vsub.f32 %v621, %v633
        %v636 = vmul.f32 %v634, %v634
        %v637 = vmul.f32 %v635, %v635
        %v638 = vsel %vm624, %v636, 0.0
        %639 = vadd.xlane.f32.xlu0 %v638
        %v640 = vpop.xlane.xlu0 %639
        %v641 = vsel %vm624, %v637, 0.0
        %642 = vadd.xlane.f32.xlu0 %v641
        %v643 = vpop.xlane.xlu0 %642
        %v644 = vmul.f32 %v640, %v631
        %v645 = vmul.f32 %v643, %v631
        %v646 = vadd.f32 %v644, 1e-05
        %v647 = vadd.f32 %v645, 1e-05
        %v648 = vrsqrt.pop %v646
        %v649 = vrsqrt.pop %v647
        %v650 = vmul.f32 %v634, %v648
        %v651 = vmul.f32 %v635, %v649
        %v653 = vlaneseq
        %v654 = vshrl.u32 %v653, 7
        %v655 = vsub.s32 0, %v654
        %v656 = vrot.slane %v622, %v655
        %v658 = vmul.f32 %v650, %v656
        %v659 = vmul.f32 %v651, %v656
        %v661 = vlaneseq
        %v662 = vshrl.u32 %v661, 7
        %v663 = vsub.s32 0, %v662
        %v664 = vrot.slane %v623, %v663
        %v666 = vadd.f32 %v658, %v664
        %v667 = vadd.f32 %v659, %v664
        %v668 = vpack.c.bf16 %v667, %v666
        %v669 = vld [vmem:[#allocation8] sm:$0xf]
        %v670 = vld [vmem:[#allocation8 + $0x4] sm:$0xf]
        %v671 = vld [vmem:[#allocation8 + $0x8] sm:$0xf]
        %v672 = vld [vmem:[#allocation8 + $0xc] sm:$0xf]
        %v673 = vld [vmem:[#allocation10] sm:$0x1]
        %v675 = vlaneseq
        %v676 = vshrl.u32 %v675, 7
        %v677 = vsub.s32 0, %v676
        %v678 = vrot.slane %v673, %v677
        %v684 = vunpack.c.l.b16 %v669
        %v685 = vunpack.c.l.b16 %v670
        %v686 = vunpack.c.l.b16 %v671
        %v687 = vunpack.c.l.b16 %v672
        %v688 = vpack.c.b16 %v685, %v684
        %v689 = vpack.c.b16 %v687, %v686
        %v693 = vsel %vm624, %v668, 0
        %695 = vmatprep.subr.bf16.mxu0 0
        %696 = vmatpush1.bf16.msra.mxu0 %v688
        %697 = vmatprep.subr.bf16.mxu0 0
        %698 = vmatpush1.bf16.msra.mxu0 %v689
        %699 = vmatprep.subr.bf16.mxu0 0
        %700 = vmatpush1.bf16.msra.mxu0 0
        %701 = vmatprep.subr.bf16.mxu0 0
        %702 = vmatpush1.bf16.msra.mxu0 0
        %703 = vmatprep.subr.bf16.mxu0 0
        %704 = vmatpush1.bf16.msra.mxu0 0
        %705 = vmatprep.subr.bf16.mxu0 0
        %706 = vmatpush1.bf16.msra.mxu0 0
        %707 = vmatprep.subr.bf16.mxu0 0
        %708 = vmatpush1.bf16.msra.mxu0 0
        %709 = vmatprep.subr.bf16.mxu0 0
        %710 = vmatpush1.bf16.msra.mxu0 0
        %711 = vmatprep.subr.bf16.mxu0 0
        %712 = vmatpush1.bf16.msra.mxu0 0
        %713 = vmatprep.subr.bf16.mxu0 0
        %714 = vmatpush1.bf16.msra.mxu0 0
        %715 = vmatprep.subr.bf16.mxu0 0
        %716 = vmatpush1.bf16.msra.mxu0 0
        %717 = vmatprep.subr.bf16.mxu0 0
        %718 = vmatpush1.bf16.msra.mxu0 0
        %719 = vmatprep.subr.bf16.mxu0 0
        %720 = vmatpush1.bf16.msra.mxu0 0
        %721 = vmatprep.subr.bf16.mxu0 0
        %722 = vmatpush1.bf16.msra.mxu0 0
        %723 = vmatprep.subr.bf16.mxu0 0
        %724 = vmatpush1.bf16.msra.mxu0 0
        %725 = vmatprep.subr.bf16.mxu0 0
        %726 = vmatpush1.bf16.msra.mxu0 0
        %727 = vmatprep.mubr.bf16.mxu0 0
        %728 = vmatmul.mubr.bf16.gmra.mrb[0].mxu0 %v693
        %v729 = vpop.f32.mrb[0].mxu0
        %v730 = vadd.f32 %v678, %v729
        %v731 = vpop.f32.mrb[0].mxu0
        %v732 = vpop.f32.mrb[0].mxu0
        %v733 = vadd.f32 %v678, %v732
        %v734 = vpop.f32.mrb[0].mxu0
        %735 = vdwg.mxu0
        %v736 = vpack.c.bf16 %v730, %v730
        %v737 = vpack.c.bf16 %v733, %v733
        %739 = vrot.lane.b32.xlu0 %v736, 96
        %v740 = vpop.permute.xlu0 %739
        %vm741 = vcmask 64512
        %v743 = vsel %vm741, %v736, 0
        %v746 = vsel %vm741, %v740, 0
        %748 = vmatprep.subr.bf16.mxu0 0
        %749 = vmatpush1.bf16.xpose.msra.mxu0 %v746
        %750 = vmatprep.subr.bf16.mxu0 0
        %751 = vmatpush1.bf16.xpose.msra.mxu0 0
        %752 = vmatprep.subr.bf16.mxu0 0
        %753 = vmatpush1.bf16.xpose.msra.mxu0 0
        %754 = vmatprep.subr.bf16.mxu0 0
        %755 = vmatpush1.bf16.xpose.msra.mxu0 0
        %756 = vmatprep.subr.bf16.mxu0 0
        %757 = vmatpush1.bf16.xpose.msra.mxu0 0
        %758 = vmatprep.subr.bf16.mxu0 0
        %759 = vmatpush1.bf16.xpose.msra.mxu0 0
        %760 = vmatprep.subr.bf16.mxu0 0
        %761 = vmatpush1.bf16.xpose.msra.mxu0 0
        %762 = vmatprep.subr.bf16.mxu0 0
        %763 = vmatpush1.bf16.xpose.msra.mxu0 0
        %764 = vmatprep.subr.bf16.mxu0 0
        %765 = vmatpush1.bf16.xpose.msra.mxu0 0
        %766 = vmatprep.subr.bf16.mxu0 0
        %767 = vmatpush1.bf16.xpose.msra.mxu0 0
        %768 = vmatprep.subr.bf16.mxu0 0
        %769 = vmatpush1.bf16.xpose.msra.mxu0 0
        %770 = vmatprep.subr.bf16.mxu0 0
        %771 = vmatpush1.bf16.xpose.msra.mxu0 0
        %772 = vmatprep.subr.bf16.mxu0 0
        %773 = vmatpush1.bf16.xpose.msra.mxu0 0
        %774 = vmatprep.subr.bf16.mxu0 0
        %775 = vmatpush1.bf16.xpose.msra.mxu0 0
        %776 = vmatprep.subr.bf16.mxu0 0
        %777 = vmatpush1.bf16.xpose.msra.mxu0 0
        %778 = vmatprep.subr.bf16.mxu0 0
        %779 = vmatpush1.bf16.xpose.msra.mxu0 0
        %780 = vmatprep.mubr.bf16.mxu0 0
        %781 = vmatmul.mubr.bf16.gmra.mrb[0].mxu0 %v743
        %v782 = vpop.f32.mrb[0].mxu0
        %v783 = vadd.f32 0.0, %v782
        %v784 = vpop.f32.mrb[0].mxu0
        %v785 = vpop.f32.mrb[0].mxu0
        %v786 = vpop.f32.mrb[0].mxu0
        %787 = vdwg.mxu0
        %789 = vrot.lane.b32.xlu0 %v737, 96
        %v790 = vpop.permute.xlu0 %789
        %v792 = vsel %vm741, %v737, 0
        %v795 = vsel %vm741, %v790, 0
        %797 = vmatprep.subr.bf16.mxu0 0
        %798 = vmatpush1.bf16.xpose.msra.mxu0 %v795
        %799 = vmatprep.subr.bf16.mxu0 0
        %800 = vmatpush1.bf16.xpose.msra.mxu0 0
        %801 = vmatprep.subr.bf16.mxu0 0
        %802 = vmatpush1.bf16.xpose.msra.mxu0 0
        %803 = vmatprep.subr.bf16.mxu0 0
        %804 = vmatpush1.bf16.xpose.msra.mxu0 0
        %805 = vmatprep.subr.bf16.mxu0 0
        %806 = vmatpush1.bf16.xpose.msra.mxu0 0
        %807 = vmatprep.subr.bf16.mxu0 0
        %808 = vmatpush1.bf16.xpose.msra.mxu0 0
        %809 = vmatprep.subr.bf16.mxu0 0
        %810 = vmatpush1.bf16.xpose.msra.mxu0 0
        %811 = vmatprep.subr.bf16.mxu0 0
        %812 = vmatpush1.bf16.xpose.msra.mxu0 0
        %813 = vmatprep.subr.bf16.mxu0 0
        %814 = vmatpush1.bf16.xpose.msra.mxu0 0
        %815 = vmatprep.subr.bf16.mxu0 0
        %816 = vmatpush1.bf16.xpose.msra.mxu0 0
        %817 = vmatprep.subr.bf16.mxu0 0
        %818 = vmatpush1.bf16.xpose.msra.mxu0 0
        %819 = vmatprep.subr.bf16.mxu0 0
        %820 = vmatpush1.bf16.xpose.msra.mxu0 0
        %821 = vmatprep.subr.bf16.mxu0 0
        %822 = vmatpush1.bf16.xpose.msra.mxu0 0
        %823 = vmatprep.subr.bf16.mxu0 0
        %824 = vmatpush1.bf16.xpose.msra.mxu0 0
        %825 = vmatprep.subr.bf16.mxu0 0
        %826 = vmatpush1.bf16.xpose.msra.mxu0 0
        %827 = vmatprep.subr.bf16.mxu0 0
        %828 = vmatpush1.bf16.xpose.msra.mxu0 0
        %829 = vmatprep.mubr.bf16.mxu0 0
        %830 = vmatmul.mubr.bf16.gmra.mrb[0].mxu0 %v792
        %v831 = vpop.f32.mrb[0].mxu0
        %v832 = vadd.f32 0.0, %v831
        %v833 = vpop.f32.mrb[0].mxu0
        %v834 = vpop.f32.mrb[0].mxu0
        %v835 = vpop.f32.mrb[0].mxu0
        %836 = vdwg.mxu0
        %v837 = vmul.f32 %v783, 0.35355338
        %v838 = vmul.f32 %v832, 0.35355338
        %v839 = vsel %vm741, %v837, -inf
        %840 = vmax.xlane.f32.xlu0 %v839
        %v841 = vpop.xlane.xlu0 %840
        %v842 = vsel %vm741, %v838, -inf
        %843 = vmax.xlane.f32.xlu0 %v842
        %v844 = vpop.xlane.xlu0 %843
        %v845 = vsub.f32 %v837, %v841
        %v846 = vsub.f32 %v838, %v844
        %v847 = vmul.f32 %v845, 1.442695
        %v848 = vpow.pop %v847
        %v849 = vmul.f32 %v846, 1.442695
        %v850 = vpow.pop %v849
        %v851 = vsel %vm741, %v848, 0.0
        %852 = vadd.xlane.f32.xlu0 %v851
        %v853 = vpop.xlane.xlu0 %852
        %v854 = vsel %vm741, %v850, 0.0
        %855 = vadd.xlane.f32.xlu0 %v854
        %v856 = vpop.xlane.xlu0 %855
        %v857 = vrcp.pop %v853
        %v858 = vrcp.pop %v856
        %v859 = vmul.f32 %v848, %v857
        %v860 = vmul.f32 %v850, %v858
        %v861 = vpack.c.bf16 %v859, %v859
        %v862 = vpack.c.bf16 %v860, %v860
        %863 = vrot.lane.b32.xlu0 %v736, 64
        %v864 = vpop.permute.xlu0 %863
        %v866 = vsel %vm741, %v861, 0
        %vm868 = vcmask 1043456
        %v870 = vsel %vm868, %v864, 0
        %872 = vmatprep.subr.bf16.mxu0 0
        %873 = vmatpush1.bf16.msra.mxu0 %v870
        %874 = vmatprep.subr.bf16.mxu0 0
        %875 = vmatpush1.bf16.msra.mxu0 0
        %876 = vmatprep.subr.bf16.mxu0 0
        %877 = vmatpush1.bf16.msra.mxu0 0
        %878 = vmatprep.subr.bf16.mxu0 0
        %879 = vmatpush1.bf16.msra.mxu0 0
        %880 = vmatprep.subr.bf16.mxu0 0
        %881 = vmatpush1.bf16.msra.mxu0 0
        %882 = vmatprep.subr.bf16.mxu0 0
        %883 = vmatpush1.bf16.msra.mxu0 0
        %884 = vmatprep.subr.bf16.mxu0 0
        %885 = vmatpush1.bf16.msra.mxu0 0
        %886 = vmatprep.subr.bf16.mxu0 0
        %887 = vmatpush1.bf16.msra.mxu0 0
        %888 = vmatprep.subr.bf16.mxu0 0
        %889 = vmatpush1.bf16.msra.mxu0 0
        %890 = vmatprep.subr.bf16.mxu0 0
        %891 = vmatpush1.bf16.msra.mxu0 0
        %892 = vmatprep.subr.bf16.mxu0 0
        %893 = vmatpush1.bf16.msra.mxu0 0
        %894 = vmatprep.subr.bf16.mxu0 0
        %895 = vmatpush1.bf16.msra.mxu0 0
        %896 = vmatprep.subr.bf16.mxu0 0
        %897 = vmatpush1.bf16.msra.mxu0 0
        %898 = vmatprep.subr.bf16.mxu0 0
        %899 = vmatpush1.bf16.msra.mxu0 0
        %900 = vmatprep.subr.bf16.mxu0 0
        %901 = vmatpush1.bf16.msra.mxu0 0
        %902 = vmatprep.subr.bf16.mxu0 0
        %903 = vmatpush1.bf16.msra.mxu0 0
        %904 = vmatprep.mubr.bf16.mxu0 0
        %905 = vmatmul.mubr.bf16.gmra.mrb[0].mxu0 %v866
        %v906 = vpop.f32.mrb[0].mxu0
        %v907 = vadd.f32 0.0, %v906
        %v908 = vpop.f32.mrb[0].mxu0
        %v909 = vpop.f32.mrb[0].mxu0
        %v910 = vpop.f32.mrb[0].mxu0
        %911 = vdwg.mxu0
        %912 = vrot.lane.b32.xlu0 %v737, 64
        %v913 = vpop.permute.xlu0 %912
        %v915 = vsel %vm741, %v862, 0
        %v918 = vsel %vm868, %v913, 0
        %920 = vmatprep.subr.bf16.mxu0 0
        %921 = vmatpush1.bf16.msra.mxu0 %v918
        %922 = vmatprep.subr.bf16.mxu0 0
        %923 = vmatpush1.bf16.msra.mxu0 0
        %924 = vmatprep.subr.bf16.mxu0 0
        %925 = vmatpush1.bf16.msra.mxu0 0
        %926 = vmatprep.subr.bf16.mxu0 0
        %927 = vmatpush1.bf16.msra.mxu0 0
        %928 = vmatprep.subr.bf16.mxu0 0
        %929 = vmatpush1.bf16.msra.mxu0 0
        %930 = vmatprep.subr.bf16.mxu0 0
        %931 = vmatpush1.bf16.msra.mxu0 0
        %932 = vmatprep.subr.bf16.mxu0 0
        %933 = vmatpush1.bf16.msra.mxu0 0
        %934 = vmatprep.subr.bf16.mxu0 0
        %935 = vmatpush1.bf16.msra.mxu0 0
        %936 = vmatprep.subr.bf16.mxu0 0
        %937 = vmatpush1.bf16.msra.mxu0 0
        %938 = vmatprep.subr.bf16.mxu0 0
        %939 = vmatpush1.bf16.msra.mxu0 0
        %940 = vmatprep.subr.bf16.mxu0 0
        %941 = vmatpush1.bf16.msra.mxu0 0
        %942 = vmatprep.subr.bf16.mxu0 0
        %943 = vmatpush1.bf16.msra.mxu0 0
        %944 = vmatprep.subr.bf16.mxu0 0
        %945 = vmatpush1.bf16.msra.mxu0 0
        %946 = vmatprep.subr.bf16.mxu0 0
        %947 = vmatpush1.bf16.msra.mxu0 0
        %948 = vmatprep.subr.bf16.mxu0 0
        %949 = vmatpush1.bf16.msra.mxu0 0
        %950 = vmatprep.subr.bf16.mxu0 0
        %951 = vmatpush1.bf16.msra.mxu0 0
        %952 = vmatprep.mubr.bf16.mxu0 0
        %953 = vmatmul.mubr.bf16.gmra.mrb[0].mxu0 %v915
        %v954 = vpop.f32.mrb[0].mxu0
        %v955 = vadd.f32 0.0, %v954
        %v956 = vpop.f32.mrb[0].mxu0
        %v957 = vpop.f32.mrb[0].mxu0
        %v958 = vpop.f32.mrb[0].mxu0
        %959 = vdwg.mxu0
        %960 = vrot.lane.b32.xlu0 %v736, 120
        %v961 = vpop.permute.xlu0 %960
        %962 = vrot.lane.b32.xlu0 %v736, 88
        %v963 = vpop.permute.xlu0 %962
        %v965 = vsel %vm741, %v961, 0
        %v968 = vsel %vm741, %v963, 0
        %970 = vmatprep.subr.bf16.mxu0 0
        %971 = vmatpush1.bf16.xpose.msra.mxu0 %v968
        %972 = vmatprep.subr.bf16.mxu0 0
        %973 = vmatpush1.bf16.xpose.msra.mxu0 0
        %974 = vmatprep.subr.bf16.mxu0 0
        %975 = vmatpush1.bf16.xpose.msra.mxu0 0
        %976 = vmatprep.subr.bf16.mxu0 0
        %977 = vmatpush1.bf16.xpose.msra.mxu0 0
        %978 = vmatprep.subr.bf16.mxu0 0
        %979 = vmatpush1.bf16.xpose.msra.mxu0 0
        %980 = vmatprep.subr.bf16.mxu0 0
        %981 = vmatpush1.bf16.xpose.msra.mxu0 0
        %982 = vmatprep.subr.bf16.mxu0 0
        %983 = vmatpush1.bf16.xpose.msra.mxu0 0
        %984 = vmatprep.subr.bf16.mxu0 0
        %985 = vmatpush1.bf16.xpose.msra.mxu0 0
        %986 = vmatprep.subr.bf16.mxu0 0
        %987 = vmatpush1.bf16.xpose.msra.mxu0 0
        %988 = vmatprep.subr.bf16.mxu0 0
        %989 = vmatpush1.bf16.xpose.msra.mxu0 0
        %990 = vmatprep.subr.bf16.mxu0 0
        %991 = vmatpush1.bf16.xpose.msra.mxu0 0
        %992 = vmatprep.subr.bf16.mxu0 0
        %993 = vmatpush1.bf16.xpose.msra.mxu0 0
        %994 = vmatprep.subr.bf16.mxu0 0
        %995 = vmatpush1.bf16.xpose.msra.mxu0 0
        %996 = vmatprep.subr.bf16.mxu0 0
        %997 = vmatpush1.bf16.xpose.msra.mxu0 0
        %998 = vmatprep.subr.bf16.mxu0 0
        %999 = vmatpush1.bf16.xpose.msra.mxu0 0
        %1000 = vmatprep.subr.bf16.mxu0 0
        %1001 = vmatpush1.bf16.xpose.msra.mxu0 0
        %1002 = vmatprep.mubr.bf16.mxu0 0
        %1003 = vmatmul.mubr.bf16.gmra.mrb[0].mxu0 %v965
        %v1004 = vpop.f32.mrb[0].mxu0
        %v1005 = vadd.f32 0.0, %v1004
        %v1006 = vpop.f32.mrb[0].mxu0
        %v1007 = vpop.f32.mrb[0].mxu0
        %v1008 = vpop.f32.mrb[0].mxu0
        %1009 = vdwg.mxu0
        %1010 = vrot.lane.b32.xlu0 %v737, 120
        %v1011 = vpop.permute.xlu0 %1010
        %1012 = vrot.lane.b32.xlu0 %v737, 88
        %v1013 = vpop.permute.xlu0 %1012
        %v1015 = vsel %vm741, %v1011, 0
        %v1018 = vsel %vm741, %v1013, 0
        %1020 = vmatprep.subr.bf16.mxu0 0
        %1021 = vmatpush1.bf16.xpose.msra.mxu0 %v1018
        %1022 = vmatprep.subr.bf16.mxu0 0
        %1023 = vmatpush1.bf16.xpose.msra.mxu0 0
        %1024 = vmatprep.subr.bf16.mxu0 0
        %1025 = vmatpush1.bf16.xpose.msra.mxu0 0
        %1026 = vmatprep.subr.bf16.mxu0 0
        %1027 = vmatpush1.bf16.xpose.msra.mxu0 0
        %1028 = vmatprep.subr.bf16.mxu0 0
        %1029 = vmatpush1.bf16.xpose.msra.mxu0 0
        %1030 = vmatprep.subr.bf16.mxu0 0
        %1031 = vmatpush1.bf16.xpose.msra.mxu0 0
        %1032 = vmatprep.subr.bf16.mxu0 0
        %1033 = vmatpush1.bf16.xpose.msra.mxu0 0
        %1034 = vmatprep.subr.bf16.mxu0 0
        %1035 = vmatpush1.bf16.xpose.msra.mxu0 0
        %1036 = vmatprep.subr.bf16.mxu0 0
        %1037 = vmatpush1.bf16.xpose.msra.mxu0 0
        %1038 = vmatprep.subr.bf16.mxu0 0
        %1039 = vmatpush1.bf16.xpose.msra.mxu0 0
        %1040 = vmatprep.subr.bf16.mxu0 0
        %1041 = vmatpush1.bf16.xpose.msra.mxu0 0
        %1042 = vmatprep.subr.bf16.mxu0 0
        %1043 = vmatpush1.bf16.xpose.msra.mxu0 0
        %1044 = vmatprep.subr.bf16.mxu0 0
        %1045 = vmatpush1.bf16.xpose.msra.mxu0 0
        %1046 = vmatprep.subr.bf16.mxu0 0
        %1047 = vmatpush1.bf16.xpose.msra.mxu0 0
        %1048 = vmatprep.subr.bf16.mxu0 0
        %1049 = vmatpush1.bf16.xpose.msra.mxu0 0
        %1050 = vmatprep.subr.bf16.mxu0 0
        %1051 = vmatpush1.bf16.xpose.msra.mxu0 0
        %1052 = vmatprep.mubr.bf16.mxu0 0
        %1053 = vmatmul.mubr.bf16.gmra.mrb[0].mxu0 %v1015
        %v1054 = vpop.f32.mrb[0].mxu0
        %v1055 = vadd.f32 0.0, %v1054
        %v1056 = vpop.f32.mrb[0].mxu0
        %v1057 = vpop.f32.mrb[0].mxu0
        %v1058 = vpop.f32.mrb[0].mxu0
        %1059 = vdwg.mxu0
        %v1060 = vmul.f32 %v1005, 0.35355338
        %v1061 = vmul.f32 %v1055, 0.35355338
        %v1062 = vsel %vm741, %v1060, -inf
        %1063 = vmax.xlane.f32.xlu0 %v1062
        %v1064 = vpop.xlane.xlu0 %1063
        %v1065 = vsel %vm741, %v1061, -inf
        %1066 = vmax.xlane.f32.xlu0 %v1065
        %v1067 = vpop.xlane.xlu0 %1066
        %v1068 = vsub.f32 %v1060, %v1064
        %v1069 = vsub.f32 %v1061, %v1067
        %v1070 = vmul.f32 %v1068, 1.442695
        %v1071 = vpow.pop %v1070
        %v1072 = vmul.f32 %v1069, 1.442695
        %v1073 = vpow.pop %v1072
        %v1074 = vsel %vm741, %v1071, 0.0
        %1075 = vadd.xlane.f32.xlu0 %v1074
        %v1076 = vpop.xlane.xlu0 %1075
        %v1077 = vsel %vm741, %v1073, 0.0
        %1078 = vadd.xlane.f32.xlu0 %v1077
        %v1079 = vpop.xlane.xlu0 %1078
        %v1080 = vrcp.pop %v1076
        %v1081 = vrcp.pop %v1079
        %v1082 = vmul.f32 %v1071, %v1080
        %v1083 = vmul.f32 %v1073, %v1081
        %v1084 = vpack.c.bf16 %v1082, %v1082
        %v1085 = vpack.c.bf16 %v1083, %v1083
        %1086 = vrot.lane.b32.xlu0 %v736, 56
        %v1087 = vpop.permute.xlu0 %1086
        %v1089 = vsel %vm741, %v1084, 0
        %v1092 = vsel %vm868, %v1087, 0
        %1094 = vmatprep.subr.bf16.mxu0 0
        %1095 = vmatpush1.bf16.msra.mxu0 %v1092
        %1096 = vmatprep.subr.bf16.mxu0 0
        %1097 = vmatpush1.bf16.msra.mxu0 0
        %1098 = vmatprep.subr.bf16.mxu0 0
        %1099 = vmatpush1.bf16.msra.mxu0 0
        %1100 = vmatprep.subr.bf16.mxu0 0
        %1101 = vmatpush1.bf16.msra.mxu0 0
        %1102 = vmatprep.subr.bf16.mxu0 0
        %1103 = vmatpush1.bf16.msra.mxu0 0
        %1104 = vmatprep.subr.bf16.mxu0 0
        %1105 = vmatpush1.bf16.msra.mxu0 0
        %1106 = vmatprep.subr.bf16.mxu0 0
        %1107 = vmatpush1.bf16.msra.mxu0 0
        %1108 = vmatprep.subr.bf16.mxu0 0
        %1109 = vmatpush1.bf16.msra.mxu0 0
        %1110 = vmatprep.subr.bf16.mxu0 0
        %1111 = vmatpush1.bf16.msra.mxu0 0
        %1112 = vmatprep.subr.bf16.mxu0 0
        %1113 = vmatpush1.bf16.msra.mxu0 0
        %1114 = vmatprep.subr.bf16.mxu0 0
        %1115 = vmatpush1.bf16.msra.mxu0 0
        %1116 = vmatprep.subr.bf16.mxu0 0
        %1117 = vmatpush1.bf16.msra.mxu0 0
        %1118 = vmatprep.subr.bf16.mxu0 0
        %1119 = vmatpush1.bf16.msra.mxu0 0
        %1120 = vmatprep.subr.bf16.mxu0 0
        %1121 = vmatpush1.bf16.msra.mxu0 0
        %1122 = vmatprep.subr.bf16.mxu0 0
        %1123 = vmatpush1.bf16.msra.mxu0 0
        %1124 = vmatprep.subr.bf16.mxu0 0
        %1125 = vmatpush1.bf16.msra.mxu0 0
        %1126 = vmatprep.mubr.bf16.mxu0 0
        %1127 = vmatmul.mubr.bf16.gmra.mrb[0].mxu0 %v1089
        %v1128 = vpop.f32.mrb[0].mxu0
        %v1129 = vadd.f32 0.0, %v1128
        %v1130 = vpop.f32.mrb[0].mxu0
        %v1131 = vpop.f32.mrb[0].mxu0
        %v1132 = vpop.f32.mrb[0].mxu0
        %1133 = vdwg.mxu0
        %1134 = vrot.lane.b32.xlu0 %v737, 56
        %v1135 = vpop.permute.xlu0 %1134
        %v1137 = vsel %vm741, %v1085, 0
        %v1140 = vsel %vm868, %v1135, 0
        %1142 = vmatprep.subr.bf16.mxu0 0
        %1143 = vmatpush1.bf16.msra.mxu0 %v1140
        %1144 = vmatprep.subr.bf16.mxu0 0
        %1145 = vmatpush1.bf16.msra.mxu0 0
        %1146 = vmatprep.subr.bf16.mxu0 0
        %1147 = vmatpush1.bf16.msra.mxu0 0
        %1148 = vmatprep.subr.bf16.mxu0 0
        %1149 = vmatpush1.bf16.msra.mxu0 0
        %1150 = vmatprep.subr.bf16.mxu0 0
        %1151 = vmatpush1.bf16.msra.mxu0 0
        %1152 = vmatprep.subr.bf16.mxu0 0
        %1153 = vmatpush1.bf16.msra.mxu0 0
        %1154 = vmatprep.subr.bf16.mxu0 0
        %1155 = vmatpush1.bf16.msra.mxu0 0
        %1156 = vmatprep.subr.bf16.mxu0 0
        %1157 = vmatpush1.bf16.msra.mxu0 0
        %1158 = vmatprep.subr.bf16.mxu0 0
        %1159 = vmatpush1.bf16.msra.mxu0 0
        %1160 = vmatprep.subr.bf16.mxu0 0
        %1161 = vmatpush1.bf16.msra.mxu0 0
        %1162 = vmatprep.subr.bf16.mxu0 0
        %1163 = vmatpush1.bf16.msra.mxu0 0
        %1164 = vmatprep.subr.bf16.mxu0 0
        %1165 = vmatpush1.bf16.msra.mxu0 0
        %1166 = vmatprep.subr.bf16.mxu0 0
        %1167 = vmatpush1.bf16.msra.mxu0 0
        %1168 = vmatprep.subr.bf16.mxu0 0
        %1169 = vmatpush1.bf16.msra.mxu0 0
        %1170 = vmatprep.subr.bf16.mxu0 0
        %1171 = vmatpush1.bf16.msra.mxu0 0
        %1172 = vmatprep.subr.bf16.mxu0 0
        %1173 = vmatpush1.bf16.msra.mxu0 0
        %1174 = vmatprep.mubr.bf16.mxu0 0
        %1175 = vmatmul.mubr.bf16.gmra.mrb[0].mxu0 %v1137
        %v1176 = vpop.f32.mrb[0].mxu0
        %v1177 = vadd.f32 0.0, %v1176
        %v1178 = vpop.f32.mrb[0].mxu0
        %v1179 = vpop.f32.mrb[0].mxu0
        %v1180 = vpop.f32.mrb[0].mxu0
        %1181 = vdwg.mxu0
        %1182 = vrot.lane.b32.xlu0 %v736, 112
        %v1183 = vpop.permute.xlu0 %1182
        %1184 = vrot.lane.b32.xlu0 %v736, 80
        %v1185 = vpop.permute.xlu0 %1184
        %v1187 = vsel %vm741, %v1183, 0
        %v1190 = vsel %vm741, %v1185, 0
        %1192 = vmatprep.subr.bf16.mxu0 0
        %1193 = vmatpush1.bf16.xpose.msra.mxu0 %v1190
        %1194 = vmatprep.subr.bf16.mxu0 0
        %1195 = vmatpush1.bf16.xpose.msra.mxu0 0
        %1196 = vmatprep.subr.bf16.mxu0 0
        %1197 = vmatpush1.bf16.xpose.msra.mxu0 0
        %1198 = vmatprep.subr.bf16.mxu0 0
        %1199 = vmatpush1.bf16.xpose.msra.mxu0 0
        %1200 = vmatprep.subr.bf16.mxu0 0
        %1201 = vmatpush1.bf16.xpose.msra.mxu0 0
        %1202 = vmatprep.subr.bf16.mxu0 0
        %1203 = vmatpush1.bf16.xpose.msra.mxu0 0
        %1204 = vmatprep.subr.bf16.mxu0 0
        %1205 = vmatpush1.bf16.xpose.msra.mxu0 0
        %1206 = vmatprep.subr.bf16.mxu0 0
        %1207 = vmatpush1.bf16.xpose.msra.mxu0 0
        %1208 = vmatprep.subr.bf16.mxu0 0
        %1209 = vmatpush1.bf16.xpose.msra.mxu0 0
        %1210 = vmatprep.subr.bf16.mxu0 0
        %1211 = vmatpush1.bf16.xpose.msra.mxu0 0
        %1212 = vmatprep.subr.bf16.mxu0 0
        %1213 = vmatpush1.bf16.xpose.msra.mxu0 0
        %1214 = vmatprep.subr.bf16.mxu0 0
        %1215 = vmatpush1.bf16.xpose.msra.mxu0 0
        %1216 = vmatprep.subr.bf16.mxu0 0
        %1217 = vmatpush1.bf16.xpose.msra.mxu0 0
        %1218 = vmatprep.subr.bf16.mxu0 0
        %1219 = vmatpush1.bf16.xpose.msra.mxu0 0
        %1220 = vmatprep.subr.bf16.mxu0 0
        %1221 = vmatpush1.bf16.xpose.msra.mxu0 0
        %1222 = vmatprep.subr.bf16.mxu0 0
        %1223 = vmatpush1.bf16.xpose.msra.mxu0 0
        %1224 = vmatprep.mubr.bf16.mxu0 0
        %1225 = vmatmul.mubr.bf16.gmra.mrb[0].mxu0 %v1187
        %v1226 = vpop.f32.mrb[0].mxu0
        %v1227 = vadd.f32 0.0, %v1226
        %v1228 = vpop.f32.mrb[0].mxu0
        %v1229 = vpop.f32.mrb[0].mxu0
        %v1230 = vpop.f32.mrb[0].mxu0
        %1231 = vdwg.mxu0
        %1232 = vrot.lane.b32.xlu0 %v737, 112
        %v1233 = vpop.permute.xlu0 %1232
        %1234 = vrot.lane.b32.xlu0 %v737, 80
        %v1235 = vpop.permute.xlu0 %1234
        %v1237 = vsel %vm741, %v1233, 0
        %v1240 = vsel %vm741, %v1235, 0
        %1242 = vmatprep.subr.bf16.mxu0 0
        %1243 = vmatpush1.bf16.xpose.msra.mxu0 %v1240
        %1244 = vmatprep.subr.bf16.mxu0 0
        %1245 = vmatpush1.bf16.xpose.msra.mxu0 0
        %1246 = vmatprep.subr.bf16.mxu0 0
        %1247 = vmatpush1.bf16.xpose.msra.mxu0 0
        %1248 = vmatprep.subr.bf16.mxu0 0
        %1249 = vmatpush1.bf16.xpose.msra.mxu0 0
        %1250 = vmatprep.subr.bf16.mxu0 0
        %1251 = vmatpush1.bf16.xpose.msra.mxu0 0
        %1252 = vmatprep.subr.bf16.mxu0 0
        %1253 = vmatpush1.bf16.xpose.msra.mxu0 0
        %1254 = vmatprep.subr.bf16.mxu0 0
        %1255 = vmatpush1.bf16.xpose.msra.mxu0 0
        %1256 = vmatprep.subr.bf16.mxu0 0
        %1257 = vmatpush1.bf16.xpose.msra.mxu0 0
        %1258 = vmatprep.subr.bf16.mxu0 0
        %1259 = vmatpush1.bf16.xpose.msra.mxu0 0
        %1260 = vmatprep.subr.bf16.mxu0 0
        %1261 = vmatpush1.bf16.xpose.msra.mxu0 0
        %1262 = vmatprep.subr.bf16.mxu0 0
        %1263 = vmatpush1.bf16.xpose.msra.mxu0 0
        %1264 = vmatprep.subr.bf16.mxu0 0
        %1265 = vmatpush1.bf16.xpose.msra.mxu0 0
        %1266 = vmatprep.subr.bf16.mxu0 0
        %1267 = vmatpush1.bf16.xpose.msra.mxu0 0
        %1268 = vmatprep.subr.bf16.mxu0 0
        %1269 = vmatpush1.bf16.xpose.msra.mxu0 0
        %1270 = vmatprep.subr.bf16.mxu0 0
        %1271 = vmatpush1.bf16.xpose.msra.mxu0 0
        %1272 = vmatprep.subr.bf16.mxu0 0
        %1273 = vmatpush1.bf16.xpose.msra.mxu0 0
        %1274 = vmatprep.mubr.bf16.mxu0 0
        %1275 = vmatmul.mubr.bf16.gmra.mrb[0].mxu0 %v1237
        %v1276 = vpop.f32.mrb[0].mxu0
        %v1277 = vadd.f32 0.0, %v1276
        %v1278 = vpop.f32.mrb[0].mxu0
        %v1279 = vpop.f32.mrb[0].mxu0
        %v1280 = vpop.f32.mrb[0].mxu0
        %1281 = vdwg.mxu0
        %v1282 = vmul.f32 %v1227, 0.35355338
        %v1283 = vmul.f32 %v1277, 0.35355338
        %v1284 = vsel %vm741, %v1282, -inf
        %1285 = vmax.xlane.f32.xlu0 %v1284
        %v1286 = vpop.xlane.xlu0 %1285
        %v1287 = vsel %vm741, %v1283, -inf
        %1288 = vmax.xlane.f32.xlu0 %v1287
        %v1289 = vpop.xlane.xlu0 %1288
        %v1290 = vsub.f32 %v1282, %v1286
        %v1291 = vsub.f32 %v1283, %v1289
        %v1292 = vmul.f32 %v1290, 1.442695
        %v1293 = vpow.pop %v1292
        %v1294 = vmul.f32 %v1291, 1.442695
        %v1295 = vpow.pop %v1294
        %v1296 = vsel %vm741, %v1293, 0.0
        %1297 = vadd.xlane.f32.xlu0 %v1296
        %v1298 = vpop.xlane.xlu0 %1297
        %v1299 = vsel %vm741, %v1295, 0.0
        %1300 = vadd.xlane.f32.xlu0 %v1299
        %v1301 = vpop.xlane.xlu0 %1300
        %v1302 = vrcp.pop %v1298
        %v1303 = vrcp.pop %v1301
        %v1304 = vmul.f32 %v1293, %v1302
        %v1305 = vmul.f32 %v1295, %v1303
        %v1306 = vpack.c.bf16 %v1304, %v1304
        %v1307 = vpack.c.bf16 %v1305, %v1305
        %1308 = vrot.lane.b32.xlu0 %v736, 48
        %v1309 = vpop.permute.xlu0 %1308
        %v1311 = vsel %vm741, %v1306, 0
        %v1314 = vsel %vm868, %v1309, 0
        %1316 = vmatprep.subr.bf16.mxu0 0
        %1317 = vmatpush1.bf16.msra.mxu0 %v1314
        %1318 = vmatprep.subr.bf16.mxu0 0
        %1319 = vmatpush1.bf16.msra.mxu0 0
        %1320 = vmatprep.subr.bf16.mxu0 0
        %1321 = vmatpush1.bf16.msra.mxu0 0
        %1322 = vmatprep.subr.bf16.mxu0 0
        %1323 = vmatpush1.bf16.msra.mxu0 0
        %1324 = vmatprep.subr.bf16.mxu0 0
        %1325 = vmatpush1.bf16.msra.mxu0 0
        %1326 = vmatprep.subr.bf16.mxu0 0
        %1327 = vmatpush1.bf16.msra.mxu0 0
        %1328 = vmatprep.subr.bf16.mxu0 0
        %1329 = vmatpush1.bf16.msra.mxu0 0
        %1330 = vmatprep.subr.bf16.mxu0 0
        %1331 = vmatpush1.bf16.msra.mxu0 0
        %1332 = vmatprep.subr.bf16.mxu0 0
        %1333 = vmatpush1.bf16.msra.mxu0 0
        %1334 = vmatprep.subr.bf16.mxu0 0
        %1335 = vmatpush1.bf16.msra.mxu0 0
        %1336 = vmatprep.subr.bf16.mxu0 0
        %1337 = vmatpush1.bf16.msra.mxu0 0
        %1338 = vmatprep.subr.bf16.mxu0 0
        %1339 = vmatpush1.bf16.msra.mxu0 0
        %1340 = vmatprep.subr.bf16.mxu0 0
        %1341 = vmatpush1.bf16.msra.mxu0 0
        %1342 = vmatprep.subr.bf16.mxu0 0
        %1343 = vmatpush1.bf16.msra.mxu0 0
        %1344 = vmatprep.subr.bf16.mxu0 0
        %1345 = vmatpush1.bf16.msra.mxu0 0
        %1346 = vmatprep.subr.bf16.mxu0 0
        %1347 = vmatpush1.bf16.msra.mxu0 0
        %1348 = vmatprep.mubr.bf16.mxu0 0
        %1349 = vmatmul.mubr.bf16.gmra.mrb[0].mxu0 %v1311
        %v1350 = vpop.f32.mrb[0].mxu0
        %v1351 = vadd.f32 0.0, %v1350
        %v1352 = vpop.f32.mrb[0].mxu0
        %v1353 = vpop.f32.mrb[0].mxu0
        %v1354 = vpop.f32.mrb[0].mxu0
        %1355 = vdwg.mxu0
        %1356 = vrot.lane.b32.xlu0 %v737, 48
        %v1357 = vpop.permute.xlu0 %1356
        %v1359 = vsel %vm741, %v1307, 0
        %v1362 = vsel %vm868, %v1357, 0
        %1364 = vmatprep.subr.bf16.mxu0 0
        %1365 = vmatpush1.bf16.msra.mxu0 %v1362
        %1366 = vmatprep.subr.bf16.mxu0 0
        %1367 = vmatpush1.bf16.msra.mxu0 0
        %1368 = vmatprep.subr.bf16.mxu0 0
        %1369 = vmatpush1.bf16.msra.mxu0 0
        %1370 = vmatprep.subr.bf16.mxu0 0
        %1371 = vmatpush1.bf16.msra.mxu0 0
        %1372 = vmatprep.subr.bf16.mxu0 0
        %1373 = vmatpush1.bf16.msra.mxu0 0
        %1374 = vmatprep.subr.bf16.mxu0 0
        %1375 = vmatpush1.bf16.msra.mxu0 0
        %1376 = vmatprep.subr.bf16.mxu0 0
        %1377 = vmatpush1.bf16.msra.mxu0 0
        %1378 = vmatprep.subr.bf16.mxu0 0
        %1379 = vmatpush1.bf16.msra.mxu0 0
        %1380 = vmatprep.subr.bf16.mxu0 0
        %1381 = vmatpush1.bf16.msra.mxu0 0
        %1382 = vmatprep.subr.bf16.mxu0 0
        %1383 = vmatpush1.bf16.msra.mxu0 0
        %1384 = vmatprep.subr.bf16.mxu0 0
        %1385 = vmatpush1.bf16.msra.mxu0 0
        %1386 = vmatprep.subr.bf16.mxu0 0
        %1387 = vmatpush1.bf16.msra.mxu0 0
        %1388 = vmatprep.subr.bf16.mxu0 0
        %1389 = vmatpush1.bf16.msra.mxu0 0
        %1390 = vmatprep.subr.bf16.mxu0 0
        %1391 = vmatpush1.bf16.msra.mxu0 0
        %1392 = vmatprep.subr.bf16.mxu0 0
        %1393 = vmatpush1.bf16.msra.mxu0 0
        %1394 = vmatprep.subr.bf16.mxu0 0
        %1395 = vmatpush1.bf16.msra.mxu0 0
        %1396 = vmatprep.mubr.bf16.mxu0 0
        %1397 = vmatmul.mubr.bf16.gmra.mrb[0].mxu0 %v1359
        %v1398 = vpop.f32.mrb[0].mxu0
        %v1399 = vadd.f32 0.0, %v1398
        %v1400 = vpop.f32.mrb[0].mxu0
        %v1401 = vpop.f32.mrb[0].mxu0
        %v1402 = vpop.f32.mrb[0].mxu0
        %1403 = vdwg.mxu0
        %1404 = vrot.lane.b32.xlu0 %v736, 104
        %v1405 = vpop.permute.xlu0 %1404
        %1406 = vrot.lane.b32.xlu0 %v736, 72
        %v1407 = vpop.permute.xlu0 %1406
        %v1409 = vsel %vm741, %v1405, 0
        %v1412 = vsel %vm741, %v1407, 0
        %1414 = vmatprep.subr.bf16.mxu0 0
        %1415 = vmatpush1.bf16.xpose.msra.mxu0 %v1412
        %1416 = vmatprep.subr.bf16.mxu0 0
        %1417 = vmatpush1.bf16.xpose.msra.mxu0 0
        %1418 = vmatprep.subr.bf16.mxu0 0
        %1419 = vmatpush1.bf16.xpose.msra.mxu0 0
        %1420 = vmatprep.subr.bf16.mxu0 0
        %1421 = vmatpush1.bf16.xpose.msra.mxu0 0
        %1422 = vmatprep.subr.bf16.mxu0 0
        %1423 = vmatpush1.bf16.xpose.msra.mxu0 0
        %1424 = vmatprep.subr.bf16.mxu0 0
        %1425 = vmatpush1.bf16.xpose.msra.mxu0 0
        %1426 = vmatprep.subr.bf16.mxu0 0
        %1427 = vmatpush1.bf16.xpose.msra.mxu0 0
        %1428 = vmatprep.subr.bf16.mxu0 0
        %1429 = vmatpush1.bf16.xpose.msra.mxu0 0
        %1430 = vmatprep.subr.bf16.mxu0 0
        %1431 = vmatpush1.bf16.xpose.msra.mxu0 0
        %1432 = vmatprep.subr.bf16.mxu0 0
        %1433 = vmatpush1.bf16.xpose.msra.mxu0 0
        %1434 = vmatprep.subr.bf16.mxu0 0
        %1435 = vmatpush1.bf16.xpose.msra.mxu0 0
        %1436 = vmatprep.subr.bf16.mxu0 0
        %1437 = vmatpush1.bf16.xpose.msra.mxu0 0
        %1438 = vmatprep.subr.bf16.mxu0 0
        %1439 = vmatpush1.bf16.xpose.msra.mxu0 0
        %1440 = vmatprep.subr.bf16.mxu0 0
        %1441 = vmatpush1.bf16.xpose.msra.mxu0 0
        %1442 = vmatprep.subr.bf16.mxu0 0
        %1443 = vmatpush1.bf16.xpose.msra.mxu0 0
        %1444 = vmatprep.subr.bf16.mxu0 0
        %1445 = vmatpush1.bf16.xpose.msra.mxu0 0
        %1446 = vmatprep.mubr.bf16.mxu0 0
        %1447 = vmatmul.mubr.bf16.gmra.mrb[0].mxu0 %v1409
        %v1448 = vpop.f32.mrb[0].mxu0
        %v1449 = vadd.f32 0.0, %v1448
        %v1450 = vpop.f32.mrb[0].mxu0
        %v1451 = vpop.f32.mrb[0].mxu0
        %v1452 = vpop.f32.mrb[0].mxu0
        %1453 = vdwg.mxu0
        %1454 = vrot.lane.b32.xlu0 %v737, 104
        %v1455 = vpop.permute.xlu0 %1454
        %1456 = vrot.lane.b32.xlu0 %v737, 72
        %v1457 = vpop.permute.xlu0 %1456
        %v1459 = vsel %vm741, %v1455, 0
        %v1462 = vsel %vm741, %v1457, 0
        %1464 = vmatprep.subr.bf16.mxu0 0
        %1465 = vmatpush1.bf16.xpose.msra.mxu0 %v1462
        %1466 = vmatprep.subr.bf16.mxu0 0
        %1467 = vmatpush1.bf16.xpose.msra.mxu0 0
        %1468 = vmatprep.subr.bf16.mxu0 0
        %1469 = vmatpush1.bf16.xpose.msra.mxu0 0
        %1470 = vmatprep.subr.bf16.mxu0 0
        %1471 = vmatpush1.bf16.xpose.msra.mxu0 0
        %1472 = vmatprep.subr.bf16.mxu0 0
        %1473 = vmatpush1.bf16.xpose.msra.mxu0 0
        %1474 = vmatprep.subr.bf16.mxu0 0
        %1475 = vmatpush1.bf16.xpose.msra.mxu0 0
        %1476 = vmatprep.subr.bf16.mxu0 0
        %1477 = vmatpush1.bf16.xpose.msra.mxu0 0
        %1478 = vmatprep.subr.bf16.mxu0 0
        %1479 = vmatpush1.bf16.xpose.msra.mxu0 0
        %1480 = vmatprep.subr.bf16.mxu0 0
        %1481 = vmatpush1.bf16.xpose.msra.mxu0 0
        %1482 = vmatprep.subr.bf16.mxu0 0
        %1483 = vmatpush1.bf16.xpose.msra.mxu0 0
        %1484 = vmatprep.subr.bf16.mxu0 0
        %1485 = vmatpush1.bf16.xpose.msra.mxu0 0
        %1486 = vmatprep.subr.bf16.mxu0 0
        %1487 = vmatpush1.bf16.xpose.msra.mxu0 0
        %1488 = vmatprep.subr.bf16.mxu0 0
        %1489 = vmatpush1.bf16.xpose.msra.mxu0 0
        %1490 = vmatprep.subr.bf16.mxu0 0
        %1491 = vmatpush1.bf16.xpose.msra.mxu0 0
        %1492 = vmatprep.subr.bf16.mxu0 0
        %1493 = vmatpush1.bf16.xpose.msra.mxu0 0
        %1494 = vmatprep.subr.bf16.mxu0 0
        %1495 = vmatpush1.bf16.xpose.msra.mxu0 0
        %1496 = vmatprep.mubr.bf16.mxu0 0
        %1497 = vmatmul.mubr.bf16.gmra.mrb[0].mxu0 %v1459
        %v1498 = vpop.f32.mrb[0].mxu0
        %v1499 = vadd.f32 0.0, %v1498
        %v1500 = vpop.f32.mrb[0].mxu0
        %v1501 = vpop.f32.mrb[0].mxu0
        %v1502 = vpop.f32.mrb[0].mxu0
        %1503 = vdwg.mxu0
        %v1504 = vmul.f32 %v1449, 0.35355338
        %v1505 = vmul.f32 %v1499, 0.35355338
        %v1506 = vsel %vm741, %v1504, -inf
        %1507 = vmax.xlane.f32.xlu0 %v1506
        %v1508 = vpop.xlane.xlu0 %1507
        %v1509 = vsel %vm741, %v1505, -inf
        %1510 = vmax.xlane.f32.xlu0 %v1509
        %v1511 = vpop.xlane.xlu0 %1510
        %v1512 = vsub.f32 %v1504, %v1508
        %v1513 = vsub.f32 %v1505, %v1511
        %v1514 = vmul.f32 %v1512, 1.442695
        %v1515 = vpow.pop %v1514
        %v1516 = vmul.f32 %v1513, 1.442695
        %v1517 = vpow.pop %v1516
        %v1518 = vsel %vm741, %v1515, 0.0
        %1519 = vadd.xlane.f32.xlu0 %v1518
        %v1520 = vpop.xlane.xlu0 %1519
        %v1521 = vsel %vm741, %v1517, 0.0
        %1522 = vadd.xlane.f32.xlu0 %v1521
        %v1523 = vpop.xlane.xlu0 %1522
        %v1524 = vrcp.pop %v1520
        %v1525 = vrcp.pop %v1523
        %v1526 = vmul.f32 %v1515, %v1524
        %v1527 = vmul.f32 %v1517, %v1525
        %v1528 = vpack.c.bf16 %v1526, %v1526
        %v1529 = vpack.c.bf16 %v1527, %v1527
        %1530 = vrot.lane.b32.xlu0 %v736, 40
        %v1531 = vpop.permute.xlu0 %1530
        %v1533 = vsel %vm741, %v1528, 0
        %v1536 = vsel %vm868, %v1531, 0
        %1538 = vmatprep.subr.bf16.mxu0 0
        %1539 = vmatpush1.bf16.msra.mxu0 %v1536
        %1540 = vmatprep.subr.bf16.mxu0 0
        %1541 = vmatpush1.bf16.msra.mxu0 0
        %1542 = vmatprep.subr.bf16.mxu0 0
        %1543 = vmatpush1.bf16.msra.mxu0 0
        %1544 = vmatprep.subr.bf16.mxu0 0
        %1545 = vmatpush1.bf16.msra.mxu0 0
        %1546 = vmatprep.subr.bf16.mxu0 0
        %1547 = vmatpush1.bf16.msra.mxu0 0
        %1548 = vmatprep.subr.bf16.mxu0 0
        %1549 = vmatpush1.bf16.msra.mxu0 0
        %1550 = vmatprep.subr.bf16.mxu0 0
        %1551 = vmatpush1.bf16.msra.mxu0 0
        %1552 = vmatprep.subr.bf16.mxu0 0
        %1553 = vmatpush1.bf16.msra.mxu0 0
        %1554 = vmatprep.subr.bf16.mxu0 0
        %1555 = vmatpush1.bf16.msra.mxu0 0
        %1556 = vmatprep.subr.bf16.mxu0 0
        %1557 = vmatpush1.bf16.msra.mxu0 0
        %1558 = vmatprep.subr.bf16.mxu0 0
        %1559 = vmatpush1.bf16.msra.mxu0 0
        %1560 = vmatprep.subr.bf16.mxu0 0
        %1561 = vmatpush1.bf16.msra.mxu0 0
        %1562 = vmatprep.subr.bf16.mxu0 0
        %1563 = vmatpush1.bf16.msra.mxu0 0
        %1564 = vmatprep.subr.bf16.mxu0 0
        %1565 = vmatpush1.bf16.msra.mxu0 0
        %1566 = vmatprep.subr.bf16.mxu0 0
        %1567 = vmatpush1.bf16.msra.mxu0 0
        %1568 = vmatprep.subr.bf16.mxu0 0
        %1569 = vmatpush1.bf16.msra.mxu0 0
        %1570 = vmatprep.mubr.bf16.mxu0 0
        %1571 = vmatmul.mubr.bf16.gmra.mrb[0].mxu0 %v1533
        %v1572 = vpop.f32.mrb[0].mxu0
        %v1573 = vadd.f32 0.0, %v1572
        %v1574 = vpop.f32.mrb[0].mxu0
        %v1575 = vpop.f32.mrb[0].mxu0
        %v1576 = vpop.f32.mrb[0].mxu0
        %1577 = vdwg.mxu0
        %1578 = vrot.lane.b32.xlu0 %v737, 40
        %v1579 = vpop.permute.xlu0 %1578
        %v1581 = vsel %vm741, %v1529, 0
        %v1584 = vsel %vm868, %v1579, 0
        %1586 = vmatprep.subr.bf16.mxu0 0
        %1587 = vmatpush1.bf16.msra.mxu0 %v1584
        %1588 = vmatprep.subr.bf16.mxu0 0
        %1589 = vmatpush1.bf16.msra.mxu0 0
        %1590 = vmatprep.subr.bf16.mxu0 0
        %1591 = vmatpush1.bf16.msra.mxu0 0
        %1592 = vmatprep.subr.bf16.mxu0 0
        %1593 = vmatpush1.bf16.msra.mxu0 0
        %1594 = vmatprep.subr.bf16.mxu0 0
        %1595 = vmatpush1.bf16.msra.mxu0 0
        %1596 = vmatprep.subr.bf16.mxu0 0
        %1597 = vmatpush1.bf16.msra.mxu0 0
        %1598 = vmatprep.subr.bf16.mxu0 0
        %1599 = vmatpush1.bf16.msra.mxu0 0
        %1600 = vmatprep.subr.bf16.mxu0 0
        %1601 = vmatpush1.bf16.msra.mxu0 0
        %1602 = vmatprep.subr.bf16.mxu0 0
        %1603 = vmatpush1.bf16.msra.mxu0 0
        %1604 = vmatprep.subr.bf16.mxu0 0
        %1605 = vmatpush1.bf16.msra.mxu0 0
        %1606 = vmatprep.subr.bf16.mxu0 0
        %1607 = vmatpush1.bf16.msra.mxu0 0
        %1608 = vmatprep.subr.bf16.mxu0 0
        %1609 = vmatpush1.bf16.msra.mxu0 0
        %1610 = vmatprep.subr.bf16.mxu0 0
        %1611 = vmatpush1.bf16.msra.mxu0 0
        %1612 = vmatprep.subr.bf16.mxu0 0
        %1613 = vmatpush1.bf16.msra.mxu0 0
        %1614 = vmatprep.subr.bf16.mxu0 0
        %1615 = vmatpush1.bf16.msra.mxu0 0
        %1616 = vmatprep.subr.bf16.mxu0 0
        %1617 = vmatpush1.bf16.msra.mxu0 0
        %1618 = vmatprep.mubr.bf16.mxu0 0
        %1619 = vmatmul.mubr.bf16.gmra.mrb[0].mxu0 %v1581
        %v1620 = vpop.f32.mrb[0].mxu0
        %v1621 = vadd.f32 0.0, %v1620
        %v1622 = vpop.f32.mrb[0].mxu0
        %v1623 = vpop.f32.mrb[0].mxu0
        %v1624 = vpop.f32.mrb[0].mxu0
        %1625 = vdwg.mxu0
        %1628 = vrot.lane.b32.xlu0 %v1129, 8
        %v1629 = vpop.permute.xlu0 %1628
        %1630 = vrot.lane.b32.xlu0 %v1177, 8
        %v1631 = vpop.permute.xlu0 %1630
        %1636 = vrot.lane.b32.xlu0 %v1351, 16
        %v1637 = vpop.permute.xlu0 %1636
        %1638 = vrot.lane.b32.xlu0 %v1399, 16
        %v1639 = vpop.permute.xlu0 %1638
        %1644 = vrot.lane.b32.xlu0 %v1573, 24
        %v1645 = vpop.permute.xlu0 %1644
        %1646 = vrot.lane.b32.xlu0 %v1621, 24
        %v1647 = vpop.permute.xlu0 %1646
        %v1650 = vsel %vm741, %v907, %v1629
        %v1651 = vsel %vm741, %v955, %v1631
        %vm1652 = vcmask 130048
        %v1653 = vsel %vm1652, %v1650, %v1637
        %v1654 = vsel %vm1652, %v1651, %v1639
        %vm1655 = vcmask 195584
        %v1656 = vsel %vm1655, %v1653, %v1645
        %v1657 = vsel %vm1655, %v1654, %v1647
        %v1658 = vpack.c.bf16 %v1657, %v1656
        %v1659 = vld [vmem:[#allocation11] sm:$0xf]
        %v1660 = vld [vmem:[#allocation11 + $0x4] sm:$0xf]
        %v1661 = vld [vmem:[#allocation11 + $0x8] sm:$0xf]
        %v1662 = vld [vmem:[#allocation11 + $0xc] sm:$0xf]
        %v1663 = vld [vmem:[#allocation13] sm:$0x1]
        %v1665 = vlaneseq
        %v1666 = vshrl.u32 %v1665, 7
        %v1667 = vsub.s32 0, %v1666
        %v1668 = vrot.slane %v1663, %v1667
        %v1674 = vunpack.c.l.b16 %v1659
        %v1675 = vunpack.c.l.b16 %v1660
        %v1676 = vunpack.c.l.b16 %v1661
        %v1677 = vunpack.c.l.b16 %v1662
        %v1678 = vpack.c.b16 %v1675, %v1674
        %v1679 = vpack.c.b16 %v1677, %v1676
        %v1683 = vsel %vm624, %v1658, 0
        %1685 = vmatprep.subr.bf16.mxu0 0
        %1686 = vmatpush1.bf16.msra.mxu0 %v1678
        %1687 = vmatprep.subr.bf16.mxu0 0
        %1688 = vmatpush1.bf16.msra.mxu0 %v1679
        %1689 = vmatprep.subr.bf16.mxu0 0
        %1690 = vmatpush1.bf16.msra.mxu0 0
        %1691 = vmatprep.subr.bf16.mxu0 0
        %1692 = vmatpush1.bf16.msra.mxu0 0
        %1693 = vmatprep.subr.bf16.mxu0 0
        %1694 = vmatpush1.bf16.msra.mxu0 0
        %1695 = vmatprep.subr.bf16.mxu0 0
        %1696 = vmatpush1.bf16.msra.mxu0 0
        %1697 = vmatprep.subr.bf16.mxu0 0
        %1698 = vmatpush1.bf16.msra.mxu0 0
        %1699 = vmatprep.subr.bf16.mxu0 0
        %1700 = vmatpush1.bf16.msra.mxu0 0
        %1701 = vmatprep.subr.bf16.mxu0 0
        %1702 = vmatpush1.bf16.msra.mxu0 0
        %1703 = vmatprep.subr.bf16.mxu0 0
        %1704 = vmatpush1.bf16.msra.mxu0 0
        %1705 = vmatprep.subr.bf16.mxu0 0
        %1706 = vmatpush1.bf16.msra.mxu0 0
        %1707 = vmatprep.subr.bf16.mxu0 0
        %1708 = vmatpush1.bf16.msra.mxu0 0
        %1709 = vmatprep.subr.bf16.mxu0 0
        %1710 = vmatpush1.bf16.msra.mxu0 0
        %1711 = vmatprep.subr.bf16.mxu0 0
        %1712 = vmatpush1.bf16.msra.mxu0 0
        %1713 = vmatprep.subr.bf16.mxu0 0
        %1714 = vmatpush1.bf16.msra.mxu0 0
        %1715 = vmatprep.subr.bf16.mxu0 0
        %1716 = vmatpush1.bf16.msra.mxu0 0
        %1717 = vmatprep.mubr.bf16.mxu0 0
        %1718 = vmatmul.mubr.bf16.gmra.mrb[0].mxu0 %v1683
        %v1719 = vpop.f32.mrb[0].mxu0
        %v1720 = vadd.f32 %v1668, %v1719
        %v1721 = vpop.f32.mrb[0].mxu0
        %v1722 = vpop.f32.mrb[0].mxu0
        %v1723 = vadd.f32 %v1668, %v1722
        %v1724 = vpop.f32.mrb[0].mxu0
        %1725 = vdwg.mxu0
        %v1726 = vadd.f32 %v620, %v1720
        %v1727 = vadd.f32 %v621, %v1723
        %v1728 = vld [vmem:[#allocation14] sm:$0x1]
        %v1729 = vld [vmem:[#allocation16] sm:$0x1]
        %v1730 = vsel %vm624, %v1726, 0.0
        %1731 = vadd.xlane.f32.xlu0 %v1730
        %v1732 = vpop.xlane.xlu0 %1731
        %v1733 = vsel %vm624, %v1727, 0.0
        %1734 = vadd.xlane.f32.xlu0 %v1733
        %v1735 = vpop.xlane.xlu0 %1734
        %v1736 = vmul.f32 %v1732, %v631
        %v1737 = vmul.f32 %v1735, %v631
        %v1738 = vsub.f32 %v1726, %v1736
        %v1739 = vsub.f32 %v1727, %v1737
        %v1740 = vmul.f32 %v1738, %v1738
        %v1741 = vmul.f32 %v1739, %v1739
        %v1742 = vsel %vm624, %v1740, 0.0
        %1743 = vadd.xlane.f32.xlu0 %v1742
        %v1744 = vpop.xlane.xlu0 %1743
        %v1745 = vsel %vm624, %v1741, 0.0
        %1746 = vadd.xlane.f32.xlu0 %v1745
        %v1747 = vpop.xlane.xlu0 %1746
        %v1748 = vmul.f32 %v1744, %v631
        %v1749 = vmul.f32 %v1747, %v631
        %v1750 = vadd.f32 %v1748, 1e-05
        %v1751 = vadd.f32 %v1749, 1e-05
        %v1752 = vrsqrt.pop %v1750
        %v1753 = vrsqrt.pop %v1751
        %v1754 = vmul.f32 %v1738, %v1752
        %v1755 = vmul.f32 %v1739, %v1753
        %v1757 = vlaneseq
        %v1758 = vshrl.u32 %v1757, 7
        %v1759 = vsub.s32 0, %v1758
        %v1760 = vrot.slane %v1728, %v1759
        %v1762 = vmul.f32 %v1754, %v1760
        %v1763 = vmul.f32 %v1755, %v1760
        %v1765 = vlaneseq
        %v1766 = vshrl.u32 %v1765, 7
        %v1767 = vsub.s32 0, %v1766
        %v1768 = vrot.slane %v1729, %v1767
        %v1770 = vadd.f32 %v1762, %v1768
        %v1771 = vadd.f32 %v1763, %v1768
        %v1772 = vpack.c.bf16 %v1771, %v1770
        %v1773 = vld [vmem:[#allocation17] sm:$0xf]
        %v1774 = vld [vmem:[#allocation17 + $0x4] sm:$0xf]
        %v1775 = vld [vmem:[#allocation17 + $0x8] sm:$0xf]
        %v1776 = vld [vmem:[#allocation17 + $0xc] sm:$0xf]
        %v1777 = vld [vmem:[#allocation19] sm:$0x1]
        %v1779 = vlaneseq
        %v1780 = vshrl.u32 %v1779, 7
        %v1781 = vsub.s32 0, %v1780
        %v1782 = vrot.slane %v1777, %v1781
        %v1788 = vunpack.c.l.b16 %v1773
        %v1789 = vunpack.c.l.b16 %v1774
        %v1790 = vunpack.c.l.b16 %v1775
        %v1791 = vunpack.c.l.b16 %v1776
        %v1792 = vpack.c.b16 %v1789, %v1788
        %v1793 = vpack.c.b16 %v1791, %v1790
        %v1797 = vsel %vm624, %v1772, 0
        %1799 = vmatprep.subr.bf16.mxu0 0
        %1800 = vmatpush1.bf16.msra.mxu0 %v1792
        %1801 = vmatprep.subr.bf16.mxu0 0
        %1802 = vmatpush1.bf16.msra.mxu0 %v1793
        %1803 = vmatprep.subr.bf16.mxu0 0
        %1804 = vmatpush1.bf16.msra.mxu0 0
        %1805 = vmatprep.subr.bf16.mxu0 0
        %1806 = vmatpush1.bf16.msra.mxu0 0
        %1807 = vmatprep.subr.bf16.mxu0 0
        %1808 = vmatpush1.bf16.msra.mxu0 0
        %1809 = vmatprep.subr.bf16.mxu0 0
        %1810 = vmatpush1.bf16.msra.mxu0 0
        %1811 = vmatprep.subr.bf16.mxu0 0
        %1812 = vmatpush1.bf16.msra.mxu0 0
        %1813 = vmatprep.subr.bf16.mxu0 0
        %1814 = vmatpush1.bf16.msra.mxu0 0
        %1815 = vmatprep.subr.bf16.mxu0 0
        %1816 = vmatpush1.bf16.msra.mxu0 0
        %1817 = vmatprep.subr.bf16.mxu0 0
        %1818 = vmatpush1.bf16.msra.mxu0 0
        %1819 = vmatprep.subr.bf16.mxu0 0
        %1820 = vmatpush1.bf16.msra.mxu0 0
        %1821 = vmatprep.subr.bf16.mxu0 0
        %1822 = vmatpush1.bf16.msra.mxu0 0
        %1823 = vmatprep.subr.bf16.mxu0 0
        %1824 = vmatpush1.bf16.msra.mxu0 0
        %1825 = vmatprep.subr.bf16.mxu0 0
        %1826 = vmatpush1.bf16.msra.mxu0 0
        %1827 = vmatprep.subr.bf16.mxu0 0
        %1828 = vmatpush1.bf16.msra.mxu0 0
        %1829 = vmatprep.subr.bf16.mxu0 0
        %1830 = vmatpush1.bf16.msra.mxu0 0
        %1831 = vmatprep.mubr.bf16.mxu0 0
        %1832 = vmatmul.mubr.bf16.gmra.mrb[0].mxu0 %v1797
        %v1833 = vpop.f32.mrb[0].mxu0
        %v1834 = vadd.f32 %v1782, %v1833
        %v1835 = vpop.f32.mrb[0].mxu0
        %v1836 = vpop.f32.mrb[0].mxu0
        %v1837 = vadd.f32 %v1782, %v1836
        %v1838 = vpop.f32.mrb[0].mxu0
        %1839 = vdwg.mxu0
        %v1840 = vmul.f32 %v1834, 0.5
        %v1841 = vmul.f32 %v1837, 0.5
        %v1842 = vmul.f32 %v1834, 0.70710677
        %v1843 = vmul.f32 %v1837, 0.70710677
        %v1844 = verf.f32.pop %v1842
        %v1845 = verf.f32.pop %v1843
        %v1846 = vadd.f32 %v1844, 1.0
        %v1847 = vadd.f32 %v1845, 1.0
        %v1848 = vmul.f32 %v1840, %v1846
        %v1849 = vmul.f32 %v1841, %v1847
        %v1850 = vpack.c.bf16 %v1849, %v1848
        %v1851 = vld [vmem:[#allocation20] sm:$0xf]
        %v1852 = vld [vmem:[#allocation20 + $0x4] sm:$0xf]
        %v1853 = vld [vmem:[#allocation20 + $0x8] sm:$0xf]
        %v1854 = vld [vmem:[#allocation20 + $0xc] sm:$0xf]
        %v1855 = vld [vmem:[#allocation20 + $0x10] sm:$0xf]
        %v1856 = vld [vmem:[#allocation20 + $0x14] sm:$0xf]
        %v1857 = vld [vmem:[#allocation20 + $0x18] sm:$0xf]
        %v1858 = vld [vmem:[#allocation20 + $0x1c] sm:$0xf]
        %v1859 = vld [vmem:[#allocation20 + $0x20] sm:$0xf]
        %v1860 = vld [vmem:[#allocation20 + $0x24] sm:$0xf]
        %v1861 = vld [vmem:[#allocation20 + $0x28] sm:$0xf]
        %v1862 = vld [vmem:[#allocation20 + $0x2c] sm:$0xf]
        %v1863 = vld [vmem:[#allocation20 + $0x30] sm:$0xf]
        %v1864 = vld [vmem:[#allocation20 + $0x34] sm:$0xf]
        %v1865 = vld [vmem:[#allocation20 + $0x38] sm:$0xf]
        %v1866 = vld [vmem:[#allocation20 + $0x3c] sm:$0xf]
        %v1867 = vld [vmem:[#allocation22] sm:$0x1]
        %v1869 = vlaneseq
        %v1870 = vshrl.u32 %v1869, 7
        %v1871 = vsub.s32 0, %v1870
        %v1872 = vrot.slane %v1867, %v1871
        %v1890 = vunpack.c.l.b16 %v1851
        %v1891 = vunpack.c.l.b16 %v1852
        %v1892 = vunpack.c.l.b16 %v1853
        %v1893 = vunpack.c.l.b16 %v1854
        %v1894 = vunpack.c.l.b16 %v1855
        %v1895 = vunpack.c.l.b16 %v1856
        %v1896 = vunpack.c.l.b16 %v1857
        %v1897 = vunpack.c.l.b16 %v1858
        %v1898 = vunpack.c.l.b16 %v1859
        %v1899 = vunpack.c.l.b16 %v1860
        %v1900 = vunpack.c.l.b16 %v1861
        %v1901 = vunpack.c.l.b16 %v1862
        %v1902 = vunpack.c.l.b16 %v1863
        %v1903 = vunpack.c.l.b16 %v1864
        %v1904 = vunpack.c.l.b16 %v1865
        %v1905 = vunpack.c.l.b16 %v1866
        %v1906 = vpack.c.b16 %v1891, %v1890
        %v1907 = vpack.c.b16 %v1893, %v1892
        %v1908 = vpack.c.b16 %v1895, %v1894
        %v1909 = vpack.c.b16 %v1897, %v1896
        %v1910 = vpack.c.b16 %v1899, %v1898
        %v1911 = vpack.c.b16 %v1901, %v1900
        %v1912 = vpack.c.b16 %v1903, %v1902
        %v1913 = vpack.c.b16 %v1905, %v1904
        %1922 = vmatprep.subr.bf16.mxu0 0
        %1923 = vmatpush1.bf16.msra.mxu0 %v1906
        %1924 = vmatprep.subr.bf16.mxu0 0
        %1925 = vmatpush1.bf16.msra.mxu0 %v1907
        %1926 = vmatprep.subr.bf16.mxu0 0
        %1927 = vmatpush1.bf16.msra.mxu0 %v1908
        %1928 = vmatprep.subr.bf16.mxu0 0
        %1929 = vmatpush1.bf16.msra.mxu0 %v1909
        %1930 = vmatprep.subr.bf16.mxu0 0
        %1931 = vmatpush1.bf16.msra.mxu0 %v1910
        %1932 = vmatprep.subr.bf16.mxu0 0
        %1933 = vmatpush1.bf16.msra.mxu0 %v1911
        %1934 = vmatprep.subr.bf16.mxu0 0
        %1935 = vmatpush1.bf16.msra.mxu0 %v1912
        %1936 = vmatprep.subr.bf16.mxu0 0
        %1937 = vmatpush1.bf16.msra.mxu0 %v1913
        %1938 = vmatprep.subr.bf16.mxu0 0
        %1939 = vmatpush1.bf16.msra.mxu0 0
        %1940 = vmatprep.subr.bf16.mxu0 0
        %1941 = vmatpush1.bf16.msra.mxu0 0
        %1942 = vmatprep.subr.bf16.mxu0 0
        %1943 = vmatpush1.bf16.msra.mxu0 0
        %1944 = vmatprep.subr.bf16.mxu0 0
        %1945 = vmatpush1.bf16.msra.mxu0 0
        %1946 = vmatprep.subr.bf16.mxu0 0
        %1947 = vmatpush1.bf16.msra.mxu0 0
        %1948 = vmatprep.subr.bf16.mxu0 0
        %1949 = vmatpush1.bf16.msra.mxu0 0
        %1950 = vmatprep.subr.bf16.mxu0 0
        %1951 = vmatpush1.bf16.msra.mxu0 0
        %1952 = vmatprep.subr.bf16.mxu0 0
        %1953 = vmatpush1.bf16.msra.mxu0 0
        %1954 = vmatprep.mubr.bf16.mxu0 0
        %1955 = vmatmul.mubr.bf16.gmra.mrb[0].mxu0 %v1850
        %v1956 = vpop.f32.mrb[0].mxu0
        %v1957 = vadd.f32 %v1872, %v1956
        %v1958 = vpop.f32.mrb[0].mxu0
        %v1959 = vpop.f32.mrb[0].mxu0
        %v1960 = vadd.f32 %v1872, %v1959
        %v1961 = vpop.f32.mrb[0].mxu0
        %1962 = vdwg.mxu0
        %v1963 = vadd.f32 %v1726, %v1957
        %v1964 = vadd.f32 %v1727, %v1960
        %1965 = vst.msk [vmem:[%s616] sm:$0xff] %vm624, %v1963
        %1966 = vst.msk [vmem:[%s616 + $0x8] sm:$0xff] %vm624, %v1964
        %s1967 = sand.u32 %s322, 1
        %s1968 = scalar_lea.sflag [#allocation4], %s1967
        %s1969 = sand.u32 %s322, 1
        %s1970 = smul.addr %s1969, 16
        %s1971 = scalar_lea.vmem [#allocation23], %s1970
        // Predicated region
        $region125: #{tpu_custom_call.1} parent=71 // pred_check
          %p1972 = pneg %p332
        $region126: #{tpu_custom_call.1} parent=71 // pred_check_branch
          %1974 = sbr.rel (%p1972) target = $region128
        $region127: #{tpu_custom_call.1} parent=71 // pred_region
          %s1975 = smul.u32 2, %s36
          %s1977 = ssub.s32 256, 256
          %1978 = vsyncadd %s1968, %s1977
          %s1979 = smul.addr %s1975, 128
          %s1980 = scalar_lea.hbm %s13, %s1979
          %s1981 = sshll.u32 %s1971, 4
          %s1982 = int_to_ptr.vmem [resolvable:$true] %s1981
          %1987 = dma.vmem_to_hbm [thread:$0]  %s1982, 256, %s1980, %s1968, 128, 128, 8
        $region128: #{tpu_custom_call.1} parent=71 // pred_fallthru
          _
      $region72: #{tpu_custom_call.1} parent=5 // pred_fallthru
        _
      %p1988 = scmp.le.s32.totalorder 2, %s31
      // Predicated region
      $region129: #{tpu_custom_call.1} parent=5 // pred_check
        %p1989 = pneg %p1988
      $region130: #{tpu_custom_call.1} parent=5 // pred_check_branch
        %1991 = sbr.rel (%p1989) target = $region132
      $region131: #{tpu_custom_call.1} parent=5 // pred_region
        %s1992 = ssub.s32 %s31, 2
        // Predicated region
        $region133: #{tpu_custom_call.1} parent=131 // pred_check
          %p1993 = pneg %p338
        $region134: #{tpu_custom_call.1} parent=131 // pred_check_branch
          %1995 = sbr.rel (%p1993) target = $region136
        $region135: #{tpu_custom_call.1} parent=131 // pred_region
          %s1996 = sand.u32 %s323, 1
          %s1997 = scalar_lea.sflag [#allocation4], %s1996
          %s1998 = sand.u32 %s323, 1
          %s1999 = smul.addr %s1998, 16
          %s2000 = scalar_lea.vmem [#allocation23], %s1999
          %2001 = dma.done %s1997, 256
        $region136: #{tpu_custom_call.1} parent=131 // pred_fallthru
          _
      $region132: #{tpu_custom_call.1} parent=5 // pred_fallthru
        _
    $region6: #{tpu_custom_call.1} parent=1 // loop_footer
      %s35 = sadd.s32 1, %s31
    $region7: #{tpu_custom_call.1} parent=1 // loop_footer_branch
      %30 = sbr.rel target = $region3
    $region8: #{tpu_custom_call.1} parent=1 // loop_exit
      _
    %2002 = vsyncpa [#allocation3], 1
    %s2003 = scalar_lea.sflag [#allocation3], 1
    %2004 = vsyncpa %s2003, 1
    %2005 = vsyncpa [#allocation6], 1
    %2006 = vsyncpa [#allocation9], 1
    %2007 = vsyncpa [#allocation12], 1
    %2008 = vsyncpa [#allocation15], 1
    %2009 = vsyncpa [#allocation18], 1
    %2010 = vsyncpa [#allocation21], 1
    %2011 = vsyncpa [#allocation4], 1
    %s2012 = scalar_lea.sflag [#allocation4], 1
    %2013 = vsyncpa %s2012, 1

// kernel: tpu_custom_call.1
$region0: #{tpu_custom_call.1}
  #allocation0 [shape = 'u32[]', space=smem, size = 0x4, offset = 0x4, fixed_abs, tag = 'smem constant byte address 0x4 - core index']
  #allocation1 [shape = 'u32[144,128]{1,0:T(1,128)}', space=vmem, size = 0x12000, scoped, tag = 'internal scratch']
  %s0 = inlined_call_operand.hbm [shape: f32[32,32], index: 0, kind: input, shape index: {}]
  %s1 = inlined_call_operand.hbm [shape: f32[1,32], index: 1, kind: input, shape index: {}]
  %s2 = inlined_call_operand.hbm [shape: f32[1,32], index: 2, kind: input, shape index: {}]
  %s3 = inlined_call_operand.hbm [shape: bf16[32,96], index: 3, kind: input, shape index: {}]
  %s4 = inlined_call_operand.hbm [shape: f32[1,96], index: 4, kind: input, shape index: {}]
  %s5 = inlined_call_operand.hbm [shape: bf16[32,32], index: 5, kind: input, shape index: {}]
  %s6 = inlined_call_operand.hbm [shape: f32[1,32], index: 6, kind: input, shape index: {}]
  %s7 = inlined_call_operand.hbm [shape: f32[1,32], index: 7, kind: input, shape index: {}]
  %s8 = inlined_call_operand.hbm [shape: f32[1,32], index: 8, kind: input, shape index: {}]
  %s9 = inlined_call_operand.hbm [shape: bf16[32,128], index: 9, kind: input, shape index: {}]
  %s10 = inlined_call_operand.hbm [shape: f32[1,128], index: 10, kind: input, shape index: {}]
  %s11 = inlined_call_operand.hbm [shape: bf16[128,32], index: 11, kind: input, shape index: {}]
  %s12 = inlined_call_operand.hbm [shape: f32[1,32], index: 12, kind: input, shape index: {}]
  %s13 = inlined_call_operand.hbm [shape: f32[32,32], index: 13, kind: output, shape index: {}]
  %s14 = sld [smem:[#allocation0]]
  $region137: #{tpu_custom_call.1} parent=0
    _
  %s16 = ssub.s32 1, %s14
  %s17 = scalar_select 0, %s16, %s14
  $region1: #{tpu_custom_call.1} parent=0
    #allocation2 [shape = 'u8[16384]{0}', space=vmem, size = 0x4000, scoped, tag = 'input window, operand 0']
    #allocation3 [shape = 's32[2]{0}', space=sflag, size = 0x8, scoped, tag = 'scoped memory for tpu_custom_call.1']
    #allocation4 [shape = 's32[2]{0}', space=sflag, size = 0x8, scoped, tag = 'scoped memory for tpu_custom_call.1']
    #allocation5 [shape = 'u8[512]{0}', space=vmem, size = 0x400, scoped, tag = 'input window, operand 1, single buffered']
    #allocation6 [shape = 's32[1]{0}', space=sflag, size = 0x4, scoped, tag = 'scoped memory for tpu_custom_call.1']
    #allocation7 [shape = 'u8[512]{0}', space=vmem, size = 0x400, scoped, tag = 'input window, operand 2, single buffered']
    #allocation8 [shape = 'u8[8192]{0}', space=vmem, size = 0x2000, scoped, tag = 'input window, operand 3, single buffered']
    #allocation9 [shape = 's32[1]{0}', space=sflag, size = 0x4, scoped, tag = 'scoped memory for tpu_custom_call.1']
    #allocation10 [shape = 'u8[512]{0}', space=vmem, size = 0x400, scoped, tag = 'input window, operand 4, single buffered']
    #allocation11 [shape = 'u8[8192]{0}', space=vmem, size = 0x2000, scoped, tag = 'input window, operand 5, single buffered']
    #allocation12 [shape = 's32[1]{0}', space=sflag, size = 0x4, scoped, tag = 'scoped memory for tpu_custom_call.1']
    #allocation13 [shape = 'u8[512]{0}', space=vmem, size = 0x400, scoped, tag = 'input window, operand 6, single buffered']
    #allocation14 [shape = 'u8[512]{0}', space=vmem, size = 0x400, scoped, tag = 'input window, operand 7, single buffered']
    #allocation15 [shape = 's32[1]{0}', space=sflag, size = 0x4, scoped, tag = 'scoped memory for tpu_custom_call.1']
    #allocation16 [shape = 'u8[512]{0}', space=vmem, size = 0x400, scoped, tag = 'input window, operand 8, single buffered']
    #allocation17 [shape = 'u8[8192]{0}', space=vmem, size = 0x2000, scoped, tag = 'input window, operand 9, single buffered']
    #allocation18 [shape = 's32[1]{0}', space=sflag, size = 0x4, scoped, tag = 'scoped memory for tpu_custom_call.1']
    #allocation19 [shape = 'u8[512]{0}', space=vmem, size = 0x400, scoped, tag = 'input window, operand 10, single buffered']
    #allocation20 [shape = 'u8[32768]{0}', space=vmem, size = 0x8000, scoped, tag = 'input window, operand 11, single buffered']
    #allocation21 [shape = 's32[1]{0}', space=sflag, size = 0x4, scoped, tag = 'scoped memory for tpu_custom_call.1']
    #allocation22 [shape = 'u8[512]{0}', space=vmem, size = 0x400, scoped, tag = 'input window, operand 12, single buffered']
    #allocation23 [shape = 'u8[16384]{0}', space=vmem, size = 0x4000, scoped, tag = 'output window, operand 0']
    %18 = vsyncpa [#allocation3], 0
    %s19 = scalar_lea.sflag [#allocation3], 1
    %20 = vsyncpa %s19, 0
    %21 = vsyncpa [#allocation6], 0
    %22 = vsyncpa [#allocation9], 0
    %23 = vsyncpa [#allocation12], 0
    %24 = vsyncpa [#allocation15], 0
    %25 = vsyncpa [#allocation18], 0
    %26 = vsyncpa [#allocation21], 0
    %27 = vsyncpa [#allocation4], 0
    %s28 = scalar_lea.sflag [#allocation4], 1
    %29 = vsyncpa %s28, 0
    loop: start=0, step=1, limit=4
    $region2: #{tpu_custom_call.1} parent=1 // loop_pre_header
      _
    $region3: #{tpu_custom_call.1} parent=1 // loop_header
      %s31 = sphi 0, %s35
      %p32 = scmp.ge.s32.totalorder %s31, 4
      %s41 = sphi 0, %s43
      %s44 = sphi 0, %s41
      %s45 = sphi 0, %s44
      %s61 = sphi 0, %s45
      %s65 = sphi 0, %s65
      %s67 = sphi 0, %s65
      %s68 = sphi 0, %s67
      %s82 = sphi 0, %s68
      %s86 = sphi 0, %s86
      %s88 = sphi 0, %s86
      %s89 = sphi 0, %s88
      %s103 = sphi 0, %s89
      %s107 = sphi 0, %s107
      %s109 = sphi 0, %s107
      %s110 = sphi 0, %s109
      %s124 = sphi 0, %s110
      %s128 = sphi 0, %s128
      %s130 = sphi 0, %s128
      %s131 = sphi 0, %s130
      %s145 = sphi 0, %s131
      %s149 = sphi 0, %s149
      %s151 = sphi 0, %s149
      %s152 = sphi 0, %s151
      %s166 = sphi 0, %s152
      %s170 = sphi 0, %s170
      %s172 = sphi 0, %s170
      %s173 = sphi 0, %s172
      %s187 = sphi 0, %s173
      %s191 = sphi 0, %s191
      %s193 = sphi 0, %s191
      %s194 = sphi 0, %s193
      %s208 = sphi 0, %s194
      %s212 = sphi 0, %s212
      %s214 = sphi 0, %s212
      %s215 = sphi 0, %s214
      %s229 = sphi 0, %s215
      %s233 = sphi 0, %s233
      %s235 = sphi 0, %s233
      %s236 = sphi 0, %s235
      %s250 = sphi 0, %s236
      %s254 = sphi 0, %s254
      %s256 = sphi 0, %s254
      %s257 = sphi 0, %s256
      %s271 = sphi 0, %s257
      %s275 = sphi 0, %s275
      %s277 = sphi 0, %s275
      %s278 = sphi 0, %s277
      %s292 = sphi 0, %s278
      %s296 = sphi 0, %s296
      %s298 = sphi 0, %s296
      %s299 = sphi 0, %s298
      %s313 = sphi 0, %s299
      %s319 = sphi 0, %s321
      %s322 = sphi 0, %s319
      %s323 = sphi 0, %s322
      %s339 = sphi 0, %s323
    $region4: #{tpu_custom_call.1} parent=1 // loop_header_branch
      %34 = sbr.rel (%p32) target = $region8
    $region5: #{tpu_custom_call.1} parent=1 // loop_body
      %s36 = ssub.s32 %s31, 1
      %s37 = ssub.s32 %s31, 2
      %s38 = sadd.s32 %s31, 1
      %s39 = ssub.s32 %s31, %s38
      %p40 = scmp.eq.s32.totalorder %s39, 0
      %s42 = sadd.s32 %s41, 1
      %s43 = scalar_select %p40, %s41, %s42
      %p46 = pneg %p40
      %p47 = scmp.eq.s32.totalorder %s31, 1
      %p48 = por %p46, %p47
      %p49 = scmp.ne.s32.totalorder %s41, %s44
      %p50 = scmp.eq.s32.totalorder %s31, 0
      %p51 = por %p49, %p50
      %p52 = scmp.ne.s32.totalorder %s41, %s44
      %p53 = scmp.eq.s32.totalorder %s36, 1
      %p54 = por %p52, %p53
      %p55 = scmp.ne.s32.totalorder %s44, %s45
      %p56 = scmp.eq.s32.totalorder %s36, 0
      %p57 = por %p55, %p56
      %p58 = scmp.ne.s32.totalorder %s44, %s45
      %p59 = scmp.eq.s32.totalorder %s37, 1
      %p60 = por %p58, %p59
      %p62 = scmp.ne.s32.totalorder %s45, %s61
      %p63 = scmp.eq.s32.totalorder %s37, 0
      %p64 = por %p62, %p63
      %s66 = sadd.s32 %s65, 1
      %p69 = scmp.eq.s32.totalorder %s31, 1
      %p70 = scmp.ne.s32.totalorder %s65, %s67
      %p71 = scmp.eq.s32.totalorder %s31, 0
      %p72 = por %p70, %p71
      %p73 = scmp.ne.s32.totalorder %s65, %s67
      %p74 = scmp.eq.s32.totalorder %s36, 1
      %p75 = por %p73, %p74
      %p76 = scmp.ne.s32.totalorder %s67, %s68
      %p77 = scmp.eq.s32.totalorder %s36, 0
      %p78 = por %p76, %p77
      %p79 = scmp.ne.s32.totalorder %s67, %s68
      %p80 = scmp.eq.s32.totalorder %s37, 1
      %p81 = por %p79, %p80
      %p83 = scmp.ne.s32.totalorder %s68, %s82
      %p84 = scmp.eq.s32.totalorder %s37, 0
      %p85 = por %p83, %p84
      %s87 = sadd.s32 %s86, 1
      %p90 = scmp.eq.s32.totalorder %s31, 1
      %p91 = scmp.ne.s32.totalorder %s86, %s88
      %p92 = scmp.eq.s32.totalorder %s31, 0
      %p93 = por %p91, %p92
      %p94 = scmp.ne.s32.totalorder %s86, %s88
      %p95 = scmp.eq.s32.totalorder %s36, 1
      %p96 = por %p94, %p95
      %p97 = scmp.ne.s32.totalorder %s88, %s89
      %p98 = scmp.eq.s32.totalorder %s36, 0
      %p99 = por %p97, %p98
      %p100 = scmp.ne.s32.totalorder %s88, %s89
      %p101 = scmp.eq.s32.totalorder %s37, 1
      %p102 = por %p100, %p101
      %p104 = scmp.ne.s32.totalorder %s89, %s103
      %p105 = scmp.eq.s32.totalorder %s37, 0
      %p106 = por %p104, %p105
      %s108 = sadd.s32 %s107, 1
      %p111 = scmp.eq.s32.totalorder %s31, 1
      %p112 = scmp.ne.s32.totalorder %s107, %s109
      %p113 = scmp.eq.s32.totalorder %s31, 0
      %p114 = por %p112, %p113
      %p115 = scmp.ne.s32.totalorder %s107, %s109
      %p116 = scmp.eq.s32.totalorder %s36, 1
      %p117 = por %p115, %p116
      %p118 = scmp.ne.s32.totalorder %s109, %s110
      %p119 = scmp.eq.s32.totalorder %s36, 0
      %p120 = por %p118, %p119
      %p121 = scmp.ne.s32.totalorder %s109, %s110
      %p122 = scmp.eq.s32.totalorder %s37, 1
      %p123 = por %p121, %p122
      %p125 = scmp.ne.s32.totalorder %s110, %s124
      %p126 = scmp.eq.s32.totalorder %s37, 0
      %p127 = por %p125, %p126
      %s129 = sadd.s32 %s128, 1
      %p132 = scmp.eq.s32.totalorder %s31, 1
      %p133 = scmp.ne.s32.totalorder %s128, %s130
      %p134 = scmp.eq.s32.totalorder %s31, 0
      %p135 = por %p133, %p134
      %p136 = scmp.ne.s32.totalorder %s128, %s130
      %p137 = scmp.eq.s32.totalorder %s36, 1
      %p138 = por %p136, %p137
      %p139 = scmp.ne.s32.totalorder %s130, %s131
      %p140 = scmp.eq.s32.totalorder %s36, 0
      %p141 = por %p139, %p140
      %p142 = scmp.ne.s32.totalorder %s130, %s131
      %p143 = scmp.eq.s32.totalorder %s37, 1
      %p144 = por %p142, %p143
      %p146 = scmp.ne.s32.totalorder %s131, %s145
      %p147 = scmp.eq.s32.totalorder %s37, 0
      %p148 = por %p146, %p147
      %s150 = sadd.s32 %s149, 1
      %p153 = scmp.eq.s32.totalorder %s31, 1
      %p154 = scmp.ne.s32.totalorder %s149, %s151
      %p155 = scmp.eq.s32.totalorder %s31, 0
      %p156 = por %p154, %p155
      %p157 = scmp.ne.s32.totalorder %s149, %s151
      %p158 = scmp.eq.s32.totalorder %s36, 1
      %p159 = por %p157, %p158
      %p160 = scmp.ne.s32.totalorder %s151, %s152
      %p161 = scmp.eq.s32.totalorder %s36, 0
      %p162 = por %p160, %p161
      %p163 = scmp.ne.s32.totalorder %s151, %s152
      %p164 = scmp.eq.s32.totalorder %s37, 1
      %p165 = por %p163, %p164
      %p167 = scmp.ne.s32.totalorder %s152, %s166
      %p168 = scmp.eq.s32.totalorder %s37, 0
      %p169 = por %p167, %p168
      %s171 = sadd.s32 %s170, 1
      %p174 = scmp.eq.s32.totalorder %s31, 1
      %p175 = scmp.ne.s32.totalorder %s170, %s172
      %p176 = scmp.eq.s32.totalorder %s31, 0
      %p177 = por %p175, %p176
      %p178 = scmp.ne.s32.totalorder %s170, %s172
      %p179 = scmp.eq.s32.totalorder %s36, 1
      %p180 = por %p178, %p179
      %p181 = scmp.ne.s32.totalorder %s172, %s173
      %p182 = scmp.eq.s32.totalorder %s36, 0
      %p183 = por %p181, %p182
      %p184 = scmp.ne.s32.totalorder %s172, %s173
      %p185 = scmp.eq.s32.totalorder %s37, 1
      %p186 = por %p184, %p185
      %p188 = scmp.ne.s32.totalorder %s173, %s187
      %p189 = scmp.eq.s32.totalorder %s37, 0
      %p190 = por %p188, %p189
      %s192 = sadd.s32 %s191, 1
      %p195 = scmp.eq.s32.totalorder %s31, 1
      %p196 = scmp.ne.s32.totalorder %s191, %s193
      %p197 = scmp.eq.s32.totalorder %s31, 0
      %p198 = por %p196, %p197
      %p199 = scmp.ne.s32.totalorder %s191, %s193
      %p200 = scmp.eq.s32.totalorder %s36, 1
      %p201 = por %p199, %p200
      %p202 = scmp.ne.s32.totalorder %s193, %s194
      %p203 = scmp.eq.s32.totalorder %s36, 0
      %p204 = por %p202, %p203
      %p205 = scmp.ne.s32.totalorder %s193, %s194
      %p206 = scmp.eq.s32.totalorder %s37, 1
      %p207 = por %p205, %p206
      %p209 = scmp.ne.s32.totalorder %s194, %s208
      %p210 = scmp.eq.s32.totalorder %s37, 0
      %p211 = por %p209, %p210
      %s213 = sadd.s32 %s212, 1
      %p216 = scmp.eq.s32.totalorder %s31, 1
      %p217 = scmp.ne.s32.totalorder %s212, %s214
      %p218 = scmp.eq.s32.totalorder %s31, 0
      %p219 = por %p217, %p218
      %p220 = scmp.ne.s32.totalorder %s212, %s214
      %p221 = scmp.eq.s32.totalorder %s36, 1
      %p222 = por %p220, %p221
      %p223 = scmp.ne.s32.totalorder %s214, %s215
      %p224 = scmp.eq.s32.totalorder %s36, 0
      %p225 = por %p223, %p224
      %p226 = scmp.ne.s32.totalorder %s214, %s215
      %p227 = scmp.eq.s32.totalorder %s37, 1
      %p228 = por %p226, %p227
      %p230 = scmp.ne.s32.totalorder %s215, %s229
      %p231 = scmp.eq.s32.totalorder %s37, 0
      %p232 = por %p230, %p231
      %s234 = sadd.s32 %s233, 1
      %p237 = scmp.eq.s32.totalorder %s31, 1
      %p238 = scmp.ne.s32.totalorder %s233, %s235
      %p239 = scmp.eq.s32.totalorder %s31, 0
      %p240 = por %p238, %p239
      %p241 = scmp.ne.s32.totalorder %s233, %s235
      %p242 = scmp.eq.s32.totalorder %s36, 1
      %p243 = por %p241, %p242
      %p244 = scmp.ne.s32.totalorder %s235, %s236
      %p245 = scmp.eq.s32.totalorder %s36, 0
      %p246 = por %p244, %p245
      %p247 = scmp.ne.s32.totalorder %s235, %s236
      %p248 = scmp.eq.s32.totalorder %s37, 1
      %p249 = por %p247, %p248
      %p251 = scmp.ne.s32.totalorder %s236, %s250
      %p252 = scmp.eq.s32.totalorder %s37, 0
      %p253 = por %p251, %p252
      %s255 = sadd.s32 %s254, 1
      %p258 = scmp.eq.s32.totalorder %s31, 1
      %p259 = scmp.ne.s32.totalorder %s254, %s256
      %p260 = scmp.eq.s32.totalorder %s31, 0
      %p261 = por %p259, %p260
      %p262 = scmp.ne.s32.totalorder %s254, %s256
      %p263 = scmp.eq.s32.totalorder %s36, 1
      %p264 = por %p262, %p263
      %p265 = scmp.ne.s32.totalorder %s256, %s257
      %p266 = scmp.eq.s32.totalorder %s36, 0
      %p267 = por %p265, %p266
      %p268 = scmp.ne.s32.totalorder %s256, %s257
      %p269 = scmp.eq.s32.totalorder %s37, 1
      %p270 = por %p268, %p269
      %p272 = scmp.ne.s32.totalorder %s257, %s271
      %p273 = scmp.eq.s32.totalorder %s37, 0
      %p274 = por %p272, %p273
      %s276 = sadd.s32 %s275, 1
      %p279 = scmp.eq.s32.totalorder %s31, 1
      %p280 = scmp.ne.s32.totalorder %s275, %s277
      %p281 = scmp.eq.s32.totalorder %s31, 0
      %p282 = por %p280, %p281
      %p283 = scmp.ne.s32.totalorder %s275, %s277
      %p284 = scmp.eq.s32.totalorder %s36, 1
      %p285 = por %p283, %p284
      %p286 = scmp.ne.s32.totalorder %s277, %s278
      %p287 = scmp.eq.s32.totalorder %s36, 0
      %p288 = por %p286, %p287
      %p289 = scmp.ne.s32.totalorder %s277, %s278
      %p290 = scmp.eq.s32.totalorder %s37, 1
      %p291 = por %p289, %p290
      %p293 = scmp.ne.s32.totalorder %s278, %s292
      %p294 = scmp.eq.s32.totalorder %s37, 0
      %p295 = por %p293, %p294
      %s297 = sadd.s32 %s296, 1
      %p300 = scmp.eq.s32.totalorder %s31, 1
      %p301 = scmp.ne.s32.totalorder %s296, %s298
      %p302 = scmp.eq.s32.totalorder %s31, 0
      %p303 = por %p301, %p302
      %p304 = scmp.ne.s32.totalorder %s296, %s298
      %p305 = scmp.eq.s32.totalorder %s36, 1
      %p306 = por %p304, %p305
      %p307 = scmp.ne.s32.totalorder %s298, %s299
      %p308 = scmp.eq.s32.totalorder %s36, 0
      %p309 = por %p307, %p308
      %p310 = scmp.ne.s32.totalorder %s298, %s299
      %p311 = scmp.eq.s32.totalorder %s37, 1
      %p312 = por %p310, %p311
      %p314 = scmp.ne.s32.totalorder %s299, %s313
      %p315 = scmp.eq.s32.totalorder %s37, 0
      %p316 = por %p314, %p315
      %s317 = ssub.s32 %s31, %s38
      %p318 = scmp.eq.s32.totalorder %s317, 0
      %s320 = sadd.s32 %s319, 1
      %s321 = scalar_select %p318, %s319, %s320
      %p324 = pneg %p318
      %p325 = scmp.eq.s32.totalorder %s31, 1
      %p326 = por %p324, %p325
      %p327 = scmp.ne.s32.totalorder %s319, %s322
      %p328 = scmp.eq.s32.totalorder %s31, 0
      %p329 = por %p327, %p328
      %p330 = scmp.ne.s32.totalorder %s319, %s322
      %p331 = scmp.eq.s32.totalorder %s36, 1
      %p332 = por %p330, %p331
      %p333 = scmp.ne.s32.totalorder %s322, %s323
      %p334 = scmp.eq.s32.totalorder %s36, 0
      %p335 = por %p333, %p334
      %p336 = scmp.ne.s32.totalorder %s322, %s323
      %p337 = scmp.eq.s32.totalorder %s37, 1
      %p338 = por %p336, %p337
      %p340 = scmp.ne.s32.totalorder %s323, %s339
      %p341 = scmp.eq.s32.totalorder %s37, 0
      %p342 = por %p340, %p341
      %p343 = scmp.le.s32.totalorder 1, %s31
      %p344 = scmp.lt.s32.totalorder %s31, 3
      %p345 = pnand %p343, %p344
      %p346 = pneg %p345
      // Predicated region
      $region9: #{tpu_custom_call.1} parent=5 // pred_check
        _
      $region10: #{tpu_custom_call.1} parent=5 // pred_check_branch
        %348 = sbr.rel (%p345) target = $region12
      $region11: #{tpu_custom_call.1} parent=5 // pred_region
        %s349 = ssub.s32 %s31, 1
        // Predicated region
        $region13: #{tpu_custom_call.1} parent=11 // pred_check
          %p350 = pneg %p78
        $region14: #{tpu_custom_call.1} parent=11 // pred_check_branch
          %352 = sbr.rel (%p350) target = $region16
        $region15: #{tpu_custom_call.1} parent=11 // pred_region
          %s354 = ssub.s32 16, 16
          %355 = vsyncadd [#allocation6], %s354
          %s357 = sshll.u32 [#allocation5], 4
          %s358 = int_to_ptr.vmem [resolvable:$true] %s357
          %360 = dma.hbm_to_vmem [thread:$0]  %s1, 16, %s358, [#allocation6]
        $region16: #{tpu_custom_call.1} parent=11 // pred_fallthru
          _
        // Predicated region
        $region17: #{tpu_custom_call.1} parent=11 // pred_check
          %p361 = pneg %p99
        $region18: #{tpu_custom_call.1} parent=11 // pred_check_branch
          %363 = sbr.rel (%p361) target = $region20
        $region19: #{tpu_custom_call.1} parent=11 // pred_region
          %s365 = ssub.s32 16, 16
          %366 = vsyncadd [#allocation6], %s365
          %s368 = sshll.u32 [#allocation7], 4
          %s369 = int_to_ptr.vmem [resolvable:$true] %s368
          %371 = dma.hbm_to_vmem [thread:$0]  %s2, 16, %s369, [#allocation6]
        $region20: #{tpu_custom_call.1} parent=11 // pred_fallthru
          _
        // Predicated region
        $region21: #{tpu_custom_call.1} parent=11 // pred_check
          %p372 = pneg %p120
        $region22: #{tpu_custom_call.1} parent=11 // pred_check_branch
          %374 = sbr.rel (%p372) target = $region24
        $region23: #{tpu_custom_call.1} parent=11 // pred_region
          %s376 = ssub.s32 256, 256
          %377 = vsyncadd [#allocation9], %s376
          %s378 = sshll.u32 [#allocation8], 4
          %s379 = int_to_ptr.vmem [resolvable:$true] %s378
          %384 = dma.hbm_to_vmem [thread:$0]  %s3, 256, %s379, [#allocation9], 64, 64, 4
        $region24: #{tpu_custom_call.1} parent=11 // pred_fallthru
          _
        // Predicated region
        $region25: #{tpu_custom_call.1} parent=11 // pred_check
          %p385 = pneg %p141
        $region26: #{tpu_custom_call.1} parent=11 // pred_check_branch
          %387 = sbr.rel (%p385) target = $region28
        $region27: #{tpu_custom_call.1} parent=11 // pred_region
          %s389 = ssub.s32 16, 16
          %390 = vsyncadd [#allocation9], %s389
          %s392 = sshll.u32 [#allocation10], 4
          %s393 = int_to_ptr.vmem [resolvable:$true] %s392
          %395 = dma.hbm_to_vmem [thread:$0]  %s4, 16, %s393, [#allocation9]
        $region28: #{tpu_custom_call.1} parent=11 // pred_fallthru
          _
        // Predicated region
        $region29: #{tpu_custom_call.1} parent=11 // pred_check
          %p396 = pneg %p162
        $region30: #{tpu_custom_call.1} parent=11 // pred_check_branch
          %398 = sbr.rel (%p396) target = $region32
        $region31: #{tpu_custom_call.1} parent=11 // pred_region
          %s400 = ssub.s32 256, 256
          %401 = vsyncadd [#allocation12], %s400
          %s402 = sshll.u32 [#allocation11], 4
          %s403 = int_to_ptr.vmem [resolvable:$true] %s402
          %408 = dma.hbm_to_vmem [thread:$0]  %s5, 256, %s403, [#allocation12], 64, 64, 4
        $region32: #{tpu_custom_call.1} parent=11 // pred_fallthru
          _
        // Predicated region
        $region33: #{tpu_custom_call.1} parent=11 // pred_check
          %p409 = pneg %p183
        $region34: #{tpu_custom_call.1} parent=11 // pred_check_branch
          %411 = sbr.rel (%p409) target = $region36
        $region35: #{tpu_custom_call.1} parent=11 // pred_region
          %s413 = ssub.s32 16, 16
          %414 = vsyncadd [#allocation12], %s413
          %s416 = sshll.u32 [#allocation13], 4
          %s417 = int_to_ptr.vmem [resolvable:$true] %s416
          %419 = dma.hbm_to_vmem [thread:$0]  %s6, 16, %s417, [#allocation12]
        $region36: #{tpu_custom_call.1} parent=11 // pred_fallthru
          _
        // Predicated region
        $region37: #{tpu_custom_call.1} parent=11 // pred_check
          %p420 = pneg %p204
        $region38: #{tpu_custom_call.1} parent=11 // pred_check_branch
          %422 = sbr.rel (%p420) target = $region40
        $region39: #{tpu_custom_call.1} parent=11 // pred_region
          %s424 = ssub.s32 16, 16
          %425 = vsyncadd [#allocation15], %s424
          %s427 = sshll.u32 [#allocation14], 4
          %s428 = int_to_ptr.vmem [resolvable:$true] %s427
          %430 = dma.hbm_to_vmem [thread:$0]  %s7, 16, %s428, [#allocation15]
        $region40: #{tpu_custom_call.1} parent=11 // pred_fallthru
          _
        // Predicated region
        $region41: #{tpu_custom_call.1} parent=11 // pred_check
          %p431 = pneg %p225
        $region42: #{tpu_custom_call.1} parent=11 // pred_check_branch
          %433 = sbr.rel (%p431) target = $region44
        $region43: #{tpu_custom_call.1} parent=11 // pred_region
          %s435 = ssub.s32 16, 16
          %436 = vsyncadd [#allocation15], %s435
          %s438 = sshll.u32 [#allocation16], 4
          %s439 = int_to_ptr.vmem [resolvable:$true] %s438
          %441 = dma.hbm_to_vmem [thread:$0]  %s8, 16, %s439, [#allocation15]
        $region44: #{tpu_custom_call.1} parent=11 // pred_fallthru
          _
        // Predicated region
        $region45: #{tpu_custom_call.1} parent=11 // pred_check
          %p442 = pneg %p246
        $region46: #{tpu_custom_call.1} parent=11 // pred_check_branch
          %444 = sbr.rel (%p442) target = $region48
        $region47: #{tpu_custom_call.1} parent=11 // pred_region
          %s446 = ssub.s32 256, 256
          %447 = vsyncadd [#allocation18], %s446
          %s448 = sshll.u32 [#allocation17], 4
          %s449 = int_to_ptr.vmem [resolvable:$true] %s448
          %454 = dma.hbm_to_vmem [thread:$0]  %s9, 256, %s449, [#allocation18], 64, 64, 4
        $region48: #{tpu_custom_call.1} parent=11 // pred_fallthru
          _
        // Predicated region
        $region49: #{tpu_custom_call.1} parent=11 // pred_check
          %p455 = pneg %p267
        $region50: #{tpu_custom_call.1} parent=11 // pred_check_branch
          %457 = sbr.rel (%p455) target = $region52
        $region51: #{tpu_custom_call.1} parent=11 // pred_region
          %s459 = ssub.s32 16, 16
          %460 = vsyncadd [#allocation18], %s459
          %s462 = sshll.u32 [#allocation19], 4
          %s463 = int_to_ptr.vmem [resolvable:$true] %s462
          %465 = dma.hbm_to_vmem [thread:$0]  %s10, 16, %s463, [#allocation18]
        $region52: #{tpu_custom_call.1} parent=11 // pred_fallthru
          _
        // Predicated region
        $region53: #{tpu_custom_call.1} parent=11 // pred_check
          %p466 = pneg %p288
        $region54: #{tpu_custom_call.1} parent=11 // pred_check_branch
          %468 = sbr.rel (%p466) target = $region56
        $region55: #{tpu_custom_call.1} parent=11 // pred_region
          %s470 = ssub.s32 1024, 1024
          %471 = vsyncadd [#allocation21], %s470
          %s472 = sshll.u32 [#allocation20], 4
          %s473 = int_to_ptr.vmem [resolvable:$true] %s472
          %478 = dma.hbm_to_vmem [thread:$0]  %s11, 1024, %s473, [#allocation21], 64, 64, 4
        $region56: #{tpu_custom_call.1} parent=11 // pred_fallthru
          _
        // Predicated region
        $region57: #{tpu_custom_call.1} parent=11 // pred_check
          %p479 = pneg %p309
        $region58: #{tpu_custom_call.1} parent=11 // pred_check_branch
          %481 = sbr.rel (%p479) target = $region60
        $region59: #{tpu_custom_call.1} parent=11 // pred_region
          %s483 = ssub.s32 16, 16
          %484 = vsyncadd [#allocation21], %s483
          %s486 = sshll.u32 [#allocation22], 4
          %s487 = int_to_ptr.vmem [resolvable:$true] %s486
          %489 = dma.hbm_to_vmem [thread:$0]  %s12, 16, %s487, [#allocation21]
        $region60: #{tpu_custom_call.1} parent=11 // pred_fallthru
          _
      $region12: #{tpu_custom_call.1} parent=5 // pred_fallthru
        _
      %p490 = scmp.lt.s32.totalorder %s31, 2
      // Predicated region
      $region61: #{tpu_custom_call.1} parent=5 // pred_check
        %p491 = pneg %p490
      $region62: #{tpu_custom_call.1} parent=5 // pred_check_branch
        %493 = sbr.rel (%p491) target = $region64
      $region63: #{tpu_custom_call.1} parent=5 // pred_region
        // Predicated region
        $region65: #{tpu_custom_call.1} parent=63 // pred_check
          %p494 = pneg %p51
        $region66: #{tpu_custom_call.1} parent=63 // pred_check_branch
          %496 = sbr.rel (%p494) target = $region68
        $region67: #{tpu_custom_call.1} parent=63 // pred_region
          %s497 = sand.u32 %s41, 1
          %s498 = scalar_lea.sflag [#allocation3], %s497
          %s499 = sand.u32 %s41, 1
          %s500 = smul.addr %s499, 16
          %s501 = scalar_lea.vmem [#allocation2], %s500
          %s502 = smul.u32 2, %s31
          %s504 = ssub.s32 256, 256
          %505 = vsyncadd %s498, %s504
          %s506 = smul.addr %s502, 128
          %s507 = scalar_lea.hbm %s0, %s506
          %s508 = sshll.u32 %s501, 4
          %s509 = int_to_ptr.vmem [resolvable:$true] %s508
          %514 = dma.hbm_to_vmem [thread:$0]  %s507, 256, %s509, %s498, 128, 128, 8
        $region68: #{tpu_custom_call.1} parent=63 // pred_fallthru
          _
      $region64: #{tpu_custom_call.1} parent=5 // pred_fallthru
        _
      %p515 = scmp.le.s32.totalorder 1, %s31
      %p516 = scmp.lt.s32.totalorder %s31, 3
      %p517 = pnand %p515, %p516
      %p518 = pneg %p517
      // Predicated region
      $region69: #{tpu_custom_call.1} parent=5 // pred_check
        _
      $region70: #{tpu_custom_call.1} parent=5 // pred_check_branch
        %520 = sbr.rel (%p517) target = $region72
      $region71: #{tpu_custom_call.1} parent=5 // pred_region
        %s521 = ssub.s32 %s31, 1
        %s522 = sand.u32 %s44, 1
        %s523 = scalar_lea.sflag [#allocation3], %s522
        %s524 = sand.u32 %s44, 1
        %s525 = smul.addr %s524, 16
        %s526 = scalar_lea.vmem [#allocation2], %s525
        // Predicated region
        $region73: #{tpu_custom_call.1} parent=71 // pred_check
          %p527 = pneg %p57
        $region74: #{tpu_custom_call.1} parent=71 // pred_check_branch
          %529 = sbr.rel (%p527) target = $region76
        $region75: #{tpu_custom_call.1} parent=71 // pred_region
          %530 = dma.done %s523, 256
        $region76: #{tpu_custom_call.1} parent=71 // pred_fallthru
          _
        // Predicated region
        $region77: #{tpu_custom_call.1} parent=71 // pred_check
          %p531 = pneg %p78
        $region78: #{tpu_custom_call.1} parent=71 // pred_check_branch
          %533 = sbr.rel (%p531) target = $region80
        $region79: #{tpu_custom_call.1} parent=71 // pred_region
          %534 = dma.done [#allocation6], 16
        $region80: #{tpu_custom_call.1} parent=71 // pred_fallthru
          _
        // Predicated region
        $region81: #{tpu_custom_call.1} parent=71 // pred_check
          %p535 = pneg %p99
        $region82: #{tpu_custom_call.1} parent=71 // pred_check_branch
          %537 = sbr.rel (%p535) target = $region84
        $region83: #{tpu_custom_call.1} parent=71 // pred_region
          %538 = dma.done [#allocation6], 16
        $region84: #{tpu_custom_call.1} parent=71 // pred_fallthru
          _
        // Predicated region
        $region85: #{tpu_custom_call.1} parent=71 // pred_check
          %p539 = pneg %p120
        $region86: #{tpu_custom_call.1} parent=71 // pred_check_branch
          %541 = sbr.rel (%p539) target = $region88
        $region87: #{tpu_custom_call.1} parent=71 // pred_region
          %542 = dma.done [#allocation9], 256
        $region88: #{tpu_custom_call.1} parent=71 // pred_fallthru
          _
        // Predicated region
        $region89: #{tpu_custom_call.1} parent=71 // pred_check
          %p543 = pneg %p141
        $region90: #{tpu_custom_call.1} parent=71 // pred_check_branch
          %545 = sbr.rel (%p543) target = $region92
        $region91: #{tpu_custom_call.1} parent=71 // pred_region
          %546 = dma.done [#allocation9], 16
        $region92: #{tpu_custom_call.1} parent=71 // pred_fallthru
          _
        // Predicated region
        $region93: #{tpu_custom_call.1} parent=71 // pred_check
          %p547 = pneg %p162
        $region94: #{tpu_custom_call.1} parent=71 // pred_check_branch
          %549 = sbr.rel (%p547) target = $region96
        $region95: #{tpu_custom_call.1} parent=71 // pred_region
          %550 = dma.done [#allocation12], 256
        $region96: #{tpu_custom_call.1} parent=71 // pred_fallthru
          _
        // Predicated region
        $region97: #{tpu_custom_call.1} parent=71 // pred_check
          %p551 = pneg %p183
        $region98: #{tpu_custom_call.1} parent=71 // pred_check_branch
          %553 = sbr.rel (%p551) target = $region100
        $region99: #{tpu_custom_call.1} parent=71 // pred_region
          %554 = dma.done [#allocation12], 16
        $region100: #{tpu_custom_call.1} parent=71 // pred_fallthru
          _
        // Predicated region
        $region101: #{tpu_custom_call.1} parent=71 // pred_check
          %p555 = pneg %p204
        $region102: #{tpu_custom_call.1} parent=71 // pred_check_branch
          %557 = sbr.rel (%p555) target = $region104
        $region103: #{tpu_custom_call.1} parent=71 // pred_region
          %558 = dma.done [#allocation15], 16
        $region104: #{tpu_custom_call.1} parent=71 // pred_fallthru
          _
        // Predicated region
        $region105: #{tpu_custom_call.1} parent=71 // pred_check
          %p559 = pneg %p225
        $region106: #{tpu_custom_call.1} parent=71 // pred_check_branch
          %561 = sbr.rel (%p559) target = $region108
        $region107: #{tpu_custom_call.1} parent=71 // pred_region
          %562 = dma.done [#allocation15], 16
        $region108: #{tpu_custom_call.1} parent=71 // pred_fallthru
          _
        // Predicated region
        $region109: #{tpu_custom_call.1} parent=71 // pred_check
          %p563 = pneg %p246
        $region110: #{tpu_custom_call.1} parent=71 // pred_check_branch
          %565 = sbr.rel (%p563) target = $region112
        $region111: #{tpu_custom_call.1} parent=71 // pred_region
          %566 = dma.done [#allocation18], 256
        $region112: #{tpu_custom_call.1} parent=71 // pred_fallthru
          _
        // Predicated region
        $region113: #{tpu_custom_call.1} parent=71 // pred_check
          %p567 = pneg %p267
        $region114: #{tpu_custom_call.1} parent=71 // pred_check_branch
          %569 = sbr.rel (%p567) target = $region116
        $region115: #{tpu_custom_call.1} parent=71 // pred_region
          %570 = dma.done [#allocation18], 16
        $region116: #{tpu_custom_call.1} parent=71 // pred_fallthru
          _
        // Predicated region
        $region117: #{tpu_custom_call.1} parent=71 // pred_check
          %p571 = pneg %p288
        $region118: #{tpu_custom_call.1} parent=71 // pred_check_branch
          %573 = sbr.rel (%p571) target = $region120
        $region119: #{tpu_custom_call.1} parent=71 // pred_region
          %574 = dma.done [#allocation21], 1024
        $region120: #{tpu_custom_call.1} parent=71 // pred_fallthru
          _
        // Predicated region
        $region121: #{tpu_custom_call.1} parent=71 // pred_check
          %p575 = pneg %p309
        $region122: #{tpu_custom_call.1} parent=71 // pred_check_branch
          %577 = sbr.rel (%p575) target = $region124
        $region123: #{tpu_custom_call.1} parent=71 // pred_region
          %578 = dma.done [#allocation21], 16
        $region124: #{tpu_custom_call.1} parent=71 // pred_fallthru
          _
        %s579 = sand.u32 %s44, 1
        %s580 = scalar_lea.sflag [#allocation3], %s579
        %s581 = sand.u32 %s44, 1
        %s582 = smul.addr %s581, 16
        %s583 = scalar_lea.vmem [#allocation2], %s582
        %p584 = pneg %p57
        %p585 = pneg %p54
        %p586 = pneg %p78
        %p587 = pneg %p75
        %p588 = pneg %p99
        %p589 = pneg %p96
        %p590 = pneg %p120
        %p591 = pneg %p117
        %p592 = pneg %p141
        %p593 = pneg %p138
        %p594 = pneg %p162
        %p595 = pneg %p159
        %p596 = pneg %p183
        %p597 = pneg %p180
        %p598 = pneg %p204
        %p599 = pneg %p201
        %p600 = pneg %p225
        %p601 = pneg %p222
        %p602 = pneg %p246
        %p603 = pneg %p243
        %p604 = pneg %p267
        %p605 = pneg %p264
        %p606 = pneg %p288
        %p607 = pneg %p285
        %p608 = pneg %p309
        %p609 = pneg %p306
        %p610 = pneg %p335
        %p611 = pneg %p332
        %s612 = sand.u32 %s322, 1
        %s613 = scalar_lea.sflag [#allocation4], %s612
        %s614 = sand.u32 %s322, 1
        %s615 = smul.addr %s614, 16
        %s616 = scalar_lea.vmem [#allocation23], %s615
        %s617 = smul.u32 2, %s36
        %s618 = smul.u32 2, %s36
        %v620 = vld [vmem:[%s526] sm:$0xff]
        %v621 = vld [vmem:[%s526 + $0x8] sm:$0xff]
        %v622 = vld [vmem:[#allocation5] sm:$0x1]
        %v623 = vld [vmem:[#allocation7] sm:$0x1]
        %vm624 = vcmask 261120
        %v625 = vsel %vm624, %v620, 0.0
        %626 = vadd.xlane.f32.xlu0 %v625
        %v627 = vpop.xlane.xlu0 %626
        %v628 = vsel %vm624, %v621, 0.0
        %629 = vadd.xlane.f32.xlu0 %v628
        %v630 = vpop.xlane.xlu0 %629
        %v631 = vrcp.pop 32.0
        %v632 = vmul.f32 %v627, %v631
        %v633 = vmul.f32 %v630, %v631
        %v634 = vsub.f32 %v620, %v632
        %v635 = vsub.f32 %v621, %v633
        %v636 = vmul.f32 %v634, %v634
        %v637 = vmul.f32 %v635, %v635
        %v638 = vsel %vm624, %v636, 0.0
        %639 = vadd.xlane.f32.xlu0 %v638
        %v640 = vpop.xlane.xlu0 %639
        %v641 = vsel %vm624, %v637, 0.0
        %642 = vadd.xlane.f32.xlu0 %v641
        %v643 = vpop.xlane.xlu0 %642
        %v644 = vmul.f32 %v640, %v631
        %v645 = vmul.f32 %v643, %v631
        %v646 = vadd.f32 %v644, 1e-05
        %v647 = vadd.f32 %v645, 1e-05
        %v648 = vrsqrt.pop %v646
        %v649 = vrsqrt.pop %v647
        %v650 = vmul.f32 %v634, %v648
        %v651 = vmul.f32 %v635, %v649
        %v653 = vlaneseq
        %v654 = vshrl.u32 %v653, 7
        %v655 = vsub.s32 0, %v654
        %v656 = vrot.slane %v622, %v655
        %v658 = vmul.f32 %v650, %v656
        %v659 = vmul.f32 %v651, %v656
        %v661 = vlaneseq
        %v662 = vshrl.u32 %v661, 7
        %v663 = vsub.s32 0, %v662
        %v664 = vrot.slane %v623, %v663
        %v666 = vadd.f32 %v658, %v664
        %v667 = vadd.f32 %v659, %v664
        %v668 = vpack.c.bf16 %v667, %v666
        %v669 = vld [vmem:[#allocation8] sm:$0xf]
        %v670 = vld [vmem:[#allocation8 + $0x4] sm:$0xf]
        %v671 = vld [vmem:[#allocation8 + $0x8] sm:$0xf]
        %v672 = vld [vmem:[#allocation8 + $0xc] sm:$0xf]
        %v673 = vld [vmem:[#allocation10] sm:$0x1]
        %v675 = vlaneseq
        %v676 = vshrl.u32 %v675, 7
        %v677 = vsub.s32 0, %v676
        %v678 = vrot.slane %v673, %v677
        %v684 = vunpack.c.l.b16 %v669
        %v685 = vunpack.c.l.b16 %v670
        %v686 = vunpack.c.l.b16 %v671
        %v687 = vunpack.c.l.b16 %v672
        %v688 = vpack.c.b16 %v685, %v684
        %v689 = vpack.c.b16 %v687, %v686
        %v693 = vsel %vm624, %v668, 0
        %695 = vmatprep.subr.bf16.mxu0 0
        %696 = vmatpush1.bf16.msra.mxu0 %v688
        %697 = vmatprep.subr.bf16.mxu0 0
        %698 = vmatpush1.bf16.msra.mxu0 %v689
        %699 = vmatprep.subr.bf16.mxu0 0
        %700 = vmatpush1.bf16.msra.mxu0 0
        %701 = vmatprep.subr.bf16.mxu0 0
        %702 = vmatpush1.bf16.msra.mxu0 0
        %703 = vmatprep.subr.bf16.mxu0 0
        %704 = vmatpush1.bf16.msra.mxu0 0
        %705 = vmatprep.subr.bf16.mxu0 0
        %706 = vmatpush1.bf16.msra.mxu0 0
        %707 = vmatprep.subr.bf16.mxu0 0
        %708 = vmatpush1.bf16.msra.mxu0 0
        %709 = vmatprep.subr.bf16.mxu0 0
        %710 = vmatpush1.bf16.msra.mxu0 0
        %711 = vmatprep.subr.bf16.mxu0 0
        %712 = vmatpush1.bf16.msra.mxu0 0
        %713 = vmatprep.subr.bf16.mxu0 0
        %714 = vmatpush1.bf16.msra.mxu0 0
        %715 = vmatprep.subr.bf16.mxu0 0
        %716 = vmatpush1.bf16.msra.mxu0 0
        %717 = vmatprep.subr.bf16.mxu0 0
        %718 = vmatpush1.bf16.msra.mxu0 0
        %719 = vmatprep.subr.bf16.mxu0 0
        %720 = vmatpush1.bf16.msra.mxu0 0
        %721 = vmatprep.subr.bf16.mxu0 0
        %722 = vmatpush1.bf16.msra.mxu0 0
        %723 = vmatprep.subr.bf16.mxu0 0
        %724 = vmatpush1.bf16.msra.mxu0 0
        %725 = vmatprep.subr.bf16.mxu0 0
        %726 = vmatpush1.bf16.msra.mxu0 0
        %727 = vmatprep.mubr.bf16.mxu0 0
        %728 = vmatmul.mubr.bf16.gmra.mrb[0].mxu0 %v693
        %v729 = vpop.f32.mrb[0].mxu0
        %v730 = vadd.f32 %v678, %v729
        %v731 = vpop.f32.mrb[0].mxu0
        %v732 = vpop.f32.mrb[0].mxu0
        %v733 = vadd.f32 %v678, %v732
        %v734 = vpop.f32.mrb[0].mxu0
        %735 = vdwg.mxu0
        %v736 = vpack.c.bf16 %v730, %v730
        %v737 = vpack.c.bf16 %v733, %v733
        %739 = vrot.lane.b32.xlu0 %v736, 96
        %v740 = vpop.permute.xlu0 %739
        %vm741 = vcmask 64512
        %v743 = vsel %vm741, %v736, 0
        %v746 = vsel %vm741, %v740, 0
        %748 = vmatprep.subr.bf16.mxu0 0
        %749 = vmatpush1.bf16.xpose.msra.mxu0 %v746
        %750 = vmatprep.subr.bf16.mxu0 0
        %751 = vmatpush1.bf16.xpose.msra.mxu0 0
        %752 = vmatprep.subr.bf16.mxu0 0
        %753 = vmatpush1.bf16.xpose.msra.mxu0 0
        %754 = vmatprep.subr.bf16.mxu0 0
        %755 = vmatpush1.bf16.xpose.msra.mxu0 0
        %756 = vmatprep.subr.bf16.mxu0 0
        %757 = vmatpush1.bf16.xpose.msra.mxu0 0
        %758 = vmatprep.subr.bf16.mxu0 0
        %759 = vmatpush1.bf16.xpose.msra.mxu0 0
        %760 = vmatprep.subr.bf16.mxu0 0
        %761 = vmatpush1.bf16.xpose.msra.mxu0 0
        %762 = vmatprep.subr.bf16.mxu0 0
        %763 = vmatpush1.bf16.xpose.msra.mxu0 0
        %764 = vmatprep.subr.bf16.mxu0 0
        %765 = vmatpush1.bf16.xpose.msra.mxu0 0
        %766 = vmatprep.subr.bf16.mxu0 0
        %767 = vmatpush1.bf16.xpose.msra.mxu0 0
        %768 = vmatprep.subr.bf16.mxu0 0
        %769 = vmatpush1.bf16.xpose.msra.mxu0 0
        %770 = vmatprep.subr.bf16.mxu0 0
        %771 = vmatpush1.bf16.xpose.msra.mxu0 0
        %772 = vmatprep.subr.bf16.mxu0 0
        %773 = vmatpush1.bf16.xpose.msra.mxu0 0
        %774 = vmatprep.subr.bf16.mxu0 0
        %775 = vmatpush1.bf16.xpose.msra.mxu0 0
        %776 = vmatprep.subr.bf16.mxu0 0
        %777 = vmatpush1.bf16.xpose.msra.mxu0 0
        %778 = vmatprep.subr.bf16.mxu0 0
        %779 = vmatpush1.bf16.xpose.msra.mxu0 0
        %780 = vmatprep.mubr.bf16.mxu0 0
        %781 = vmatmul.mubr.bf16.gmra.mrb[0].mxu0 %v743
        %v782 = vpop.f32.mrb[0].mxu0
        %v783 = vadd.f32 0.0, %v782
        %v784 = vpop.f32.mrb[0].mxu0
        %v785 = vpop.f32.mrb[0].mxu0
        %v786 = vpop.f32.mrb[0].mxu0
        %787 = vdwg.mxu0
        %789 = vrot.lane.b32.xlu0 %v737, 96
        %v790 = vpop.permute.xlu0 %789
        %v792 = vsel %vm741, %v737, 0
        %v795 = vsel %vm741, %v790, 0
        %797 = vmatprep.subr.bf16.mxu0 0
        %798 = vmatpush1.bf16.xpose.msra.mxu0 %v795
        %799 = vmatprep.subr.bf16.mxu0 0
        %800 = vmatpush1.bf16.xpose.msra.mxu0 0
        %801 = vmatprep.subr.bf16.mxu0 0
        %802 = vmatpush1.bf16.xpose.msra.mxu0 0
        %803 = vmatprep.subr.bf16.mxu0 0
        %804 = vmatpush1.bf16.xpose.msra.mxu0 0
        %805 = vmatprep.subr.bf16.mxu0 0
        %806 = vmatpush1.bf16.xpose.msra.mxu0 0
        %807 = vmatprep.subr.bf16.mxu0 0
        %808 = vmatpush1.bf16.xpose.msra.mxu0 0
        %809 = vmatprep.subr.bf16.mxu0 0
        %810 = vmatpush1.bf16.xpose.msra.mxu0 0
        %811 = vmatprep.subr.bf16.mxu0 0
        %812 = vmatpush1.bf16.xpose.msra.mxu0 0
        %813 = vmatprep.subr.bf16.mxu0 0
        %814 = vmatpush1.bf16.xpose.msra.mxu0 0
        %815 = vmatprep.subr.bf16.mxu0 0
        %816 = vmatpush1.bf16.xpose.msra.mxu0 0
        %817 = vmatprep.subr.bf16.mxu0 0
        %818 = vmatpush1.bf16.xpose.msra.mxu0 0
        %819 = vmatprep.subr.bf16.mxu0 0
        %820 = vmatpush1.bf16.xpose.msra.mxu0 0
        %821 = vmatprep.subr.bf16.mxu0 0
        %822 = vmatpush1.bf16.xpose.msra.mxu0 0
        %823 = vmatprep.subr.bf16.mxu0 0
        %824 = vmatpush1.bf16.xpose.msra.mxu0 0
        %825 = vmatprep.subr.bf16.mxu0 0
        %826 = vmatpush1.bf16.xpose.msra.mxu0 0
        %827 = vmatprep.subr.bf16.mxu0 0
        %828 = vmatpush1.bf16.xpose.msra.mxu0 0
        %829 = vmatprep.mubr.bf16.mxu0 0
        %830 = vmatmul.mubr.bf16.gmra.mrb[0].mxu0 %v792
        %v831 = vpop.f32.mrb[0].mxu0
        %v832 = vadd.f32 0.0, %v831
        %v833 = vpop.f32.mrb[0].mxu0
        %v834 = vpop.f32.mrb[0].mxu0
        %v835 = vpop.f32.mrb[0].mxu0
        %836 = vdwg.mxu0
        %v837 = vmul.f32 %v783, 0.35355338
        %v838 = vmul.f32 %v832, 0.35355338
        %v839 = vsel %vm741, %v837, -inf
        %840 = vmax.xlane.f32.xlu0 %v839
        %v841 = vpop.xlane.xlu0 %840
        %v842 = vsel %vm741, %v838, -inf
        %843 = vmax.xlane.f32.xlu0 %v842
        %v844 = vpop.xlane.xlu0 %843
        %v845 = vsub.f32 %v837, %v841
        %v846 = vsub.f32 %v838, %v844
        %v847 = vmul.f32 %v845, 1.442695
        %v848 = vpow.pop %v847
        %v849 = vmul.f32 %v846, 1.442695
        %v850 = vpow.pop %v849
        %v851 = vsel %vm741, %v848, 0.0
        %852 = vadd.xlane.f32.xlu0 %v851
        %v853 = vpop.xlane.xlu0 %852
        %v854 = vsel %vm741, %v850, 0.0
        %855 = vadd.xlane.f32.xlu0 %v854
        %v856 = vpop.xlane.xlu0 %855
        %v857 = vrcp.pop %v853
        %v858 = vrcp.pop %v856
        %v859 = vmul.f32 %v848, %v857
        %v860 = vmul.f32 %v850, %v858
        %v861 = vpack.c.bf16 %v859, %v859
        %v862 = vpack.c.bf16 %v860, %v860
        %863 = vrot.lane.b32.xlu0 %v736, 64
        %v864 = vpop.permute.xlu0 %863
        %v866 = vsel %vm741, %v861, 0
        %vm868 = vcmask 1043456
        %v870 = vsel %vm868, %v864, 0
        %872 = vmatprep.subr.bf16.mxu0 0
        %873 = vmatpush1.bf16.msra.mxu0 %v870
        %874 = vmatprep.subr.bf16.mxu0 0
        %875 = vmatpush1.bf16.msra.mxu0 0
        %876 = vmatprep.subr.bf16.mxu0 0
        %877 = vmatpush1.bf16.msra.mxu0 0
        %878 = vmatprep.subr.bf16.mxu0 0
        %879 = vmatpush1.bf16.msra.mxu0 0
        %880 = vmatprep.subr.bf16.mxu0 0
        %881 = vmatpush1.bf16.msra.mxu0 0
        %882 = vmatprep.subr.bf16.mxu0 0
        %883 = vmatpush1.bf16.msra.mxu0 0
        %884 = vmatprep.subr.bf16.mxu0 0
        %885 = vmatpush1.bf16.msra.mxu0 0
        %886 = vmatprep.subr.bf16.mxu0 0
        %887 = vmatpush1.bf16.msra.mxu0 0
        %888 = vmatprep.subr.bf16.mxu0 0
        %889 = vmatpush1.bf16.msra.mxu0 0
        %890 = vmatprep.subr.bf16.mxu0 0
        %891 = vmatpush1.bf16.msra.mxu0 0
        %892 = vmatprep.subr.bf16.mxu0 0
        %893 = vmatpush1.bf16.msra.mxu0 0
        %894 = vmatprep.subr.bf16.mxu0 0
        %895 = vmatpush1.bf16.msra.mxu0 0
        %896 = vmatprep.subr.bf16.mxu0 0
        %897 = vmatpush1.bf16.msra.mxu0 0
        %898 = vmatprep.subr.bf16.mxu0 0
        %899 = vmatpush1.bf16.msra.mxu0 0
        %900 = vmatprep.subr.bf16.mxu0 0
        %901 = vmatpush1.bf16.msra.mxu0 0
        %902 = vmatprep.subr.bf16.mxu0 0
        %903 = vmatpush1.bf16.msra.mxu0 0
        %904 = vmatprep.mubr.bf16.mxu0 0
        %905 = vmatmul.mubr.bf16.gmra.mrb[0].mxu0 %v866
        %v906 = vpop.f32.mrb[0].mxu0
        %v907 = vadd.f32 0.0, %v906
        %v908 = vpop.f32.mrb[0].mxu0
        %v909 = vpop.f32.mrb[0].mxu0
        %v910 = vpop.f32.mrb[0].mxu0
        %911 = vdwg.mxu0
        %912 = vrot.lane.b32.xlu0 %v737, 64
        %v913 = vpop.permute.xlu0 %912
        %v915 = vsel %vm741, %v862, 0
        %v918 = vsel %vm868, %v913, 0
        %920 = vmatprep.subr.bf16.mxu0 0
        %921 = vmatpush1.bf16.msra.mxu0 %v918
        %922 = vmatprep.subr.bf16.mxu0 0
        %923 = vmatpush1.bf16.msra.mxu0 0
        %924 = vmatprep.subr.bf16.mxu0 0
        %925 = vmatpush1.bf16.msra.mxu0 0
        %926 = vmatprep.subr.bf16.mxu0 0
        %927 = vmatpush1.bf16.msra.mxu0 0
        %928 = vmatprep.subr.bf16.mxu0 0
        %929 = vmatpush1.bf16.msra.mxu0 0
        %930 = vmatprep.subr.bf16.mxu0 0
        %931 = vmatpush1.bf16.msra.mxu0 0
        %932 = vmatprep.subr.bf16.mxu0 0
        %933 = vmatpush1.bf16.msra.mxu0 0
        %934 = vmatprep.subr.bf16.mxu0 0
        %935 = vmatpush1.bf16.msra.mxu0 0
        %936 = vmatprep.subr.bf16.mxu0 0
        %937 = vmatpush1.bf16.msra.mxu0 0
        %938 = vmatprep.subr.bf16.mxu0 0
        %939 = vmatpush1.bf16.msra.mxu0 0
        %940 = vmatprep.subr.bf16.mxu0 0
        %941 = vmatpush1.bf16.msra.mxu0 0
        %942 = vmatprep.subr.bf16.mxu0 0
        %943 = vmatpush1.bf16.msra.mxu0 0
        %944 = vmatprep.subr.bf16.mxu0 0
        %945 = vmatpush1.bf16.msra.mxu0 0
        %946 = vmatprep.subr.bf16.mxu0 0
        %947 = vmatpush1.bf16.msra.mxu0 0
        %948 = vmatprep.subr.bf16.mxu0 0
        %949 = vmatpush1.bf16.msra.mxu0 0
        %950 = vmatprep.subr.bf16.mxu0 0
        %951 = vmatpush1.bf16.msra.mxu0 0
        %952 = vmatprep.mubr.bf16.mxu0 0
        %953 = vmatmul.mubr.bf16.gmra.mrb[0].mxu0 %v915
        %v954 = vpop.f32.mrb[0].mxu0
        %v955 = vadd.f32 0.0, %v954
        %v956 = vpop.f32.mrb[0].mxu0
        %v957 = vpop.f32.mrb[0].mxu0
        %v958 = vpop.f32.mrb[0].mxu0
        %959 = vdwg.mxu0
        %960 = vrot.lane.b32.xlu0 %v736, 120
        %v961 = vpop.permute.xlu0 %960
        %962 = vrot.lane.b32.xlu0 %v736, 88
        %v963 = vpop.permute.xlu0 %962
        %v965 = vsel %vm741, %v961, 0
        %v968 = vsel %vm741, %v963, 0
        %970 = vmatprep.subr.bf16.mxu0 0
        %971 = vmatpush1.bf16.xpose.msra.mxu0 %v968
        %972 = vmatprep.subr.bf16.mxu0 0
        %973 = vmatpush1.bf16.xpose.msra.mxu0 0
        %974 = vmatprep.subr.bf16.mxu0 0
        %975 = vmatpush1.bf16.xpose.msra.mxu0 0
        %976 = vmatprep.subr.bf16.mxu0 0
        %977 = vmatpush1.bf16.xpose.msra.mxu0 0
        %978 = vmatprep.subr.bf16.mxu0 0
        %979 = vmatpush1.bf16.xpose.msra.mxu0 0
        %980 = vmatprep.subr.bf16.mxu0 0
        %981 = vmatpush1.bf16.xpose.msra.mxu0 0
        %982 = vmatprep.subr.bf16.mxu0 0
        %983 = vmatpush1.bf16.xpose.msra.mxu0 0
        %984 = vmatprep.subr.bf16.mxu0 0
        %985 = vmatpush1.bf16.xpose.msra.mxu0 0
        %986 = vmatprep.subr.bf16.mxu0 0
        %987 = vmatpush1.bf16.xpose.msra.mxu0 0
        %988 = vmatprep.subr.bf16.mxu0 0
        %989 = vmatpush1.bf16.xpose.msra.mxu0 0
        %990 = vmatprep.subr.bf16.mxu0 0
        %991 = vmatpush1.bf16.xpose.msra.mxu0 0
        %992 = vmatprep.subr.bf16.mxu0 0
        %993 = vmatpush1.bf16.xpose.msra.mxu0 0
        %994 = vmatprep.subr.bf16.mxu0 0
        %995 = vmatpush1.bf16.xpose.msra.mxu0 0
        %996 = vmatprep.subr.bf16.mxu0 0
        %997 = vmatpush1.bf16.xpose.msra.mxu0 0
        %998 = vmatprep.subr.bf16.mxu0 0
        %999 = vmatpush1.bf16.xpose.msra.mxu0 0
        %1000 = vmatprep.subr.bf16.mxu0 0
        %1001 = vmatpush1.bf16.xpose.msra.mxu0 0
        %1002 = vmatprep.mubr.bf16.mxu0 0
        %1003 = vmatmul.mubr.bf16.gmra.mrb[0].mxu0 %v965
        %v1004 = vpop.f32.mrb[0].mxu0
        %v1005 = vadd.f32 0.0, %v1004
        %v1006 = vpop.f32.mrb[0].mxu0
        %v1007 = vpop.f32.mrb[0].mxu0
        %v1008 = vpop.f32.mrb[0].mxu0
        %1009 = vdwg.mxu0
        %1010 = vrot.lane.b32.xlu0 %v737, 120
        %v1011 = vpop.permute.xlu0 %1010
        %1012 = vrot.lane.b32.xlu0 %v737, 88
        %v1013 = vpop.permute.xlu0 %1012
        %v1015 = vsel %vm741, %v1011, 0
        %v1018 = vsel %vm741, %v1013, 0
        %1020 = vmatprep.subr.bf16.mxu0 0
        %1021 = vmatpush1.bf16.xpose.msra.mxu0 %v1018
        %1022 = vmatprep.subr.bf16.mxu0 0
        %1023 = vmatpush1.bf16.xpose.msra.mxu0 0
        %1024 = vmatprep.subr.bf16.mxu0 0
        %1025 = vmatpush1.bf16.xpose.msra.mxu0 0
        %1026 = vmatprep.subr.bf16.mxu0 0
        %1027 = vmatpush1.bf16.xpose.msra.mxu0 0
        %1028 = vmatprep.subr.bf16.mxu0 0
        %1029 = vmatpush1.bf16.xpose.msra.mxu0 0
        %1030 = vmatprep.subr.bf16.mxu0 0
        %1031 = vmatpush1.bf16.xpose.msra.mxu0 0
        %1032 = vmatprep.subr.bf16.mxu0 0
        %1033 = vmatpush1.bf16.xpose.msra.mxu0 0
        %1034 = vmatprep.subr.bf16.mxu0 0
        %1035 = vmatpush1.bf16.xpose.msra.mxu0 0
        %1036 = vmatprep.subr.bf16.mxu0 0
        %1037 = vmatpush1.bf16.xpose.msra.mxu0 0
        %1038 = vmatprep.subr.bf16.mxu0 0
        %1039 = vmatpush1.bf16.xpose.msra.mxu0 0
        %1040 = vmatprep.subr.bf16.mxu0 0
        %1041 = vmatpush1.bf16.xpose.msra.mxu0 0
        %1042 = vmatprep.subr.bf16.mxu0 0
        %1043 = vmatpush1.bf16.xpose.msra.mxu0 0
        %1044 = vmatprep.subr.bf16.mxu0 0
        %1045 = vmatpush1.bf16.xpose.msra.mxu0 0
        %1046 = vmatprep.subr.bf16.mxu0 0
        %1047 = vmatpush1.bf16.xpose.msra.mxu0 0
        %1048 = vmatprep.subr.bf16.mxu0 0
        %1049 = vmatpush1.bf16.xpose.msra.mxu0 0
        %1050 = vmatprep.subr.bf16.mxu0 0
        %1051 = vmatpush1.bf16.xpose.msra.mxu0 0
        %1052 = vmatprep.mubr.bf16.mxu0 0
        %1053 = vmatmul.mubr.bf16.gmra.mrb[0].mxu0 %v1015
        %v1054 = vpop.f32.mrb[0].mxu0
        %v1055 = vadd.f32 0.0, %v1054
        %v1056 = vpop.f32.mrb[0].mxu0
        %v1057 = vpop.f32.mrb[0].mxu0
        %v1058 = vpop.f32.mrb[0].mxu0
        %1059 = vdwg.mxu0
        %v1060 = vmul.f32 %v1005, 0.35355338
        %v1061 = vmul.f32 %v1055, 0.35355338
        %v1062 = vsel %vm741, %v1060, -inf
        %1063 = vmax.xlane.f32.xlu0 %v1062
        %v1064 = vpop.xlane.xlu0 %1063
        %v1065 = vsel %vm741, %v1061, -inf
        %1066 = vmax.xlane.f32.xlu0 %v1065
        %v1067 = vpop.xlane.xlu0 %1066
        %v1068 = vsub.f32 %v1060, %v1064
        %v1069 = vsub.f32 %v1061, %v1067
        %v1070 = vmul.f32 %v1068, 1.442695
        %v1071 = vpow.pop %v1070
        %v1072 = vmul.f32 %v1069, 1.442695
        %v1073 = vpow.pop %v1072
        %v1074 = vsel %vm741, %v1071, 0.0
        %1075 = vadd.xlane.f32.xlu0 %v1074
        %v1076 = vpop.xlane.xlu0 %1075
        %v1077 = vsel %vm741, %v1073, 0.0
        %1078 = vadd.xlane.f32.xlu0 %v1077
        %v1079 = vpop.xlane.xlu0 %1078
        %v1080 = vrcp.pop %v1076
        %v1081 = vrcp.pop %v1079
        %v1082 = vmul.f32 %v1071, %v1080
        %v1083 = vmul.f32 %v1073, %v1081
        %v1084 = vpack.c.bf16 %v1082, %v1082
        %v1085 = vpack.c.bf16 %v1083, %v1083
        %1086 = vrot.lane.b32.xlu0 %v736, 56
        %v1087 = vpop.permute.xlu0 %1086
        %v1089 = vsel %vm741, %v1084, 0
        %v1092 = vsel %vm868, %v1087, 0
        %1094 = vmatprep.subr.bf16.mxu0 0
        %1095 = vmatpush1.bf16.msra.mxu0 %v1092
        %1096 = vmatprep.subr.bf16.mxu0 0
        %1097 = vmatpush1.bf16.msra.mxu0 0
        %1098 = vmatprep.subr.bf16.mxu0 0
        %1099 = vmatpush1.bf16.msra.mxu0 0
        %1100 = vmatprep.subr.bf16.mxu0 0
        %1101 = vmatpush1.bf16.msra.mxu0 0
        %1102 = vmatprep.subr.bf16.mxu0 0
        %1103 = vmatpush1.bf16.msra.mxu0 0
        %1104 = vmatprep.subr.bf16.mxu0 0
        %1105 = vmatpush1.bf16.msra.mxu0 0
        %1106 = vmatprep.subr.bf16.mxu0 0
        %1107 = vmatpush1.bf16.msra.mxu0 0
        %1108 = vmatprep.subr.bf16.mxu0 0
        %1109 = vmatpush1.bf16.msra.mxu0 0
        %1110 = vmatprep.subr.bf16.mxu0 0
        %1111 = vmatpush1.bf16.msra.mxu0 0
        %1112 = vmatprep.subr.bf16.mxu0 0
        %1113 = vmatpush1.bf16.msra.mxu0 0
        %1114 = vmatprep.subr.bf16.mxu0 0
        %1115 = vmatpush1.bf16.msra.mxu0 0
        %1116 = vmatprep.subr.bf16.mxu0 0
        %1117 = vmatpush1.bf16.msra.mxu0 0
        %1118 = vmatprep.subr.bf16.mxu0 0
        %1119 = vmatpush1.bf16.msra.mxu0 0
        %1120 = vmatprep.subr.bf16.mxu0 0
        %1121 = vmatpush1.bf16.msra.mxu0 0
        %1122 = vmatprep.subr.bf16.mxu0 0
        %1123 = vmatpush1.bf16.msra.mxu0 0
        %1124 = vmatprep.subr.bf16.mxu0 0
        %1125 = vmatpush1.bf16.msra.mxu0 0
        %1126 = vmatprep.mubr.bf16.mxu0 0
        %1127 = vmatmul.mubr.bf16.gmra.mrb[0].mxu0 %v1089
        %v1128 = vpop.f32.mrb[0].mxu0
        %v1129 = vadd.f32 0.0, %v1128
        %v1130 = vpop.f32.mrb[0].mxu0
        %v1131 = vpop.f32.mrb[0].mxu0
        %v1132 = vpop.f32.mrb[0].mxu0
        %1133 = vdwg.mxu0
        %1134 = vrot.lane.b32.xlu0 %v737, 56
        %v1135 = vpop.permute.xlu0 %1134
        %v1137 = vsel %vm741, %v1085, 0
        %v1140 = vsel %vm868, %v1135, 0
        %1142 = vmatprep.subr.bf16.mxu0 0
        %1143 = vmatpush1.bf16.msra.mxu0 %v1140
        %1144 = vmatprep.subr.bf16.mxu0 0
        %1145 = vmatpush1.bf16.msra.mxu0 0
        %1146 = vmatprep.subr.bf16.mxu0 0
        %1147 = vmatpush1.bf16.msra.mxu0 0
        %1148 = vmatprep.subr.bf16.mxu0 0
        %1149 = vmatpush1.bf16.msra.mxu0 0
        %1150 = vmatprep.subr.bf16.mxu0 0
        %1151 = vmatpush1.bf16.msra.mxu0 0
        %1152 = vmatprep.subr.bf16.mxu0 0
        %1153 = vmatpush1.bf16.msra.mxu0 0
        %1154 = vmatprep.subr.bf16.mxu0 0
        %1155 = vmatpush1.bf16.msra.mxu0 0
        %1156 = vmatprep.subr.bf16.mxu0 0
        %1157 = vmatpush1.bf16.msra.mxu0 0
        %1158 = vmatprep.subr.bf16.mxu0 0
        %1159 = vmatpush1.bf16.msra.mxu0 0
        %1160 = vmatprep.subr.bf16.mxu0 0
        %1161 = vmatpush1.bf16.msra.mxu0 0
        %1162 = vmatprep.subr.bf16.mxu0 0
        %1163 = vmatpush1.bf16.msra.mxu0 0
        %1164 = vmatprep.subr.bf16.mxu0 0
        %1165 = vmatpush1.bf16.msra.mxu0 0
        %1166 = vmatprep.subr.bf16.mxu0 0
        %1167 = vmatpush1.bf16.msra.mxu0 0
        %1168 = vmatprep.subr.bf16.mxu0 0
        %1169 = vmatpush1.bf16.msra.mxu0 0
        %1170 = vmatprep.subr.bf16.mxu0 0
        %1171 = vmatpush1.bf16.msra.mxu0 0
        %1172 = vmatprep.subr.bf16.mxu0 0
        %1173 = vmatpush1.bf16.msra.mxu0 0
        %1174 = vmatprep.mubr.bf16.mxu0 0
        %1175 = vmatmul.mubr.bf16.gmra.mrb[0].mxu0 %v1137
        %v1176 = vpop.f32.mrb[0].mxu0
        %v1177 = vadd.f32 0.0, %v1176
        %v1178 = vpop.f32.mrb[0].mxu0
        %v1179 = vpop.f32.mrb[0].mxu0
        %v1180 = vpop.f32.mrb[0].mxu0
        %1181 = vdwg.mxu0
        %1182 = vrot.lane.b32.xlu0 %v736, 112
        %v1183 = vpop.permute.xlu0 %1182
        %1184 = vrot.lane.b32.xlu0 %v736, 80
        %v1185 = vpop.permute.xlu0 %1184
        %v1187 = vsel %vm741, %v1183, 0
        %v1190 = vsel %vm741, %v1185, 0
        %1192 = vmatprep.subr.bf16.mxu0 0
        %1193 = vmatpush1.bf16.xpose.msra.mxu0 %v1190
        %1194 = vmatprep.subr.bf16.mxu0 0
        %1195 = vmatpush1.bf16.xpose.msra.mxu0 0
        %1196 = vmatprep.subr.bf16.mxu0 0
        %1197 = vmatpush1.bf16.xpose.msra.mxu0 0
        %1198 = vmatprep.subr.bf16.mxu0 0
        %1199 = vmatpush1.bf16.xpose.msra.mxu0 0
        %1200 = vmatprep.subr.bf16.mxu0 0
        %1201 = vmatpush1.bf16.xpose.msra.mxu0 0
        %1202 = vmatprep.subr.bf16.mxu0 0
        %1203 = vmatpush1.bf16.xpose.msra.mxu0 0
        %1204 = vmatprep.subr.bf16.mxu0 0
        %1205 = vmatpush1.bf16.xpose.msra.mxu0 0
        %1206 = vmatprep.subr.bf16.mxu0 0
        %1207 = vmatpush1.bf16.xpose.msra.mxu0 0
        %1208 = vmatprep.subr.bf16.mxu0 0
        %1209 = vmatpush1.bf16.xpose.msra.mxu0 0
        %1210 = vmatprep.subr.bf16.mxu0 0
        %1211 = vmatpush1.bf16.xpose.msra.mxu0 0
        %1212 = vmatprep.subr.bf16.mxu0 0
        %1213 = vmatpush1.bf16.xpose.msra.mxu0 0
        %1214 = vmatprep.subr.bf16.mxu0 0
        %1215 = vmatpush1.bf16.xpose.msra.mxu0 0
        %1216 = vmatprep.subr.bf16.mxu0 0
        %1217 = vmatpush1.bf16.xpose.msra.mxu0 0
        %1218 = vmatprep.subr.bf16.mxu0 0
        %1219 = vmatpush1.bf16.xpose.msra.mxu0 0
        %1220 = vmatprep.subr.bf16.mxu0 0
        %1221 = vmatpush1.bf16.xpose.msra.mxu0 0
        %1222 = vmatprep.subr.bf16.mxu0 0
        %1223 = vmatpush1.bf16.xpose.msra.mxu0 0
        %1224 = vmatprep.mubr.bf16.mxu0 0
        %1225 = vmatmul.mubr.bf16.gmra.mrb[0].mxu0 %v1187
        %v1226 = vpop.f32.mrb[0].mxu0
        %v1227 = vadd.f32 0.0, %v1226
        %v1228 = vpop.f32.mrb[0].mxu0
        %v1229 = vpop.f32.mrb[0].mxu0
        %v1230 = vpop.f32.mrb[0].mxu0
        %1231 = vdwg.mxu0
        %1232 = vrot.lane.b32.xlu0 %v737, 112
        %v1233 = vpop.permute.xlu0 %1232
        %1234 = vrot.lane.b32.xlu0 %v737, 80
        %v1235 = vpop.permute.xlu0 %1234
        %v1237 = vsel %vm741, %v1233, 0
        %v1240 = vsel %vm741, %v1235, 0
        %1242 = vmatprep.subr.bf16.mxu0 0
        %1243 = vmatpush1.bf16.xpose.msra.mxu0 %v1240
        %1244 = vmatprep.subr.bf16.mxu0 0
        %1245 = vmatpush1.bf16.xpose.msra.mxu0 0
        %1246 = vmatprep.subr.bf16.mxu0 0
        %1247 = vmatpush1.bf16.xpose.msra.mxu0 0
        %1248 = vmatprep.subr.bf16.mxu0 0
        %1249 = vmatpush1.bf16.xpose.msra.mxu0 0
        %1250 = vmatprep.subr.bf16.mxu0 0
        %1251 = vmatpush1.bf16.xpose.msra.mxu0 0
        %1252 = vmatprep.subr.bf16.mxu0 0
        %1253 = vmatpush1.bf16.xpose.msra.mxu0 0
        %1254 = vmatprep.subr.bf16.mxu0 0
        %1255 = vmatpush1.bf16.xpose.msra.mxu0 0
        %1256 = vmatprep.subr.bf16.mxu0 0
        %1257 = vmatpush1.bf16.xpose.msra.mxu0 0
        %1258 = vmatprep.subr.bf16.mxu0 0
        %1259 = vmatpush1.bf16.xpose.msra.mxu0 0
        %1260 = vmatprep.subr.bf16.mxu0 0
        %1261 = vmatpush1.bf16.xpose.msra.mxu0 0
        %1262 = vmatprep.subr.bf16.mxu0 0
        %1263 = vmatpush1.bf16.xpose.msra.mxu0 0
        %1264 = vmatprep.subr.bf16.mxu0 0
        %1265 = vmatpush1.bf16.xpose.msra.mxu0 0
        %1266 = vmatprep.subr.bf16.mxu0 0
        %1267 = vmatpush1.bf16.xpose.msra.mxu0 0
        %1268 = vmatprep.subr.bf16.mxu0 0
        %1269 = vmatpush1.bf16.xpose.msra.mxu0 0
        %1270 = vmatprep.subr.bf16.mxu0 0
        %1271 = vmatpush1.bf16.xpose.msra.mxu0 0
        %1272 = vmatprep.subr.bf16.mxu0 0
        %1273 = vmatpush1.bf16.xpose.msra.mxu0 0
        %1274 = vmatprep.mubr.bf16.mxu0 0
        %1275 = vmatmul.mubr.bf16.gmra.mrb[0].mxu0 %v1237
        %v1276 = vpop.f32.mrb[0].mxu0
        %v1277 = vadd.f32 0.0, %v1276
        %v1278 = vpop.f32.mrb[0].mxu0
        %v1279 = vpop.f32.mrb[0].mxu0
        %v1280 = vpop.f32.mrb[0].mxu0
        %1281 = vdwg.mxu0
        %v1282 = vmul.f32 %v1227, 0.35355338
        %v1283 = vmul.f32 %v1277, 0.35355338
        %v1284 = vsel %vm741, %v1282, -inf
        %1285 = vmax.xlane.f32.xlu0 %v1284
        %v1286 = vpop.xlane.xlu0 %1285
        %v1287 = vsel %vm741, %v1283, -inf
        %1288 = vmax.xlane.f32.xlu0 %v1287
        %v1289 = vpop.xlane.xlu0 %1288
        %v1290 = vsub.f32 %v1282, %v1286
        %v1291 = vsub.f32 %v1283, %v1289
        %v1292 = vmul.f32 %v1290, 1.442695
        %v1293 = vpow.pop %v1292
        %v1294 = vmul.f32 %v1291, 1.442695
        %v1295 = vpow.pop %v1294
        %v1296 = vsel %vm741, %v1293, 0.0
        %1297 = vadd.xlane.f32.xlu0 %v1296
        %v1298 = vpop.xlane.xlu0 %1297
        %v1299 = vsel %vm741, %v1295, 0.0
        %1300 = vadd.xlane.f32.xlu0 %v1299
        %v1301 = vpop.xlane.xlu0 %1300
        %v1302 = vrcp.pop %v1298
        %v1303 = vrcp.pop %v1301
        %v1304 = vmul.f32 %v1293, %v1302
        %v1305 = vmul.f32 %v1295, %v1303
        %v1306 = vpack.c.bf16 %v1304, %v1304
        %v1307 = vpack.c.bf16 %v1305, %v1305
        %1308 = vrot.lane.b32.xlu0 %v736, 48
        %v1309 = vpop.permute.xlu0 %1308
        %v1311 = vsel %vm741, %v1306, 0
        %v1314 = vsel %vm868, %v1309, 0
        %1316 = vmatprep.subr.bf16.mxu0 0
        %1317 = vmatpush1.bf16.msra.mxu0 %v1314
        %1318 = vmatprep.subr.bf16.mxu0 0
        %1319 = vmatpush1.bf16.msra.mxu0 0
        %1320 = vmatprep.subr.bf16.mxu0 0
        %1321 = vmatpush1.bf16.msra.mxu0 0
        %1322 = vmatprep.subr.bf16.mxu0 0
        %1323 = vmatpush1.bf16.msra.mxu0 0
        %1324 = vmatprep.subr.bf16.mxu0 0
        %1325 = vmatpush1.bf16.msra.mxu0 0
        %1326 = vmatprep.subr.bf16.mxu0 0
        %1327 = vmatpush1.bf16.msra.mxu0 0
        %1328 = vmatprep.subr.bf16.mxu0 0
        %1329 = vmatpush1.bf16.msra.mxu0 0
        %1330 = vmatprep.subr.bf16.mxu0 0
        %1331 = vmatpush1.bf16.msra.mxu0 0
        %1332 = vmatprep.subr.bf16.mxu0 0
        %1333 = vmatpush1.bf16.msra.mxu0 0
        %1334 = vmatprep.subr.bf16.mxu0 0
        %1335 = vmatpush1.bf16.msra.mxu0 0
        %1336 = vmatprep.subr.bf16.mxu0 0
        %1337 = vmatpush1.bf16.msra.mxu0 0
        %1338 = vmatprep.subr.bf16.mxu0 0
        %1339 = vmatpush1.bf16.msra.mxu0 0
        %1340 = vmatprep.subr.bf16.mxu0 0
        %1341 = vmatpush1.bf16.msra.mxu0 0
        %1342 = vmatprep.subr.bf16.mxu0 0
        %1343 = vmatpush1.bf16.msra.mxu0 0
        %1344 = vmatprep.subr.bf16.mxu0 0
        %1345 = vmatpush1.bf16.msra.mxu0 0
        %1346 = vmatprep.subr.bf16.mxu0 0
        %1347 = vmatpush1.bf16.msra.mxu0 0
        %1348 = vmatprep.mubr.bf16.mxu0 0
        %1349 = vmatmul.mubr.bf16.gmra.mrb[0].mxu0 %v1311
        %v1350 = vpop.f32.mrb[0].mxu0
        %v1351 = vadd.f32 0.0, %v1350
        %v1352 = vpop.f32.mrb[0].mxu0
        %v1353 = vpop.f32.mrb[0].mxu0
        %v1354 = vpop.f32.mrb[0].mxu0
        %1355 = vdwg.mxu0
        %1356 = vrot.lane.b32.xlu0 %v737, 48
        %v1357 = vpop.permute.xlu0 %1356
        %v1359 = vsel %vm741, %v1307, 0
        %v1362 = vsel %vm868, %v1357, 0
        %1364 = vmatprep.subr.bf16.mxu0 0
        %1365 = vmatpush1.bf16.msra.mxu0 %v1362
        %1366 = vmatprep.subr.bf16.mxu0 0
        %1367 = vmatpush1.bf16.msra.mxu0 0
        %1368 = vmatprep.subr.bf16.mxu0 0
        %1369 = vmatpush1.bf16.msra.mxu0 0
        %1370 = vmatprep.subr.bf16.mxu0 0
        %1371 = vmatpush1.bf16.msra.mxu0 0
        %1372 = vmatprep.subr.bf16.mxu0 0
        %1373 = vmatpush1.bf16.msra.mxu0 0
        %1374 = vmatprep.subr.bf16.mxu0 0
        %1375 = vmatpush1.bf16.msra.mxu0 0
        %1376 = vmatprep.subr.bf16.mxu0 0
        %1377 = vmatpush1.bf16.msra.mxu0 0
        %1378 = vmatprep.subr.bf16.mxu0 0
        %1379 = vmatpush1.bf16.msra.mxu0 0
        %1380 = vmatprep.subr.bf16.mxu0 0
        %1381 = vmatpush1.bf16.msra.mxu0 0
        %1382 = vmatprep.subr.bf16.mxu0 0
        %1383 = vmatpush1.bf16.msra.mxu0 0
        %1384 = vmatprep.subr.bf16.mxu0 0
        %1385 = vmatpush1.bf16.msra.mxu0 0
        %1386 = vmatprep.subr.bf16.mxu0 0
        %1387 = vmatpush1.bf16.msra.mxu0 0
        %1388 = vmatprep.subr.bf16.mxu0 0
        %1389 = vmatpush1.bf16.msra.mxu0 0
        %1390 = vmatprep.subr.bf16.mxu0 0
        %1391 = vmatpush1.bf16.msra.mxu0 0
        %1392 = vmatprep.subr.bf16.mxu0 0
        %1393 = vmatpush1.bf16.msra.mxu0 0
        %1394 = vmatprep.subr.bf16.mxu0 0
        %1395 = vmatpush1.bf16.msra.mxu0 0
        %1396 = vmatprep.mubr.bf16.mxu0 0
        %1397 = vmatmul.mubr.bf16.gmra.mrb[0].mxu0 %v1359
        %v1398 = vpop.f32.mrb[0].mxu0
        %v1399 = vadd.f32 0.0, %v1398
        %v1400 = vpop.f32.mrb[0].mxu0
        %v1401 = vpop.f32.mrb[0].mxu0
        %v1402 = vpop.f32.mrb[0].mxu0
        %1403 = vdwg.mxu0
        %1404 = vrot.lane.b32.xlu0 %v736, 104
        %v1405 = vpop.permute.xlu0 %1404
        %1406 = vrot.lane.b32.xlu0 %v736, 72
        %v1407 = vpop.permute.xlu0 %1406
        %v1409 = vsel %vm741, %v1405, 0
        %v1412 = vsel %vm741, %v1407, 0
        %1414 = vmatprep.subr.bf16.mxu0 0
        %1415 = vmatpush1.bf16.xpose.msra.mxu0 %v1412
        %1416 = vmatprep.subr.bf16.mxu0 0
        %1417 = vmatpush1.bf16.xpose.msra.mxu0 0
        %1418 = vmatprep.subr.bf16.mxu0 0
        %1419 = vmatpush1.bf16.xpose.msra.mxu0 0
        %1420 = vmatprep.subr.bf16.mxu0 0
        %1421 = vmatpush1.bf16.xpose.msra.mxu0 0
        %1422 = vmatprep.subr.bf16.mxu0 0
        %1423 = vmatpush1.bf16.xpose.msra.mxu0 0
        %1424 = vmatprep.subr.bf16.mxu0 0
        %1425 = vmatpush1.bf16.xpose.msra.mxu0 0
        %1426 = vmatprep.subr.bf16.mxu0 0
        %1427 = vmatpush1.bf16.xpose.msra.mxu0 0
        %1428 = vmatprep.subr.bf16.mxu0 0
        %1429 = vmatpush1.bf16.xpose.msra.mxu0 0
        %1430 = vmatprep.subr.bf16.mxu0 0
        %1431 = vmatpush1.bf16.xpose.msra.mxu0 0
        %1432 = vmatprep.subr.bf16.mxu0 0
        %1433 = vmatpush1.bf16.xpose.msra.mxu0 0
        %1434 = vmatprep.subr.bf16.mxu0 0
        %1435 = vmatpush1.bf16.xpose.msra.mxu0 0
        %1436 = vmatprep.subr.bf16.mxu0 0
        %1437 = vmatpush1.bf16.xpose.msra.mxu0 0
        %1438 = vmatprep.subr.bf16.mxu0 0
        %1439 = vmatpush1.bf16.xpose.msra.mxu0 0
        %1440 = vmatprep.subr.bf16.mxu0 0
        %1441 = vmatpush1.bf16.xpose.msra.mxu0 0
        %1442 = vmatprep.subr.bf16.mxu0 0
        %1443 = vmatpush1.bf16.xpose.msra.mxu0 0
        %1444 = vmatprep.subr.bf16.mxu0 0
        %1445 = vmatpush1.bf16.xpose.msra.mxu0 0
        %1446 = vmatprep.mubr.bf16.mxu0 0
        %1447 = vmatmul.mubr.bf16.gmra.mrb[0].mxu0 %v1409
        %v1448 = vpop.f32.mrb[0].mxu0
        %v1449 = vadd.f32 0.0, %v1448
        %v1450 = vpop.f32.mrb[0].mxu0
        %v1451 = vpop.f32.mrb[0].mxu0
        %v1452 = vpop.f32.mrb[0].mxu0
        %1453 = vdwg.mxu0
        %1454 = vrot.lane.b32.xlu0 %v737, 104
        %v1455 = vpop.permute.xlu0 %1454
        %1456 = vrot.lane.b32.xlu0 %v737, 72
        %v1457 = vpop.permute.xlu0 %1456
        %v1459 = vsel %vm741, %v1455, 0
        %v1462 = vsel %vm741, %v1457, 0
        %1464 = vmatprep.subr.bf16.mxu0 0
        %1465 = vmatpush1.bf16.xpose.msra.mxu0 %v1462
        %1466 = vmatprep.subr.bf16.mxu0 0
        %1467 = vmatpush1.bf16.xpose.msra.mxu0 0
        %1468 = vmatprep.subr.bf16.mxu0 0
        %1469 = vmatpush1.bf16.xpose.msra.mxu0 0
        %1470 = vmatprep.subr.bf16.mxu0 0
        %1471 = vmatpush1.bf16.xpose.msra.mxu0 0
        %1472 = vmatprep.subr.bf16.mxu0 0
        %1473 = vmatpush1.bf16.xpose.msra.mxu0 0
        %1474 = vmatprep.subr.bf16.mxu0 0
        %1475 = vmatpush1.bf16.xpose.msra.mxu0 0
        %1476 = vmatprep.subr.bf16.mxu0 0
        %1477 = vmatpush1.bf16.xpose.msra.mxu0 0
        %1478 = vmatprep.subr.bf16.mxu0 0
        %1479 = vmatpush1.bf16.xpose.msra.mxu0 0
        %1480 = vmatprep.subr.bf16.mxu0 0
        %1481 = vmatpush1.bf16.xpose.msra.mxu0 0
        %1482 = vmatprep.subr.bf16.mxu0 0
        %1483 = vmatpush1.bf16.xpose.msra.mxu0 0
        %1484 = vmatprep.subr.bf16.mxu0 0
        %1485 = vmatpush1.bf16.xpose.msra.mxu0 0
        %1486 = vmatprep.subr.bf16.mxu0 0
        %1487 = vmatpush1.bf16.xpose.msra.mxu0 0
        %1488 = vmatprep.subr.bf16.mxu0 0
        %1489 = vmatpush1.bf16.xpose.msra.mxu0 0
        %1490 = vmatprep.subr.bf16.mxu0 0
        %1491 = vmatpush1.bf16.xpose.msra.mxu0 0
        %1492 = vmatprep.subr.bf16.mxu0 0
        %1493 = vmatpush1.bf16.xpose.msra.mxu0 0
        %1494 = vmatprep.subr.bf16.mxu0 0
        %1495 = vmatpush1.bf16.xpose.msra.mxu0 0
        %1496 = vmatprep.mubr.bf16.mxu0 0
        %1497 = vmatmul.mubr.bf16.gmra.mrb[0].mxu0 %v1459
        %v1498 = vpop.f32.mrb[0].mxu0
        %v1499 = vadd.f32 0.0, %v1498
        %v1500 = vpop.f32.mrb[0].mxu0
        %v1501 = vpop.f32.mrb[0].mxu0
        %v1502 = vpop.f32.mrb[0].mxu0
        %1503 = vdwg.mxu0
        %v1504 = vmul.f32 %v1449, 0.35355338
        %v1505 = vmul.f32 %v1499, 0.35355338
        %v1506 = vsel %vm741, %v1504, -inf
        %1507 = vmax.xlane.f32.xlu0 %v1506
        %v1508 = vpop.xlane.xlu0 %1507
        %v1509 = vsel %vm741, %v1505, -inf
        %1510 = vmax.xlane.f32.xlu0 %v1509
        %v1511 = vpop.xlane.xlu0 %1510
        %v1512 = vsub.f32 %v1504, %v1508
        %v1513 = vsub.f32 %v1505, %v1511
        %v1514 = vmul.f32 %v1512, 1.442695
        %v1515 = vpow.pop %v1514
        %v1516 = vmul.f32 %v1513, 1.442695
        %v1517 = vpow.pop %v1516
        %v1518 = vsel %vm741, %v1515, 0.0
        %1519 = vadd.xlane.f32.xlu0 %v1518
        %v1520 = vpop.xlane.xlu0 %1519
        %v1521 = vsel %vm741, %v1517, 0.0
        %1522 = vadd.xlane.f32.xlu0 %v1521
        %v1523 = vpop.xlane.xlu0 %1522
        %v1524 = vrcp.pop %v1520
        %v1525 = vrcp.pop %v1523
        %v1526 = vmul.f32 %v1515, %v1524
        %v1527 = vmul.f32 %v1517, %v1525
        %v1528 = vpack.c.bf16 %v1526, %v1526
        %v1529 = vpack.c.bf16 %v1527, %v1527
        %1530 = vrot.lane.b32.xlu0 %v736, 40
        %v1531 = vpop.permute.xlu0 %1530
        %v1533 = vsel %vm741, %v1528, 0
        %v1536 = vsel %vm868, %v1531, 0
        %1538 = vmatprep.subr.bf16.mxu0 0
        %1539 = vmatpush1.bf16.msra.mxu0 %v1536
        %1540 = vmatprep.subr.bf16.mxu0 0
        %1541 = vmatpush1.bf16.msra.mxu0 0
        %1542 = vmatprep.subr.bf16.mxu0 0
        %1543 = vmatpush1.bf16.msra.mxu0 0
        %1544 = vmatprep.subr.bf16.mxu0 0
        %1545 = vmatpush1.bf16.msra.mxu0 0
        %1546 = vmatprep.subr.bf16.mxu0 0
        %1547 = vmatpush1.bf16.msra.mxu0 0
        %1548 = vmatprep.subr.bf16.mxu0 0
        %1549 = vmatpush1.bf16.msra.mxu0 0
        %1550 = vmatprep.subr.bf16.mxu0 0
        %1551 = vmatpush1.bf16.msra.mxu0 0
        %1552 = vmatprep.subr.bf16.mxu0 0
        %1553 = vmatpush1.bf16.msra.mxu0 0
        %1554 = vmatprep.subr.bf16.mxu0 0
        %1555 = vmatpush1.bf16.msra.mxu0 0
        %1556 = vmatprep.subr.bf16.mxu0 0
        %1557 = vmatpush1.bf16.msra.mxu0 0
        %1558 = vmatprep.subr.bf16.mxu0 0
        %1559 = vmatpush1.bf16.msra.mxu0 0
        %1560 = vmatprep.subr.bf16.mxu0 0
        %1561 = vmatpush1.bf16.msra.mxu0 0
        %1562 = vmatprep.subr.bf16.mxu0 0
        %1563 = vmatpush1.bf16.msra.mxu0 0
        %1564 = vmatprep.subr.bf16.mxu0 0
        %1565 = vmatpush1.bf16.msra.mxu0 0
        %1566 = vmatprep.subr.bf16.mxu0 0
        %1567 = vmatpush1.bf16.msra.mxu0 0
        %1568 = vmatprep.subr.bf16.mxu0 0
        %1569 = vmatpush1.bf16.msra.mxu0 0
        %1570 = vmatprep.mubr.bf16.mxu0 0
        %1571 = vmatmul.mubr.bf16.gmra.mrb[0].mxu0 %v1533
        %v1572 = vpop.f32.mrb[0].mxu0
        %v1573 = vadd.f32 0.0, %v1572
        %v1574 = vpop.f32.mrb[0].mxu0
        %v1575 = vpop.f32.mrb[0].mxu0
        %v1576 = vpop.f32.mrb[0].mxu0
        %1577 = vdwg.mxu0
        %1578 = vrot.lane.b32.xlu0 %v737, 40
        %v1579 = vpop.permute.xlu0 %1578
        %v1581 = vsel %vm741, %v1529, 0
        %v1584 = vsel %vm868, %v1579, 0
        %1586 = vmatprep.subr.bf16.mxu0 0
        %1587 = vmatpush1.bf16.msra.mxu0 %v1584
        %1588 = vmatprep.subr.bf16.mxu0 0
        %1589 = vmatpush1.bf16.msra.mxu0 0
        %1590 = vmatprep.subr.bf16.mxu0 0
        %1591 = vmatpush1.bf16.msra.mxu0 0
        %1592 = vmatprep.subr.bf16.mxu0 0
        %1593 = vmatpush1.bf16.msra.mxu0 0
        %1594 = vmatprep.subr.bf16.mxu0 0
        %1595 = vmatpush1.bf16.msra.mxu0 0
        %1596 = vmatprep.subr.bf16.mxu0 0
        %1597 = vmatpush1.bf16.msra.mxu0 0
        %1598 = vmatprep.subr.bf16.mxu0 0
        %1599 = vmatpush1.bf16.msra.mxu0 0
        %1600 = vmatprep.subr.bf16.mxu0 0
        %1601 = vmatpush1.bf16.msra.mxu0 0
        %1602 = vmatprep.subr.bf16.mxu0 0
        %1603 = vmatpush1.bf16.msra.mxu0 0
        %1604 = vmatprep.subr.bf16.mxu0 0
        %1605 = vmatpush1.bf16.msra.mxu0 0
        %1606 = vmatprep.subr.bf16.mxu0 0
        %1607 = vmatpush1.bf16.msra.mxu0 0
        %1608 = vmatprep.subr.bf16.mxu0 0
        %1609 = vmatpush1.bf16.msra.mxu0 0
        %1610 = vmatprep.subr.bf16.mxu0 0
        %1611 = vmatpush1.bf16.msra.mxu0 0
        %1612 = vmatprep.subr.bf16.mxu0 0
        %1613 = vmatpush1.bf16.msra.mxu0 0
        %1614 = vmatprep.subr.bf16.mxu0 0
        %1615 = vmatpush1.bf16.msra.mxu0 0
        %1616 = vmatprep.subr.bf16.mxu0 0
        %1617 = vmatpush1.bf16.msra.mxu0 0
        %1618 = vmatprep.mubr.bf16.mxu0 0
        %1619 = vmatmul.mubr.bf16.gmra.mrb[0].mxu0 %v1581
        %v1620 = vpop.f32.mrb[0].mxu0
        %v1621 = vadd.f32 0.0, %v1620
        %v1622 = vpop.f32.mrb[0].mxu0
        %v1623 = vpop.f32.mrb[0].mxu0
        %v1624 = vpop.f32.mrb[0].mxu0
        %1625 = vdwg.mxu0
        %1628 = vrot.lane.b32.xlu0 %v1129, 8
        %v1629 = vpop.permute.xlu0 %1628
        %1630 = vrot.lane.b32.xlu0 %v1177, 8
        %v1631 = vpop.permute.xlu0 %1630
        %1636 = vrot.lane.b32.xlu0 %v1351, 16
        %v1637 = vpop.permute.xlu0 %1636
        %1638 = vrot.lane.b32.xlu0 %v1399, 16
        %v1639 = vpop.permute.xlu0 %1638
        %1644 = vrot.lane.b32.xlu0 %v1573, 24
        %v1645 = vpop.permute.xlu0 %1644
        %1646 = vrot.lane.b32.xlu0 %v1621, 24
        %v1647 = vpop.permute.xlu0 %1646
        %v1650 = vsel %vm741, %v907, %v1629
        %v1651 = vsel %vm741, %v955, %v1631
        %vm1652 = vcmask 130048
        %v1653 = vsel %vm1652, %v1650, %v1637
        %v1654 = vsel %vm1652, %v1651, %v1639
        %vm1655 = vcmask 195584
        %v1656 = vsel %vm1655, %v1653, %v1645
        %v1657 = vsel %vm1655, %v1654, %v1647
        %v1658 = vpack.c.bf16 %v1657, %v1656
        %v1659 = vld [vmem:[#allocation11] sm:$0xf]
        %v1660 = vld [vmem:[#allocation11 + $0x4] sm:$0xf]
        %v1661 = vld [vmem:[#allocation11 + $0x8] sm:$0xf]
        %v1662 = vld [vmem:[#allocation11 + $0xc] sm:$0xf]
        %v1663 = vld [vmem:[#allocation13] sm:$0x1]
        %v1665 = vlaneseq
        %v1666 = vshrl.u32 %v1665, 7
        %v1667 = vsub.s32 0, %v1666
        %v1668 = vrot.slane %v1663, %v1667
        %v1674 = vunpack.c.l.b16 %v1659
        %v1675 = vunpack.c.l.b16 %v1660
        %v1676 = vunpack.c.l.b16 %v1661
        %v1677 = vunpack.c.l.b16 %v1662
        %v1678 = vpack.c.b16 %v1675, %v1674
        %v1679 = vpack.c.b16 %v1677, %v1676
        %v1683 = vsel %vm624, %v1658, 0
        %1685 = vmatprep.subr.bf16.mxu0 0
        %1686 = vmatpush1.bf16.msra.mxu0 %v1678
        %1687 = vmatprep.subr.bf16.mxu0 0
        %1688 = vmatpush1.bf16.msra.mxu0 %v1679
        %1689 = vmatprep.subr.bf16.mxu0 0
        %1690 = vmatpush1.bf16.msra.mxu0 0
        %1691 = vmatprep.subr.bf16.mxu0 0
        %1692 = vmatpush1.bf16.msra.mxu0 0
        %1693 = vmatprep.subr.bf16.mxu0 0
        %1694 = vmatpush1.bf16.msra.mxu0 0
        %1695 = vmatprep.subr.bf16.mxu0 0
        %1696 = vmatpush1.bf16.msra.mxu0 0
        %1697 = vmatprep.subr.bf16.mxu0 0
        %1698 = vmatpush1.bf16.msra.mxu0 0
        %1699 = vmatprep.subr.bf16.mxu0 0
        %1700 = vmatpush1.bf16.msra.mxu0 0
        %1701 = vmatprep.subr.bf16.mxu0 0
        %1702 = vmatpush1.bf16.msra.mxu0 0
        %1703 = vmatprep.subr.bf16.mxu0 0
        %1704 = vmatpush1.bf16.msra.mxu0 0
        %1705 = vmatprep.subr.bf16.mxu0 0
        %1706 = vmatpush1.bf16.msra.mxu0 0
        %1707 = vmatprep.subr.bf16.mxu0 0
        %1708 = vmatpush1.bf16.msra.mxu0 0
        %1709 = vmatprep.subr.bf16.mxu0 0
        %1710 = vmatpush1.bf16.msra.mxu0 0
        %1711 = vmatprep.subr.bf16.mxu0 0
        %1712 = vmatpush1.bf16.msra.mxu0 0
        %1713 = vmatprep.subr.bf16.mxu0 0
        %1714 = vmatpush1.bf16.msra.mxu0 0
        %1715 = vmatprep.subr.bf16.mxu0 0
        %1716 = vmatpush1.bf16.msra.mxu0 0
        %1717 = vmatprep.mubr.bf16.mxu0 0
        %1718 = vmatmul.mubr.bf16.gmra.mrb[0].mxu0 %v1683
        %v1719 = vpop.f32.mrb[0].mxu0
        %v1720 = vadd.f32 %v1668, %v1719
        %v1721 = vpop.f32.mrb[0].mxu0
        %v1722 = vpop.f32.mrb[0].mxu0
        %v1723 = vadd.f32 %v1668, %v1722
        %v1724 = vpop.f32.mrb[0].mxu0
        %1725 = vdwg.mxu0
        %v1726 = vadd.f32 %v620, %v1720
        %v1727 = vadd.f32 %v621, %v1723
        %v1728 = vld [vmem:[#allocation14] sm:$0x1]
        %v1729 = vld [vmem:[#allocation16] sm:$0x1]
        %v1730 = vsel %vm624, %v1726, 0.0
        %1731 = vadd.xlane.f32.xlu0 %v1730
        %v1732 = vpop.xlane.xlu0 %1731
        %v1733 = vsel %vm624, %v1727, 0.0
        %1734 = vadd.xlane.f32.xlu0 %v1733
        %v1735 = vpop.xlane.xlu0 %1734
        %v1736 = vmul.f32 %v1732, %v631
        %v1737 = vmul.f32 %v1735, %v631
        %v1738 = vsub.f32 %v1726, %v1736
        %v1739 = vsub.f32 %v1727, %v1737
        %v1740 = vmul.f32 %v1738, %v1738
        %v1741 = vmul.f32 %v1739, %v1739
        %v1742 = vsel %vm624, %v1740, 0.0
        %1743 = vadd.xlane.f32.xlu0 %v1742
        %v1744 = vpop.xlane.xlu0 %1743
        %v1745 = vsel %vm624, %v1741, 0.0
        %1746 = vadd.xlane.f32.xlu0 %v1745
        %v1747 = vpop.xlane.xlu0 %1746
        %v1748 = vmul.f32 %v1744, %v631
        %v1749 = vmul.f32 %v1747, %v631
        %v1750 = vadd.f32 %v1748, 1e-05
        %v1751 = vadd.f32 %v1749, 1e-05
        %v1752 = vrsqrt.pop %v1750
        %v1753 = vrsqrt.pop %v1751
        %v1754 = vmul.f32 %v1738, %v1752
        %v1755 = vmul.f32 %v1739, %v1753
        %v1757 = vlaneseq
        %v1758 = vshrl.u32 %v1757, 7
        %v1759 = vsub.s32 0, %v1758
        %v1760 = vrot.slane %v1728, %v1759
        %v1762 = vmul.f32 %v1754, %v1760
        %v1763 = vmul.f32 %v1755, %v1760
        %v1765 = vlaneseq
        %v1766 = vshrl.u32 %v1765, 7
        %v1767 = vsub.s32 0, %v1766
        %v1768 = vrot.slane %v1729, %v1767
        %v1770 = vadd.f32 %v1762, %v1768
        %v1771 = vadd.f32 %v1763, %v1768
        %v1772 = vpack.c.bf16 %v1771, %v1770
        %v1773 = vld [vmem:[#allocation17] sm:$0xf]
        %v1774 = vld [vmem:[#allocation17 + $0x4] sm:$0xf]
        %v1775 = vld [vmem:[#allocation17 + $0x8] sm:$0xf]
        %v1776 = vld [vmem:[#allocation17 + $0xc] sm:$0xf]
        %v1777 = vld [vmem:[#allocation19] sm:$0x1]
        %v1779 = vlaneseq
        %v1780 = vshrl.u32 %v1779, 7
        %v1781 = vsub.s32 0, %v1780
        %v1782 = vrot.slane %v1777, %v1781
        %v1788 = vunpack.c.l.b16 %v1773
        %v1789 = vunpack.c.l.b16 %v1774
        %v1790 = vunpack.c.l.b16 %v1775
        %v1791 = vunpack.c.l.b16 %v1776
        %v1792 = vpack.c.b16 %v1789, %v1788
        %v1793 = vpack.c.b16 %v1791, %v1790
        %v1797 = vsel %vm624, %v1772, 0
        %1799 = vmatprep.subr.bf16.mxu0 0
        %1800 = vmatpush1.bf16.msra.mxu0 %v1792
        %1801 = vmatprep.subr.bf16.mxu0 0
        %1802 = vmatpush1.bf16.msra.mxu0 %v1793
        %1803 = vmatprep.subr.bf16.mxu0 0
        %1804 = vmatpush1.bf16.msra.mxu0 0
        %1805 = vmatprep.subr.bf16.mxu0 0
        %1806 = vmatpush1.bf16.msra.mxu0 0
        %1807 = vmatprep.subr.bf16.mxu0 0
        %1808 = vmatpush1.bf16.msra.mxu0 0
        %1809 = vmatprep.subr.bf16.mxu0 0
        %1810 = vmatpush1.bf16.msra.mxu0 0
        %1811 = vmatprep.subr.bf16.mxu0 0
        %1812 = vmatpush1.bf16.msra.mxu0 0
        %1813 = vmatprep.subr.bf16.mxu0 0
        %1814 = vmatpush1.bf16.msra.mxu0 0
        %1815 = vmatprep.subr.bf16.mxu0 0
        %1816 = vmatpush1.bf16.msra.mxu0 0
        %1817 = vmatprep.subr.bf16.mxu0 0
        %1818 = vmatpush1.bf16.msra.mxu0 0
        %1819 = vmatprep.subr.bf16.mxu0 0
        %1820 = vmatpush1.bf16.msra.mxu0 0
        %1821 = vmatprep.subr.bf16.mxu0 0
        %1822 = vmatpush1.bf16.msra.mxu0 0
        %1823 = vmatprep.subr.bf16.mxu0 0
        %1824 = vmatpush1.bf16.msra.mxu0 0
        %1825 = vmatprep.subr.bf16.mxu0 0
        %1826 = vmatpush1.bf16.msra.mxu0 0
        %1827 = vmatprep.subr.bf16.mxu0 0
        %1828 = vmatpush1.bf16.msra.mxu0 0
        %1829 = vmatprep.subr.bf16.mxu0 0
        %1830 = vmatpush1.bf16.msra.mxu0 0
        %1831 = vmatprep.mubr.bf16.mxu0 0
        %1832 = vmatmul.mubr.bf16.gmra.mrb[0].mxu0 %v1797
        %v1833 = vpop.f32.mrb[0].mxu0
        %v1834 = vadd.f32 %v1782, %v1833
        %v1835 = vpop.f32.mrb[0].mxu0
        %v1836 = vpop.f32.mrb[0].mxu0
        %v1837 = vadd.f32 %v1782, %v1836
        %v1838 = vpop.f32.mrb[0].mxu0
        %1839 = vdwg.mxu0
        %v1840 = vmul.f32 %v1834, 0.5
        %v1841 = vmul.f32 %v1837, 0.5
        %v1842 = vmul.f32 %v1834, 0.70710677
        %v1843 = vmul.f32 %v1837, 0.70710677
        %v1844 = verf.f32.pop %v1842
        %v1845 = verf.f32.pop %v1843
        %v1846 = vadd.f32 %v1844, 1.0
        %v1847 = vadd.f32 %v1845, 1.0
        %v1848 = vmul.f32 %v1840, %v1846
        %v1849 = vmul.f32 %v1841, %v1847
        %v1850 = vpack.c.bf16 %v1849, %v1848
        %v1851 = vld [vmem:[#allocation20] sm:$0xf]
        %v1852 = vld [vmem:[#allocation20 + $0x4] sm:$0xf]
        %v1853 = vld [vmem:[#allocation20 + $0x8] sm:$0xf]
        %v1854 = vld [vmem:[#allocation20 + $0xc] sm:$0xf]
        %v1855 = vld [vmem:[#allocation20 + $0x10] sm:$0xf]
        %v1856 = vld [vmem:[#allocation20 + $0x14] sm:$0xf]
        %v1857 = vld [vmem:[#allocation20 + $0x18] sm:$0xf]
        %v1858 = vld [vmem:[#allocation20 + $0x1c] sm:$0xf]
        %v1859 = vld [vmem:[#allocation20 + $0x20] sm:$0xf]
        %v1860 = vld [vmem:[#allocation20 + $0x24] sm:$0xf]
        %v1861 = vld [vmem:[#allocation20 + $0x28] sm:$0xf]
        %v1862 = vld [vmem:[#allocation20 + $0x2c] sm:$0xf]
        %v1863 = vld [vmem:[#allocation20 + $0x30] sm:$0xf]
        %v1864 = vld [vmem:[#allocation20 + $0x34] sm:$0xf]
        %v1865 = vld [vmem:[#allocation20 + $0x38] sm:$0xf]
        %v1866 = vld [vmem:[#allocation20 + $0x3c] sm:$0xf]
        %v1867 = vld [vmem:[#allocation22] sm:$0x1]
        %v1869 = vlaneseq
        %v1870 = vshrl.u32 %v1869, 7
        %v1871 = vsub.s32 0, %v1870
        %v1872 = vrot.slane %v1867, %v1871
        %v1890 = vunpack.c.l.b16 %v1851
        %v1891 = vunpack.c.l.b16 %v1852
        %v1892 = vunpack.c.l.b16 %v1853
        %v1893 = vunpack.c.l.b16 %v1854
        %v1894 = vunpack.c.l.b16 %v1855
        %v1895 = vunpack.c.l.b16 %v1856
        %v1896 = vunpack.c.l.b16 %v1857
        %v1897 = vunpack.c.l.b16 %v1858
        %v1898 = vunpack.c.l.b16 %v1859
        %v1899 = vunpack.c.l.b16 %v1860
        %v1900 = vunpack.c.l.b16 %v1861
        %v1901 = vunpack.c.l.b16 %v1862
        %v1902 = vunpack.c.l.b16 %v1863
        %v1903 = vunpack.c.l.b16 %v1864
        %v1904 = vunpack.c.l.b16 %v1865
        %v1905 = vunpack.c.l.b16 %v1866
        %v1906 = vpack.c.b16 %v1891, %v1890
        %v1907 = vpack.c.b16 %v1893, %v1892
        %v1908 = vpack.c.b16 %v1895, %v1894
        %v1909 = vpack.c.b16 %v1897, %v1896
        %v1910 = vpack.c.b16 %v1899, %v1898
        %v1911 = vpack.c.b16 %v1901, %v1900
        %v1912 = vpack.c.b16 %v1903, %v1902
        %v1913 = vpack.c.b16 %v1905, %v1904
        %1922 = vmatprep.subr.bf16.mxu0 0
        %1923 = vmatpush1.bf16.msra.mxu0 %v1906
        %1924 = vmatprep.subr.bf16.mxu0 0
        %1925 = vmatpush1.bf16.msra.mxu0 %v1907
        %1926 = vmatprep.subr.bf16.mxu0 0
        %1927 = vmatpush1.bf16.msra.mxu0 %v1908
        %1928 = vmatprep.subr.bf16.mxu0 0
        %1929 = vmatpush1.bf16.msra.mxu0 %v1909
        %1930 = vmatprep.subr.bf16.mxu0 0
        %1931 = vmatpush1.bf16.msra.mxu0 %v1910
        %1932 = vmatprep.subr.bf16.mxu0 0
        %1933 = vmatpush1.bf16.msra.mxu0 %v1911
        %1934 = vmatprep.subr.bf16.mxu0 0
        %1935 = vmatpush1.bf16.msra.mxu0 %v1912
        %1936 = vmatprep.subr.bf16.mxu0 0
        %1937 = vmatpush1.bf16.msra.mxu0 %v1913
        %1938 = vmatprep.subr.bf16.mxu0 0
        %1939 = vmatpush1.bf16.msra.mxu0 0
        %1940 = vmatprep.subr.bf16.mxu0 0
        %1941 = vmatpush1.bf16.msra.mxu0 0
        %1942 = vmatprep.subr.bf16.mxu0 0
        %1943 = vmatpush1.bf16.msra.mxu0 0
        %1944 = vmatprep.subr.bf16.mxu0 0
        %1945 = vmatpush1.bf16.msra.mxu0 0
        %1946 = vmatprep.subr.bf16.mxu0 0
        %1947 = vmatpush1.bf16.msra.mxu0 0
        %1948 = vmatprep.subr.bf16.mxu0 0
        %1949 = vmatpush1.bf16.msra.mxu0 0
        %1950 = vmatprep.subr.bf16.mxu0 0
        %1951 = vmatpush1.bf16.msra.mxu0 0
        %1952 = vmatprep.subr.bf16.mxu0 0
        %1953 = vmatpush1.bf16.msra.mxu0 0
        %1954 = vmatprep.mubr.bf16.mxu0 0
        %1955 = vmatmul.mubr.bf16.gmra.mrb[0].mxu0 %v1850
        %v1956 = vpop.f32.mrb[0].mxu0
        %v1957 = vadd.f32 %v1872, %v1956
        %v1958 = vpop.f32.mrb[0].mxu0
        %v1959 = vpop.f32.mrb[0].mxu0
        %v1960 = vadd.f32 %v1872, %v1959
        %v1961 = vpop.f32.mrb[0].mxu0
        %1962 = vdwg.mxu0
        %v1963 = vadd.f32 %v1726, %v1957
        %v1964 = vadd.f32 %v1727, %v1960
        %1965 = vst.msk [vmem:[%s616] sm:$0xff] %vm624, %v1963
        %1966 = vst.msk [vmem:[%s616 + $0x8] sm:$0xff] %vm624, %v1964
        %s1967 = sand.u32 %s322, 1
        %s1968 = scalar_lea.sflag [#allocation4], %s1967
        %s1969 = sand.u32 %s322, 1
        %s1970 = smul.addr %s1969, 16
        %s1971 = scalar_lea.vmem [#allocation23], %s1970
        // Predicated region
        $region125: #{tpu_custom_call.1} parent=71 // pred_check
          %p1972 = pneg %p332
        $region126: #{tpu_custom_call.1} parent=71 // pred_check_branch
          %1974 = sbr.rel (%p1972) target = $region128
        $region127: #{tpu_custom_call.1} parent=71 // pred_region
          %s1975 = smul.u32 2, %s36
          %s1977 = ssub.s32 256, 256
          %1978 = vsyncadd %s1968, %s1977
          %s1979 = smul.addr %s1975, 128
          %s1980 = scalar_lea.hbm %s13, %s1979
          %s1981 = sshll.u32 %s1971, 4
          %s1982 = int_to_ptr.vmem [resolvable:$true] %s1981
          %1987 = dma.vmem_to_hbm [thread:$0]  %s1982, 256, %s1980, %s1968, 128, 128, 8
        $region128: #{tpu_custom_call.1} parent=71 // pred_fallthru
          _
      $region72: #{tpu_custom_call.1} parent=5 // pred_fallthru
        _
      %p1988 = scmp.le.s32.totalorder 2, %s31
      // Predicated region
      $region129: #{tpu_custom_call.1} parent=5 // pred_check
        %p1989 = pneg %p1988
      $region130: #{tpu_custom_call.1} parent=5 // pred_check_branch
        %1991 = sbr.rel (%p1989) target = $region132
      $region131: #{tpu_custom_call.1} parent=5 // pred_region
        %s1992 = ssub.s32 %s31, 2
        // Predicated region
        $region133: #{tpu_custom_call.1} parent=131 // pred_check
          %p1993 = pneg %p338
        $region134: #{tpu_custom_call.1} parent=131 // pred_check_branch
          %1995 = sbr.rel (%p1993) target = $region136
        $region135: #{tpu_custom_call.1} parent=131 // pred_region
          %s1996 = sand.u32 %s323, 1
          %s1997 = scalar_lea.sflag [#allocation4], %s1996
          %s1998 = sand.u32 %s323, 1
          %s1999 = smul.addr %s1998, 16
          %s2000 = scalar_lea.vmem [#allocation23], %s1999
          %2001 = dma.done %s1997, 256
        $region136: #{tpu_custom_call.1} parent=131 // pred_fallthru
          _
      $region132: #{tpu_custom_call.1} parent=5 // pred_fallthru
        _
    $region6: #{tpu_custom_call.1} parent=1 // loop_footer
      %s35 = sadd.s32 1, %s31
    $region7: #{tpu_custom_call.1} parent=1 // loop_footer_branch
      %30 = sbr.rel target = $region3
    $region8: #{tpu_custom_call.1} parent=1 // loop_exit
      _
    %2002 = vsyncpa [#allocation3], 1
    %s2003 = scalar_lea.sflag [#allocation3], 1
    %2004 = vsyncpa %s2003, 1
    %2005 = vsyncpa [#allocation6], 1
    %2006 = vsyncpa [#allocation9], 1
    %2007 = vsyncpa [#allocation12], 1
    %2008 = vsyncpa [#allocation15], 1
    %2009 = vsyncpa [#allocation18], 1
    %2010 = vsyncpa [#allocation21], 1
    %2011 = vsyncpa [#allocation4], 1
    %s2012 = scalar_lea.sflag [#allocation4], 1
    %2013 = vsyncpa %s2012, 1

</llo_original>
